<compile_context>
chip_gen: v7x
topology: tpu7x:2x2x1
jax: 0.10.0
libtpu: 0.0.40
codegen_flags: <defaults>
</compile_context>

<pallas_src>
import jax
import jax.numpy as jnp
import numpy as np
from jax.experimental import pallas as pl
from jax.experimental.pallas import tpu as pltpu


def actor_kernel(xt_ref, w1_ref, w2_ref, b2_ref, w3_ref, b3_ref, w4_ref, b4_ref, o_ref):
    """One batch tile. xt_ref: (4, TB) f32 (rows = 3 features + ones row, batch on lanes).
    o_ref: (1, TB) f32 (lane-dense store)."""
    f32 = jnp.float32
    # bf16 weights -> single-pass MXU matmul w/ f32 accumulation (default, fast path).
    # f32 weights -> HIGHEST (multi-pass) MXU algorithm, exact-parity/debug path only.
    prec = (jax.lax.Precision.HIGHEST if w2_ref.dtype == jnp.float32
            else jax.lax.Precision.DEFAULT)

    # ---- Layer 1 on the MXU, bias folded via the ones row: (256, 4) @ (4, TB).
    # (The old K=3 VPU broadcast-FMA path costs ~6 VALU passes over a (256,TB) slab and becomes
    # the binding slot once TB is large; the MXU is otherwise idle here.)
    h = jnp.dot(w1_ref[...], xt_ref[...].astype(w1_ref.dtype),
                preferred_element_type=f32, precision=prec)                  # (256, TB)
    h = jnp.maximum(h, 0.0)

    # ---- Layers 2 & 3: the real FLOP load -> MXU, f32 accumulation, (N,1) vreg bias operands.
    h = jnp.dot(w2_ref[...], h.astype(w2_ref.dtype),
                preferred_element_type=f32, precision=prec) + b2_ref[...]    # (128, TB)
    h = jnp.maximum(h, 0.0)
    h = jnp.dot(w3_ref[...], h.astype(w3_ref.dtype),
                preferred_element_type=f32, precision=prec) + b3_ref[...]    # (64, TB)
    h = jnp.maximum(h, 0.0)

    # ---- Layer 4: N=1 head. Skip the MXU: VPU multiply + sublane (XLU) reduce + EUP tanh.
    # Result is already lane-dense (batch on lanes) -> full-width unmasked store.
    y = jnp.sum(h * w4_ref[...], axis=0, keepdims=True) + b4_ref[...]        # (1, TB)
    o_ref[...] = jnp.tanh(y)


def _round_up(a, m):
    return ((a + m - 1) // m) * m


def actor_forward(x, params, *, tb=None, use_bf16=True):
    """x: (B, 3) float32. params: PyTorch-convention (W1,b1,...,W4,b4), W_i (out,in), b_i (out,)."""
    B = x.shape[0]
    w1, b1, w2, b2, w3, b3, w4, b4 = params

    if tb is None:
        # Big tiles amortize the ~0.35 us/grid-step overhead; keep n_tiles >= 2 when possible so
        # v7x's two TensorCores both get work; cap at 2048 so f32 intermediates stay well under
        # every chip's scoped-VMEM budget (v5e default 16 MiB is the tightest).
        tb = min(2048, max(256, _round_up((B + 1) // 2, 256)))
    n_tiles = pl.cdiv(B, tb)
    b_pad = n_tiles * tb

    w_dt = jnp.bfloat16 if use_bf16 else jnp.float32

    # Layout plumbing (single fused XLA copy over the tiny (B,3) input): batch on lanes, a ones
    # row appended so b1 folds into w1 (padded batch columns are zero -> discarded after slice).
    xt = jnp.concatenate([x.astype(jnp.float32).T,
                          jnp.ones((1, B), jnp.float32)], axis=0)            # (4, B)
    xt = jnp.pad(xt, ((0, 0), (0, b_pad - B)))                               # (4, B_pad)
    w1a = jnp.concatenate([w1, b1.reshape(-1, 1)], axis=1).astype(w_dt)      # (256, 4)

    ops = (
        xt,                                       # (4, B_pad) f32, tiled along batch
        w1a,                                      # (256, 4)   bias folded in
        w2.astype(w_dt),                          # (128, 256)
        b2.reshape(-1, 1),                        # (128, 1)
        w3.astype(w_dt),                          # (64, 128)
        b3.reshape(-1, 1),                        # (64, 1)
        w4.reshape(-1, 1).astype(jnp.float32),    # (64, 1)  f32 (head stays VPU/XLU)
        b4.reshape(1, 1).astype(jnp.float32),     # (1, 1)
    )

    # x and output are tiled along the batch; weights/biases are constant-indexed so they are
    # DMA'd once and stay resident in VMEM across grid steps (~170 KB total).
    in_specs = [pl.BlockSpec((4, tb), lambda i: (0, i))]
    in_specs += [pl.BlockSpec(a.shape, lambda i: (0, 0)) for a in ops[1:]]
    out_spec = pl.BlockSpec((1, tb), lambda i: (0, i))

    flops = 2 * b_pad * (4 * 256 + 256 * 128 + 128 * 64 + 64)
    bytes_accessed = int(sum(a.size * a.dtype.itemsize for a in ops) + b_pad * 4)

    out = pl.pallas_call(
        actor_kernel,
        out_shape=jax.ShapeDtypeStruct((1, b_pad), jnp.float32),
        grid=(n_tiles,),
        in_specs=in_specs,
        out_specs=out_spec,
        compiler_params=pltpu.CompilerParams(
            # Batch tiles split across TensorCores on v7x; no-op on single-TC v5e/v6e.
            dimension_semantics=("parallel",),
            # Explicit scoped-VMEM limit: safe on every chip (<= v7x physical 64 MiB) and lifts
            # v5e's 16 MiB default well above the ~6 MB peak at tb=2048.
            vmem_limit_bytes=32 * 1024 * 1024),
        cost_estimate=pl.CostEstimate(
            flops=flops, transcendentals=b_pad, bytes_accessed=bytes_accessed),
    )(*ops)

    return out[0, :B].reshape(B, 1)


def init_params(key):
    """Deterministic init mimicking PyTorch nn.Linear defaults: W (out,in), b (out,)."""
    dims = [3, 256, 128, 64, 1]
    params = []
    for i in range(4):
        fan_in, fan_out = dims[i], dims[i + 1]
        key, kw, kb = jax.random.split(key, 3)
        bound = 1.0 / np.sqrt(fan_in)
        w = jax.random.uniform(kw, (fan_out, fan_in), jnp.float32, -bound, bound)
        b = jax.random.uniform(kb, (fan_out,), jnp.float32, -bound, bound)
        params += [w, b]
    return tuple(params)


def actor_reference(x, params):
    w1, b1, w2, b2, w3, b3, w4, b4 = params
    hi = jax.lax.Precision.HIGHEST
    h = jnp.maximum(jnp.dot(x, w1.T, precision=hi) + b1, 0.0)
    h = jnp.maximum(jnp.dot(h, w2.T, precision=hi) + b2, 0.0)
    h = jnp.maximum(jnp.dot(h, w3.T, precision=hi) + b3, 0.0)
    return jnp.tanh(jnp.dot(h, w4.T, precision=hi) + b4)


if __name__ == "__main__":
    key = jax.random.PRNGKey(0)
    kx, kp = jax.random.split(key)
    params = init_params(kp)

    # Small shape consistent with the module: x is (batch, 3). f32/HIGHEST parity path.
    B = 8
    x = jax.random.normal(kx, (B, 3), jnp.float32)
    out = jax.block_until_ready(actor_forward(x, params, use_bf16=False))
    ref = actor_reference(x, params)
    assert out.shape == (B, 1)
    np.testing.assert_allclose(np.asarray(out), np.asarray(ref), rtol=1e-4, atol=1e-4)

    # Multi-tile + padding path (B not a multiple of the batch tile), f32 parity path.
    B2 = 300
    x2 = jax.random.normal(kx, (B2, 3), jnp.float32)
    out2 = jax.block_until_ready(actor_forward(x2, params, use_bf16=False))
    ref2 = actor_reference(x2, params)
    np.testing.assert_allclose(np.asarray(out2), np.asarray(ref2), rtol=1e-4, atol=1e-4)

    # Default fast path: bf16 weights on the three MXU layers, f32 accumulation.
    out_bf16 = jax.block_until_ready(actor_forward(x2, params))
    np.testing.assert_allclose(np.asarray(out_bf16), np.asarray(ref2), rtol=0, atol=7.5e-2)

    print("KERNEL_OK")
</pallas_src>

<mosaic_0001>
module attributes {stable_mosaic.version = 11 : i64} {
  func.func @actor_kernel(%arg0: i32, %arg1: memref<4x256xf32, #tpu.memory_space<vmem>>, %arg2: memref<256x4xf32, #tpu.memory_space<vmem>>, %arg3: memref<128x256xf32, #tpu.memory_space<vmem>>, %arg4: memref<128x1xf32, #tpu.memory_space<vmem>>, %arg5: memref<64x128xf32, #tpu.memory_space<vmem>>, %arg6: memref<64x1xf32, #tpu.memory_space<vmem>>, %arg7: memref<64x1xf32, #tpu.memory_space<vmem>>, %arg8: memref<1x1xf32, #tpu.memory_space<vmem>>, %arg9: memref<1x256xf32, #tpu.memory_space<vmem>>) attributes {dimension_semantics = [#tpu.dimension_semantics<parallel>], iteration_bounds = array<i64: 1>, scalar_prefetch = 0 : i64, scratch_operands = 0 : i64, tpu.core_type = #tpu.core_type<tc>, window_params = [{transform_indices = @transform_0, window_bounds = array<i64: 4, 256>}, {pipeline_mode = #tpu.pipeline_mode<synchronous>, transform_indices = @transform_1, window_bounds = array<i64: 256, 4>}, {pipeline_mode = #tpu.pipeline_mode<synchronous>, transform_indices = @transform_2, window_bounds = array<i64: 128, 256>}, {pipeline_mode = #tpu.pipeline_mode<synchronous>, transform_indices = @transform_3, window_bounds = array<i64: 128, 1>}, {pipeline_mode = #tpu.pipeline_mode<synchronous>, transform_indices = @transform_4, window_bounds = array<i64: 64, 128>}, {pipeline_mode = #tpu.pipeline_mode<synchronous>, transform_indices = @transform_5, window_bounds = array<i64: 64, 1>}, {pipeline_mode = #tpu.pipeline_mode<synchronous>, transform_indices = @transform_6, window_bounds = array<i64: 64, 1>}, {pipeline_mode = #tpu.pipeline_mode<synchronous>, transform_indices = @transform_7, window_bounds = array<i64: 1, 1>}, {transform_indices = @transform_8, window_bounds = array<i64: 1, 256>}]} {
    %c0 = arith.constant 0 : index
    %c0_0 = arith.constant 0 : index
    %0 = vector.load %arg2[%c0, %c0_0] : memref<256x4xf32, #tpu.memory_space<vmem>>, vector<256x4xf32>
    %c0_1 = arith.constant 0 : index
    %c0_2 = arith.constant 0 : index
    %1 = vector.load %arg1[%c0_1, %c0_2] : memref<4x256xf32, #tpu.memory_space<vmem>>, vector<4x256xf32>
    %cst = arith.constant dense<0.000000e+00> : vector<256x256xf32>
    %2 = tpu.matmul %0, %1, %cst {dimension_numbers = #tpu.dot_dimension_numbers<[1], [0], [0], [1], [0, 0, 1, 1], [], []>, precision = #tpu.contract_precision<fp32>} : vector<256x4xf32>, vector<4x256xf32>, vector<256x256xf32> -> vector<256x256xf32>
    %cst_3 = arith.constant 0.000000e+00 : f32
    %3 = vector.broadcast %cst_3 : f32 to vector<256x256xf32>
    %4 = arith.maximumf %2, %3 : vector<256x256xf32>
    %c0_4 = arith.constant 0 : index
    %c0_5 = arith.constant 0 : index
    %5 = vector.load %arg3[%c0_4, %c0_5] : memref<128x256xf32, #tpu.memory_space<vmem>>, vector<128x256xf32>
    %cst_6 = arith.constant dense<0.000000e+00> : vector<128x256xf32>
    %6 = tpu.matmul %5, %4, %cst_6 {dimension_numbers = #tpu.dot_dimension_numbers<[1], [0], [0], [1], [0, 0, 1, 1], [], []>, precision = #tpu.contract_precision<fp32>} : vector<128x256xf32>, vector<256x256xf32>, vector<128x256xf32> -> vector<128x256xf32>
    %c0_7 = arith.constant 0 : index
    %c0_8 = arith.constant 0 : index
    %7 = vector.load %arg4[%c0_7, %c0_8] : memref<128x1xf32, #tpu.memory_space<vmem>>, vector<128x1xf32>
    %8 = vector.broadcast %7 : vector<128x1xf32> to vector<128x256xf32>
    %9 = arith.addf %6, %8 : vector<128x256xf32>
    %cst_9 = arith.constant 0.000000e+00 : f32
    %10 = vector.broadcast %cst_9 : f32 to vector<128x256xf32>
    %11 = arith.maximumf %9, %10 : vector<128x256xf32>
    %c0_10 = arith.constant 0 : index
    %c0_11 = arith.constant 0 : index
    %12 = vector.load %arg5[%c0_10, %c0_11] : memref<64x128xf32, #tpu.memory_space<vmem>>, vector<64x128xf32>
    %cst_12 = arith.constant dense<0.000000e+00> : vector<64x256xf32>
    %13 = tpu.matmul %12, %11, %cst_12 {dimension_numbers = #tpu.dot_dimension_numbers<[1], [0], [0], [1], [0, 0, 1, 1], [], []>, precision = #tpu.contract_precision<fp32>} : vector<64x128xf32>, vector<128x256xf32>, vector<64x256xf32> -> vector<64x256xf32>
    %c0_13 = arith.constant 0 : index
    %c0_14 = arith.constant 0 : index
    %14 = vector.load %arg6[%c0_13, %c0_14] : memref<64x1xf32, #tpu.memory_space<vmem>>, vector<64x1xf32>
    %15 = vector.broadcast %14 : vector<64x1xf32> to vector<64x256xf32>
    %16 = arith.addf %13, %15 : vector<64x256xf32>
    %cst_15 = arith.constant 0.000000e+00 : f32
    %17 = vector.broadcast %cst_15 : f32 to vector<64x256xf32>
    %18 = arith.maximumf %16, %17 : vector<64x256xf32>
    %c0_16 = arith.constant 0 : index
    %c0_17 = arith.constant 0 : index
    %19 = vector.load %arg7[%c0_16, %c0_17] : memref<64x1xf32, #tpu.memory_space<vmem>>, vector<64x1xf32>
    %20 = vector.broadcast %19 : vector<64x1xf32> to vector<64x256xf32>
    %21 = arith.mulf %18, %20 : vector<64x256xf32>
    %cst_18 = arith.constant dense<0.000000e+00> : vector<256xf32>
    %22 = vector.multi_reduction <add>, %21, %cst_18 [0] : vector<64x256xf32> to vector<256xf32>
    %23 = vector.shape_cast %22 : vector<256xf32> to vector<1x256xf32>
    %c0_19 = arith.constant 0 : index
    %c0_20 = arith.constant 0 : index
    %24 = vector.load %arg8[%c0_19, %c0_20] : memref<1x1xf32, #tpu.memory_space<vmem>>, vector<1x1xf32>
    %25 = vector.broadcast %24 : vector<1x1xf32> to vector<1x256xf32>
    %26 = arith.addf %23, %25 : vector<1x256xf32>
    %27 = math.tanh %26 : vector<1x256xf32>
    %c0_21 = arith.constant 0 : index
    %c0_22 = arith.constant 0 : index
    %28 = vector.load %arg9[%c0_21, %c0_22] : memref<1x256xf32, #tpu.memory_space<vmem>>, vector<1x256xf32>
    tpu.vector_store %arg9[%c0_21, %c0_22], %27 {strides = array<i32>} : memref<1x256xf32, #tpu.memory_space<vmem>>, vector<1x256xf32>,
    return
  }
  func.func @transform_0(%arg0: i32) -> (i32, i32) {
    %c0_i32 = arith.constant 0 : i32
    %c0_i32_0 = arith.constant 0 : i32
    return %c0_i32, %arg0 : i32, i32
  }
  func.func @transform_1(%arg0: i32) -> (i32, i32) {
    %c0_i32 = arith.constant 0 : i32
    %c0_i32_0 = arith.constant 0 : i32
    %c0_i32_1 = arith.constant 0 : i32
    return %c0_i32, %c0_i32_0 : i32, i32
  }
  func.func @transform_2(%arg0: i32) -> (i32, i32) {
    %c0_i32 = arith.constant 0 : i32
    %c0_i32_0 = arith.constant 0 : i32
    %c0_i32_1 = arith.constant 0 : i32
    return %c0_i32, %c0_i32_0 : i32, i32
  }
  func.func @transform_3(%arg0: i32) -> (i32, i32) {
    %c0_i32 = arith.constant 0 : i32
    %c0_i32_0 = arith.constant 0 : i32
    %c0_i32_1 = arith.constant 0 : i32
    return %c0_i32, %c0_i32_0 : i32, i32
  }
  func.func @transform_4(%arg0: i32) -> (i32, i32) {
    %c0_i32 = arith.constant 0 : i32
    %c0_i32_0 = arith.constant 0 : i32
    %c0_i32_1 = arith.constant 0 : i32
    return %c0_i32, %c0_i32_0 : i32, i32
  }
  func.func @transform_5(%arg0: i32) -> (i32, i32) {
    %c0_i32 = arith.constant 0 : i32
    %c0_i32_0 = arith.constant 0 : i32
    %c0_i32_1 = arith.constant 0 : i32
    return %c0_i32, %c0_i32_0 : i32, i32
  }
  func.func @transform_6(%arg0: i32) -> (i32, i32) {
    %c0_i32 = arith.constant 0 : i32
    %c0_i32_0 = arith.constant 0 : i32
    %c0_i32_1 = arith.constant 0 : i32
    return %c0_i32, %c0_i32_0 : i32, i32
  }
  func.func @transform_7(%arg0: i32) -> (i32, i32) {
    %c0_i32 = arith.constant 0 : i32
    %c0_i32_0 = arith.constant 0 : i32
    %c0_i32_1 = arith.constant 0 : i32
    return %c0_i32, %c0_i32_0 : i32, i32
  }
  func.func @transform_8(%arg0: i32) -> (i32, i32) {
    %c0_i32 = arith.constant 0 : i32
    %c0_i32_0 = arith.constant 0 : i32
    return %c0_i32, %arg0 : i32, i32
  }
}

</mosaic_0001>

<llo_original>
// kernel: tpu_custom_call.1
$region0: #{tpu_custom_call.1}
  #allocation0 [shape = 'u32[]', space=smem, size = 0x4, offset = 0x4, fixed_abs, tag = 'smem constant byte address 0x4 - core index']
  #allocation1 [shape = 'u32[144,128]{1,0:T(1,128)}', space=vmem, size = 0x12000, scoped, tag = 'internal scratch']
  #allocation2 [shape = 'f32[1,1]{1,0:T(1,128)S(1)}', space=vmem, size = 0x200, scoped, tag = 'scoped memory for tpu_custom_call.1']
  %s0 = inlined_call_operand.vmem [shape: f32[4,256], index: 0, kind: input, shape index: {}]
  %s1 = inlined_call_operand.vmem [shape: f32[256,4], index: 1, kind: input, shape index: {}]
  %s2 = inlined_call_operand.vmem [shape: f32[128,256], index: 2, kind: input, shape index: {}]
  %s3 = inlined_call_operand.vmem [shape: f32[128,1], index: 3, kind: input, shape index: {}]
  %s4 = inlined_call_operand.vmem [shape: f32[64,128], index: 4, kind: input, shape index: {}]
  %s5 = inlined_call_operand.vmem [shape: f32[64,1], index: 5, kind: input, shape index: {}]
  %s6 = inlined_call_operand.vmem [shape: f32[64,1], index: 6, kind: input, shape index: {}]
  %s7 = inlined_call_operand.<no memory space> [shape: f32[1,1], index: 7, kind: input, shape index: {}]
  %s8 = inlined_call_operand.hbm [shape: f32[1,256], index: 8, kind: output, shape index: {}]
  %s9 = sld [smem:[#allocation0]]
  $region42: #{tpu_custom_call.1} parent=0
    _
  %s11 = ssub.s32 1, %s9
  %s12 = scalar_select 0, %s11, %s9
  %v13 = vstv %s7
  %14 = vst [vmem:[#allocation2] sm:$0x1] %v13
  $region1: #{tpu_custom_call.1} parent=0
    #allocation3 [shape = 'u8[1024]{0}', space=vmem, size = 0x400, scoped, tag = 'output window, operand 0, single buffered']
    #allocation4 [shape = 's32[1]{0}', space=sflag, size = 0x4, scoped, tag = 'scoped memory for tpu_custom_call.1']
    %15 = vsyncpa [#allocation4], 0
    // Predicated region
    $region2: #{tpu_custom_call.1} parent=1 // pred_check
      _
    $region3: #{tpu_custom_call.1} parent=1 // pred_check_branch
      %17 = sbr.rel (0) target = $region5
    $region4: #{tpu_custom_call.1} parent=1 // pred_region
      _
    $region5: #{tpu_custom_call.1} parent=1 // pred_fallthru
      _
    // Predicated region
    $region6: #{tpu_custom_call.1} parent=1 // pred_check
      _
    $region7: #{tpu_custom_call.1} parent=1 // pred_check_branch
      %19 = sbr.rel (0) target = $region9
    $region8: #{tpu_custom_call.1} parent=1 // pred_region
      _
    $region9: #{tpu_custom_call.1} parent=1 // pred_fallthru
      _
    // Predicated region
    $region10: #{tpu_custom_call.1} parent=1 // pred_check
      _
    $region11: #{tpu_custom_call.1} parent=1 // pred_check_branch
      %21 = sbr.rel (0) target = $region13
    $region12: #{tpu_custom_call.1} parent=1 // pred_region
      _
    $region13: #{tpu_custom_call.1} parent=1 // pred_fallthru
      _
    // Predicated region
    $region14: #{tpu_custom_call.1} parent=1 // pred_check
      _
    $region15: #{tpu_custom_call.1} parent=1 // pred_check_branch
      %23 = sbr.rel (0) target = $region17
    $region16: #{tpu_custom_call.1} parent=1 // pred_region
      _
    $region17: #{tpu_custom_call.1} parent=1 // pred_fallthru
      _
    // Predicated region
    $region18: #{tpu_custom_call.1} parent=1 // pred_check
      _
    $region19: #{tpu_custom_call.1} parent=1 // pred_check_branch
      %25 = sbr.rel (0) target = $region21
    $region20: #{tpu_custom_call.1} parent=1 // pred_region
      _
    $region21: #{tpu_custom_call.1} parent=1 // pred_fallthru
      _
    // Predicated region
    $region22: #{tpu_custom_call.1} parent=1 // pred_check
      _
    $region23: #{tpu_custom_call.1} parent=1 // pred_check_branch
      %27 = sbr.rel (0) target = $region25
    $region24: #{tpu_custom_call.1} parent=1 // pred_region
      _
    $region25: #{tpu_custom_call.1} parent=1 // pred_fallthru
      _
    // Predicated region
    $region26: #{tpu_custom_call.1} parent=1 // pred_check
      _
    $region27: #{tpu_custom_call.1} parent=1 // pred_check_branch
      %29 = sbr.rel (0) target = $region29
    $region28: #{tpu_custom_call.1} parent=1 // pred_region
      _
    $region29: #{tpu_custom_call.1} parent=1 // pred_fallthru
      _
    // Predicated region
    $region30: #{tpu_custom_call.1} parent=1 // pred_check
      _
    $region31: #{tpu_custom_call.1} parent=1 // pred_check_branch
      %31 = sbr.rel (0) target = $region33
    $region32: #{tpu_custom_call.1} parent=1 // pred_region
      _
    $region33: #{tpu_custom_call.1} parent=1 // pred_fallthru
      _
    %v32 = vld [vmem:[%s1] sm:$0xff]
    %v33 = vld [vmem:[%s1 + $0x8] sm:$0xff]
    %v34 = vld [vmem:[%s1 + $0x10] sm:$0xff]
    %v35 = vld [vmem:[%s1 + $0x18] sm:$0xff]
    %v36 = vld [vmem:[%s1 + $0x20] sm:$0xff]
    %v37 = vld [vmem:[%s1 + $0x28] sm:$0xff]
    %v38 = vld [vmem:[%s1 + $0x30] sm:$0xff]
    %v39 = vld [vmem:[%s1 + $0x38] sm:$0xff]
    %v40 = vld [vmem:[%s1 + $0x40] sm:$0xff]
    %v41 = vld [vmem:[%s1 + $0x48] sm:$0xff]
    %v42 = vld [vmem:[%s1 + $0x50] sm:$0xff]
    %v43 = vld [vmem:[%s1 + $0x58] sm:$0xff]
    %v44 = vld [vmem:[%s1 + $0x60] sm:$0xff]
    %v45 = vld [vmem:[%s1 + $0x68] sm:$0xff]
    %v46 = vld [vmem:[%s1 + $0x70] sm:$0xff]
    %v47 = vld [vmem:[%s1 + $0x78] sm:$0xff]
    %v48 = vld [vmem:[%s1 + $0x80] sm:$0xff]
    %v49 = vld [vmem:[%s1 + $0x88] sm:$0xff]
    %v50 = vld [vmem:[%s1 + $0x90] sm:$0xff]
    %v51 = vld [vmem:[%s1 + $0x98] sm:$0xff]
    %v52 = vld [vmem:[%s1 + $0xa0] sm:$0xff]
    %v53 = vld [vmem:[%s1 + $0xa8] sm:$0xff]
    %v54 = vld [vmem:[%s1 + $0xb0] sm:$0xff]
    %v55 = vld [vmem:[%s1 + $0xb8] sm:$0xff]
    %v56 = vld [vmem:[%s1 + $0xc0] sm:$0xff]
    %v57 = vld [vmem:[%s1 + $0xc8] sm:$0xff]
    %v58 = vld [vmem:[%s1 + $0xd0] sm:$0xff]
    %v59 = vld [vmem:[%s1 + $0xd8] sm:$0xff]
    %v60 = vld [vmem:[%s1 + $0xe0] sm:$0xff]
    %v61 = vld [vmem:[%s1 + $0xe8] sm:$0xff]
    %v62 = vld [vmem:[%s1 + $0xf0] sm:$0xff]
    %v63 = vld [vmem:[%s1 + $0xf8] sm:$0xff]
    %v64 = vld [vmem:[%s0] sm:$0xff]
    %v66 = vcombine.high %v64, %v64
    %vm67 = vcmask 31744
    %v69 = vsel %vm67, %v32, 0
    %v72 = vsel %vm67, %v33, 0
    %v75 = vsel %vm67, %v34, 0
    %v78 = vsel %vm67, %v35, 0
    %v81 = vsel %vm67, %v36, 0
    %v84 = vsel %vm67, %v37, 0
    %v87 = vsel %vm67, %v38, 0
    %v90 = vsel %vm67, %v39, 0
    %v93 = vsel %vm67, %v40, 0
    %v96 = vsel %vm67, %v41, 0
    %v99 = vsel %vm67, %v42, 0
    %v102 = vsel %vm67, %v43, 0
    %v105 = vsel %vm67, %v44, 0
    %v108 = vsel %vm67, %v45, 0
    %v111 = vsel %vm67, %v46, 0
    %v114 = vsel %vm67, %v47, 0
    %v117 = vsel %vm67, %v48, 0
    %v120 = vsel %vm67, %v49, 0
    %v123 = vsel %vm67, %v50, 0
    %v126 = vsel %vm67, %v51, 0
    %v129 = vsel %vm67, %v52, 0
    %v132 = vsel %vm67, %v53, 0
    %v135 = vsel %vm67, %v54, 0
    %v138 = vsel %vm67, %v55, 0
    %v141 = vsel %vm67, %v56, 0
    %v144 = vsel %vm67, %v57, 0
    %v147 = vsel %vm67, %v58, 0
    %v150 = vsel %vm67, %v59, 0
    %v153 = vsel %vm67, %v60, 0
    %v156 = vsel %vm67, %v61, 0
    %v159 = vsel %vm67, %v62, 0
    %v162 = vsel %vm67, %v63, 0
    %vm164 = vcmask 1043456
    %v165 = vsel %vm164, %v64, 0
    %v167 = vsel %vm164, %v66, 0
    %v169 = vand.u32 %v167, 4294901760
    %170 = vmatprep.subr.mxu0 %v169
    %v171 = vand.u32 %v165, 4294901760
    %172 = vmatpush1.msra.mxu0 %v171
    %173 = vmatprep.subr.mxu0 0.0
    %174 = vmatpush1.msra.mxu0 0.0
    %175 = vmatprep.subr.mxu0 0.0
    %176 = vmatpush1.msra.mxu0 0.0
    %177 = vmatprep.subr.mxu0 0.0
    %178 = vmatpush1.msra.mxu0 0.0
    %179 = vmatprep.subr.mxu0 0.0
    %180 = vmatpush1.msra.mxu0 0.0
    %181 = vmatprep.subr.mxu0 0.0
    %182 = vmatpush1.msra.mxu0 0.0
    %183 = vmatprep.subr.mxu0 0.0
    %184 = vmatpush1.msra.mxu0 0.0
    %185 = vmatprep.subr.mxu0 0.0
    %186 = vmatpush1.msra.mxu0 0.0
    %187 = vmatprep.subr.mxu0 0.0
    %188 = vmatpush1.msra.mxu0 0.0
    %189 = vmatprep.subr.mxu0 0.0
    %190 = vmatpush1.msra.mxu0 0.0
    %191 = vmatprep.subr.mxu0 0.0
    %192 = vmatpush1.msra.mxu0 0.0
    %193 = vmatprep.subr.mxu0 0.0
    %194 = vmatpush1.msra.mxu0 0.0
    %195 = vmatprep.subr.mxu0 0.0
    %196 = vmatpush1.msra.mxu0 0.0
    %197 = vmatprep.subr.mxu0 0.0
    %198 = vmatpush1.msra.mxu0 0.0
    %199 = vmatprep.subr.mxu0 0.0
    %200 = vmatpush1.msra.mxu0 0.0
    %201 = vmatprep.subr.mxu0 0.0
    %202 = vmatpush1.msra.mxu0 0.0
    %203 = vmatprep.subr.mxu0 0.0
    %204 = vmatpush1.msra.mxu0 0.0
    %205 = vmatprep.subr.mxu0 0.0
    %206 = vmatpush1.msra.mxu0 0.0
    %207 = vmatprep.subr.mxu0 0.0
    %208 = vmatpush1.msra.mxu0 0.0
    %209 = vmatprep.subr.mxu0 0.0
    %210 = vmatpush1.msra.mxu0 0.0
    %211 = vmatprep.subr.mxu0 0.0
    %212 = vmatpush1.msra.mxu0 0.0
    %213 = vmatprep.subr.mxu0 0.0
    %214 = vmatpush1.msra.mxu0 0.0
    %215 = vmatprep.subr.mxu0 0.0
    %216 = vmatpush1.msra.mxu0 0.0
    %217 = vmatprep.subr.mxu0 0.0
    %218 = vmatpush1.msra.mxu0 0.0
    %219 = vmatprep.subr.mxu0 0.0
    %220 = vmatpush1.msra.mxu0 0.0
    %221 = vmatprep.subr.mxu0 0.0
    %222 = vmatpush1.msra.mxu0 0.0
    %223 = vmatprep.subr.mxu0 0.0
    %224 = vmatpush1.msra.mxu0 0.0
    %225 = vmatprep.subr.mxu0 0.0
    %226 = vmatpush1.msra.mxu0 0.0
    %227 = vmatprep.subr.mxu0 0.0
    %228 = vmatpush1.msra.mxu0 0.0
    %229 = vmatprep.subr.mxu0 0.0
    %230 = vmatpush1.msra.mxu0 0.0
    %231 = vmatprep.subr.mxu0 0.0
    %232 = vmatpush1.msra.mxu0 0.0
    %233 = vmatprep.subr.mxu0 0.0
    %234 = vmatpush1.msra.mxu0 0.0
    %235 = vmatprep.mubr.f32.mxu0 0.0
    %v236 = vand.u32 %v69, 4294901760
    %v237 = vsub.f32 %v69, %v236
    %v238 = vand.u32 %v237, 4294901760
    %v239 = vsub.f32 %v237, %v238
    %v240 = vand.u32 %v239, 4294901760
    %241 = vmatmul.mubr.f32.gmra.mrb[0].mxu0 %v240
    %v242 = vpop.f32.mrb[0].mxu0
    %v243 = vadd.f32 0.0, %v242
    %v244 = vpop.f32.mrb[0].mxu0
    %v245 = vadd.f32 0.0, %v244
    %246 = vmatprep.mubr.f32.mxu0 0.0
    %v247 = vand.u32 %v72, 4294901760
    %v248 = vsub.f32 %v72, %v247
    %v249 = vand.u32 %v248, 4294901760
    %v250 = vsub.f32 %v248, %v249
    %v251 = vand.u32 %v250, 4294901760
    %252 = vmatmul.mubr.f32.gmra.mrb[0].mxu0 %v251
    %v253 = vpop.f32.mrb[0].mxu0
    %v254 = vadd.f32 0.0, %v253
    %v255 = vpop.f32.mrb[0].mxu0
    %v256 = vadd.f32 0.0, %v255
    %257 = vmatprep.mubr.f32.mxu0 0.0
    %v258 = vand.u32 %v75, 4294901760
    %v259 = vsub.f32 %v75, %v258
    %v260 = vand.u32 %v259, 4294901760
    %v261 = vsub.f32 %v259, %v260
    %v262 = vand.u32 %v261, 4294901760
    %263 = vmatmul.mubr.f32.gmra.mrb[0].mxu0 %v262
    %v264 = vpop.f32.mrb[0].mxu0
    %v265 = vadd.f32 0.0, %v264
    %v266 = vpop.f32.mrb[0].mxu0
    %v267 = vadd.f32 0.0, %v266
    %268 = vmatprep.mubr.f32.mxu0 0.0
    %v269 = vand.u32 %v78, 4294901760
    %v270 = vsub.f32 %v78, %v269
    %v271 = vand.u32 %v270, 4294901760
    %v272 = vsub.f32 %v270, %v271
    %v273 = vand.u32 %v272, 4294901760
    %274 = vmatmul.mubr.f32.gmra.mrb[0].mxu0 %v273
    %v275 = vpop.f32.mrb[0].mxu0
    %v276 = vadd.f32 0.0, %v275
    %v277 = vpop.f32.mrb[0].mxu0
    %v278 = vadd.f32 0.0, %v277
    %279 = vmatprep.mubr.f32.mxu0 0.0
    %v280 = vand.u32 %v81, 4294901760
    %v281 = vsub.f32 %v81, %v280
    %v282 = vand.u32 %v281, 4294901760
    %v283 = vsub.f32 %v281, %v282
    %v284 = vand.u32 %v283, 4294901760
    %285 = vmatmul.mubr.f32.gmra.mrb[0].mxu0 %v284
    %v286 = vpop.f32.mrb[0].mxu0
    %v287 = vadd.f32 0.0, %v286
    %v288 = vpop.f32.mrb[0].mxu0
    %v289 = vadd.f32 0.0, %v288
    %290 = vmatprep.mubr.f32.mxu0 0.0
    %v291 = vand.u32 %v84, 4294901760
    %v292 = vsub.f32 %v84, %v291
    %v293 = vand.u32 %v292, 4294901760
    %v294 = vsub.f32 %v292, %v293
    %v295 = vand.u32 %v294, 4294901760
    %296 = vmatmul.mubr.f32.gmra.mrb[0].mxu0 %v295
    %v297 = vpop.f32.mrb[0].mxu0
    %v298 = vadd.f32 0.0, %v297
    %v299 = vpop.f32.mrb[0].mxu0
    %v300 = vadd.f32 0.0, %v299
    %301 = vmatprep.mubr.f32.mxu0 0.0
    %v302 = vand.u32 %v87, 4294901760
    %v303 = vsub.f32 %v87, %v302
    %v304 = vand.u32 %v303, 4294901760
    %v305 = vsub.f32 %v303, %v304
    %v306 = vand.u32 %v305, 4294901760
    %307 = vmatmul.mubr.f32.gmra.mrb[0].mxu0 %v306
    %v308 = vpop.f32.mrb[0].mxu0
    %v309 = vadd.f32 0.0, %v308
    %v310 = vpop.f32.mrb[0].mxu0
    %v311 = vadd.f32 0.0, %v310
    %312 = vmatprep.mubr.f32.mxu0 0.0
    %v313 = vand.u32 %v90, 4294901760
    %v314 = vsub.f32 %v90, %v313
    %v315 = vand.u32 %v314, 4294901760
    %v316 = vsub.f32 %v314, %v315
    %v317 = vand.u32 %v316, 4294901760
    %318 = vmatmul.mubr.f32.gmra.mrb[0].mxu0 %v317
    %v319 = vpop.f32.mrb[0].mxu0
    %v320 = vadd.f32 0.0, %v319
    %v321 = vpop.f32.mrb[0].mxu0
    %v322 = vadd.f32 0.0, %v321
    %323 = vmatprep.mubr.f32.mxu0 0.0
    %v324 = vand.u32 %v93, 4294901760
    %v325 = vsub.f32 %v93, %v324
    %v326 = vand.u32 %v325, 4294901760
    %v327 = vsub.f32 %v325, %v326
    %v328 = vand.u32 %v327, 4294901760
    %329 = vmatmul.mubr.f32.gmra.mrb[0].mxu0 %v328
    %v330 = vpop.f32.mrb[0].mxu0
    %v331 = vadd.f32 0.0, %v330
    %v332 = vpop.f32.mrb[0].mxu0
    %v333 = vadd.f32 0.0, %v332
    %334 = vmatprep.mubr.f32.mxu0 0.0
    %v335 = vand.u32 %v96, 4294901760
    %v336 = vsub.f32 %v96, %v335
    %v337 = vand.u32 %v336, 4294901760
    %v338 = vsub.f32 %v336, %v337
    %v339 = vand.u32 %v338, 4294901760
    %340 = vmatmul.mubr.f32.gmra.mrb[0].mxu0 %v339
    %v341 = vpop.f32.mrb[0].mxu0
    %v342 = vadd.f32 0.0, %v341
    %v343 = vpop.f32.mrb[0].mxu0
    %v344 = vadd.f32 0.0, %v343
    %345 = vmatprep.mubr.f32.mxu0 0.0
    %v346 = vand.u32 %v99, 4294901760
    %v347 = vsub.f32 %v99, %v346
    %v348 = vand.u32 %v347, 4294901760
    %v349 = vsub.f32 %v347, %v348
    %v350 = vand.u32 %v349, 4294901760
    %351 = vmatmul.mubr.f32.gmra.mrb[0].mxu0 %v350
    %v352 = vpop.f32.mrb[0].mxu0
    %v353 = vadd.f32 0.0, %v352
    %v354 = vpop.f32.mrb[0].mxu0
    %v355 = vadd.f32 0.0, %v354
    %356 = vmatprep.mubr.f32.mxu0 0.0
    %v357 = vand.u32 %v102, 4294901760
    %v358 = vsub.f32 %v102, %v357
    %v359 = vand.u32 %v358, 4294901760
    %v360 = vsub.f32 %v358, %v359
    %v361 = vand.u32 %v360, 4294901760
    %362 = vmatmul.mubr.f32.gmra.mrb[0].mxu0 %v361
    %v363 = vpop.f32.mrb[0].mxu0
    %v364 = vadd.f32 0.0, %v363
    %v365 = vpop.f32.mrb[0].mxu0
    %v366 = vadd.f32 0.0, %v365
    %367 = vmatprep.mubr.f32.mxu0 0.0
    %v368 = vand.u32 %v105, 4294901760
    %v369 = vsub.f32 %v105, %v368
    %v370 = vand.u32 %v369, 4294901760
    %v371 = vsub.f32 %v369, %v370
    %v372 = vand.u32 %v371, 4294901760
    %373 = vmatmul.mubr.f32.gmra.mrb[0].mxu0 %v372
    %v374 = vpop.f32.mrb[0].mxu0
    %v375 = vadd.f32 0.0, %v374
    %v376 = vpop.f32.mrb[0].mxu0
    %v377 = vadd.f32 0.0, %v376
    %378 = vmatprep.mubr.f32.mxu0 0.0
    %v379 = vand.u32 %v108, 4294901760
    %v380 = vsub.f32 %v108, %v379
    %v381 = vand.u32 %v380, 4294901760
    %v382 = vsub.f32 %v380, %v381
    %v383 = vand.u32 %v382, 4294901760
    %384 = vmatmul.mubr.f32.gmra.mrb[0].mxu0 %v383
    %v385 = vpop.f32.mrb[0].mxu0
    %v386 = vadd.f32 0.0, %v385
    %v387 = vpop.f32.mrb[0].mxu0
    %v388 = vadd.f32 0.0, %v387
    %389 = vmatprep.mubr.f32.mxu0 0.0
    %v390 = vand.u32 %v111, 4294901760
    %v391 = vsub.f32 %v111, %v390
    %v392 = vand.u32 %v391, 4294901760
    %v393 = vsub.f32 %v391, %v392
    %v394 = vand.u32 %v393, 4294901760
    %395 = vmatmul.mubr.f32.gmra.mrb[0].mxu0 %v394
    %v396 = vpop.f32.mrb[0].mxu0
    %v397 = vadd.f32 0.0, %v396
    %v398 = vpop.f32.mrb[0].mxu0
    %v399 = vadd.f32 0.0, %v398
    %400 = vmatprep.mubr.f32.mxu0 0.0
    %v401 = vand.u32 %v114, 4294901760
    %v402 = vsub.f32 %v114, %v401
    %v403 = vand.u32 %v402, 4294901760
    %v404 = vsub.f32 %v402, %v403
    %v405 = vand.u32 %v404, 4294901760
    %406 = vmatmul.mubr.f32.gmra.mrb[0].mxu0 %v405
    %v407 = vpop.f32.mrb[0].mxu0
    %v408 = vadd.f32 0.0, %v407
    %v409 = vpop.f32.mrb[0].mxu0
    %v410 = vadd.f32 0.0, %v409
    %411 = vmatprep.mubr.f32.mxu0 0.0
    %v412 = vand.u32 %v117, 4294901760
    %v413 = vsub.f32 %v117, %v412
    %v414 = vand.u32 %v413, 4294901760
    %v415 = vsub.f32 %v413, %v414
    %v416 = vand.u32 %v415, 4294901760
    %417 = vmatmul.mubr.f32.gmra.mrb[0].mxu0 %v416
    %v418 = vpop.f32.mrb[0].mxu0
    %v419 = vadd.f32 0.0, %v418
    %v420 = vpop.f32.mrb[0].mxu0
    %v421 = vadd.f32 0.0, %v420
    %422 = vmatprep.mubr.f32.mxu0 0.0
    %v423 = vand.u32 %v120, 4294901760
    %v424 = vsub.f32 %v120, %v423
    %v425 = vand.u32 %v424, 4294901760
    %v426 = vsub.f32 %v424, %v425
    %v427 = vand.u32 %v426, 4294901760
    %428 = vmatmul.mubr.f32.gmra.mrb[0].mxu0 %v427
    %v429 = vpop.f32.mrb[0].mxu0
    %v430 = vadd.f32 0.0, %v429
    %v431 = vpop.f32.mrb[0].mxu0
    %v432 = vadd.f32 0.0, %v431
    %433 = vmatprep.mubr.f32.mxu0 0.0
    %v434 = vand.u32 %v123, 4294901760
    %v435 = vsub.f32 %v123, %v434
    %v436 = vand.u32 %v435, 4294901760
    %v437 = vsub.f32 %v435, %v436
    %v438 = vand.u32 %v437, 4294901760
    %439 = vmatmul.mubr.f32.gmra.mrb[0].mxu0 %v438
    %v440 = vpop.f32.mrb[0].mxu0
    %v441 = vadd.f32 0.0, %v440
    %v442 = vpop.f32.mrb[0].mxu0
    %v443 = vadd.f32 0.0, %v442
    %444 = vmatprep.mubr.f32.mxu0 0.0
    %v445 = vand.u32 %v126, 4294901760
    %v446 = vsub.f32 %v126, %v445
    %v447 = vand.u32 %v446, 4294901760
    %v448 = vsub.f32 %v446, %v447
    %v449 = vand.u32 %v448, 4294901760
    %450 = vmatmul.mubr.f32.gmra.mrb[0].mxu0 %v449
    %v451 = vpop.f32.mrb[0].mxu0
    %v452 = vadd.f32 0.0, %v451
    %v453 = vpop.f32.mrb[0].mxu0
    %v454 = vadd.f32 0.0, %v453
    %455 = vmatprep.mubr.f32.mxu0 0.0
    %v456 = vand.u32 %v129, 4294901760
    %v457 = vsub.f32 %v129, %v456
    %v458 = vand.u32 %v457, 4294901760
    %v459 = vsub.f32 %v457, %v458
    %v460 = vand.u32 %v459, 4294901760
    %461 = vmatmul.mubr.f32.gmra.mrb[0].mxu0 %v460
    %v462 = vpop.f32.mrb[0].mxu0
    %v463 = vadd.f32 0.0, %v462
    %v464 = vpop.f32.mrb[0].mxu0
    %v465 = vadd.f32 0.0, %v464
    %466 = vmatprep.mubr.f32.mxu0 0.0
    %v467 = vand.u32 %v132, 4294901760
    %v468 = vsub.f32 %v132, %v467
    %v469 = vand.u32 %v468, 4294901760
    %v470 = vsub.f32 %v468, %v469
    %v471 = vand.u32 %v470, 4294901760
    %472 = vmatmul.mubr.f32.gmra.mrb[0].mxu0 %v471
    %v473 = vpop.f32.mrb[0].mxu0
    %v474 = vadd.f32 0.0, %v473
    %v475 = vpop.f32.mrb[0].mxu0
    %v476 = vadd.f32 0.0, %v475
    %477 = vmatprep.mubr.f32.mxu0 0.0
    %v478 = vand.u32 %v135, 4294901760
    %v479 = vsub.f32 %v135, %v478
    %v480 = vand.u32 %v479, 4294901760
    %v481 = vsub.f32 %v479, %v480
    %v482 = vand.u32 %v481, 4294901760
    %483 = vmatmul.mubr.f32.gmra.mrb[0].mxu0 %v482
    %v484 = vpop.f32.mrb[0].mxu0
    %v485 = vadd.f32 0.0, %v484
    %v486 = vpop.f32.mrb[0].mxu0
    %v487 = vadd.f32 0.0, %v486
    %488 = vmatprep.mubr.f32.mxu0 0.0
    %v489 = vand.u32 %v138, 4294901760
    %v490 = vsub.f32 %v138, %v489
    %v491 = vand.u32 %v490, 4294901760
    %v492 = vsub.f32 %v490, %v491
    %v493 = vand.u32 %v492, 4294901760
    %494 = vmatmul.mubr.f32.gmra.mrb[0].mxu0 %v493
    %v495 = vpop.f32.mrb[0].mxu0
    %v496 = vadd.f32 0.0, %v495
    %v497 = vpop.f32.mrb[0].mxu0
    %v498 = vadd.f32 0.0, %v497
    %499 = vmatprep.mubr.f32.mxu0 0.0
    %v500 = vand.u32 %v141, 4294901760
    %v501 = vsub.f32 %v141, %v500
    %v502 = vand.u32 %v501, 4294901760
    %v503 = vsub.f32 %v501, %v502
    %v504 = vand.u32 %v503, 4294901760
    %505 = vmatmul.mubr.f32.gmra.mrb[0].mxu0 %v504
    %v506 = vpop.f32.mrb[0].mxu0
    %v507 = vadd.f32 0.0, %v506
    %v508 = vpop.f32.mrb[0].mxu0
    %v509 = vadd.f32 0.0, %v508
    %510 = vmatprep.mubr.f32.mxu0 0.0
    %v511 = vand.u32 %v144, 4294901760
    %v512 = vsub.f32 %v144, %v511
    %v513 = vand.u32 %v512, 4294901760
    %v514 = vsub.f32 %v512, %v513
    %v515 = vand.u32 %v514, 4294901760
    %516 = vmatmul.mubr.f32.gmra.mrb[0].mxu0 %v515
    %v517 = vpop.f32.mrb[0].mxu0
    %v518 = vadd.f32 0.0, %v517
    %v519 = vpop.f32.mrb[0].mxu0
    %v520 = vadd.f32 0.0, %v519
    %521 = vmatprep.mubr.f32.mxu0 0.0
    %v522 = vand.u32 %v147, 4294901760
    %v523 = vsub.f32 %v147, %v522
    %v524 = vand.u32 %v523, 4294901760
    %v525 = vsub.f32 %v523, %v524
    %v526 = vand.u32 %v525, 4294901760
    %527 = vmatmul.mubr.f32.gmra.mrb[0].mxu0 %v526
    %v528 = vpop.f32.mrb[0].mxu0
    %v529 = vadd.f32 0.0, %v528
    %v530 = vpop.f32.mrb[0].mxu0
    %v531 = vadd.f32 0.0, %v530
    %532 = vmatprep.mubr.f32.mxu0 0.0
    %v533 = vand.u32 %v150, 4294901760
    %v534 = vsub.f32 %v150, %v533
    %v535 = vand.u32 %v534, 4294901760
    %v536 = vsub.f32 %v534, %v535
    %v537 = vand.u32 %v536, 4294901760
    %538 = vmatmul.mubr.f32.gmra.mrb[0].mxu0 %v537
    %v539 = vpop.f32.mrb[0].mxu0
    %v540 = vadd.f32 0.0, %v539
    %v541 = vpop.f32.mrb[0].mxu0
    %v542 = vadd.f32 0.0, %v541
    %543 = vmatprep.mubr.f32.mxu0 0.0
    %v544 = vand.u32 %v153, 4294901760
    %v545 = vsub.f32 %v153, %v544
    %v546 = vand.u32 %v545, 4294901760
    %v547 = vsub.f32 %v545, %v546
    %v548 = vand.u32 %v547, 4294901760
    %549 = vmatmul.mubr.f32.gmra.mrb[0].mxu0 %v548
    %v550 = vpop.f32.mrb[0].mxu0
    %v551 = vadd.f32 0.0, %v550
    %v552 = vpop.f32.mrb[0].mxu0
    %v553 = vadd.f32 0.0, %v552
    %554 = vmatprep.mubr.f32.mxu0 0.0
    %v555 = vand.u32 %v156, 4294901760
    %v556 = vsub.f32 %v156, %v555
    %v557 = vand.u32 %v556, 4294901760
    %v558 = vsub.f32 %v556, %v557
    %v559 = vand.u32 %v558, 4294901760
    %560 = vmatmul.mubr.f32.gmra.mrb[0].mxu0 %v559
    %v561 = vpop.f32.mrb[0].mxu0
    %v562 = vadd.f32 0.0, %v561
    %v563 = vpop.f32.mrb[0].mxu0
    %v564 = vadd.f32 0.0, %v563
    %565 = vmatprep.mubr.f32.mxu0 0.0
    %v566 = vand.u32 %v159, 4294901760
    %v567 = vsub.f32 %v159, %v566
    %v568 = vand.u32 %v567, 4294901760
    %v569 = vsub.f32 %v567, %v568
    %v570 = vand.u32 %v569, 4294901760
    %571 = vmatmul.mubr.f32.gmra.mrb[0].mxu0 %v570
    %v572 = vpop.f32.mrb[0].mxu0
    %v573 = vadd.f32 0.0, %v572
    %v574 = vpop.f32.mrb[0].mxu0
    %v575 = vadd.f32 0.0, %v574
    %576 = vmatprep.mubr.f32.mxu0 0.0
    %v577 = vand.u32 %v162, 4294901760
    %v578 = vsub.f32 %v162, %v577
    %v579 = vand.u32 %v578, 4294901760
    %v580 = vsub.f32 %v578, %v579
    %v581 = vand.u32 %v580, 4294901760
    %582 = vmatmul.mubr.f32.gmra.mrb[0].mxu0 %v581
    %v583 = vpop.f32.mrb[0].mxu0
    %v584 = vadd.f32 0.0, %v583
    %v585 = vpop.f32.mrb[0].mxu0
    %v586 = vadd.f32 0.0, %v585
    %587 = vdwg.mxu0
    %v588 = vand.u32 %v167, 4294901760
    %v589 = vsub.f32 %v167, %v588
    %v590 = vand.u32 %v589, 4294901760
    %v591 = vsub.f32 %v589, %v590
    %v592 = vand.u32 %v591, 4294901760
    %593 = vmatprep.subr.mxu0 %v592
    %v594 = vand.u32 %v165, 4294901760
    %v595 = vsub.f32 %v165, %v594
    %v596 = vand.u32 %v595, 4294901760
    %v597 = vsub.f32 %v595, %v596
    %v598 = vand.u32 %v597, 4294901760
    %599 = vmatpush1.msra.mxu0 %v598
    %600 = vmatprep.subr.mxu0 0.0
    %601 = vmatpush1.msra.mxu0 0.0
    %602 = vmatprep.subr.mxu0 0.0
    %603 = vmatpush1.msra.mxu0 0.0
    %604 = vmatprep.subr.mxu0 0.0
    %605 = vmatpush1.msra.mxu0 0.0
    %606 = vmatprep.subr.mxu0 0.0
    %607 = vmatpush1.msra.mxu0 0.0
    %608 = vmatprep.subr.mxu0 0.0
    %609 = vmatpush1.msra.mxu0 0.0
    %610 = vmatprep.subr.mxu0 0.0
    %611 = vmatpush1.msra.mxu0 0.0
    %612 = vmatprep.subr.mxu0 0.0
    %613 = vmatpush1.msra.mxu0 0.0
    %614 = vmatprep.subr.mxu0 0.0
    %615 = vmatpush1.msra.mxu0 0.0
    %616 = vmatprep.subr.mxu0 0.0
    %617 = vmatpush1.msra.mxu0 0.0
    %618 = vmatprep.subr.mxu0 0.0
    %619 = vmatpush1.msra.mxu0 0.0
    %620 = vmatprep.subr.mxu0 0.0
    %621 = vmatpush1.msra.mxu0 0.0
    %622 = vmatprep.subr.mxu0 0.0
    %623 = vmatpush1.msra.mxu0 0.0
    %624 = vmatprep.subr.mxu0 0.0
    %625 = vmatpush1.msra.mxu0 0.0
    %626 = vmatprep.subr.mxu0 0.0
    %627 = vmatpush1.msra.mxu0 0.0
    %628 = vmatprep.subr.mxu0 0.0
    %629 = vmatpush1.msra.mxu0 0.0
    %630 = vmatprep.subr.mxu0 0.0
    %631 = vmatpush1.msra.mxu0 0.0
    %632 = vmatprep.subr.mxu0 0.0
    %633 = vmatpush1.msra.mxu0 0.0
    %634 = vmatprep.subr.mxu0 0.0
    %635 = vmatpush1.msra.mxu0 0.0
    %636 = vmatprep.subr.mxu0 0.0
    %637 = vmatpush1.msra.mxu0 0.0
    %638 = vmatprep.subr.mxu0 0.0
    %639 = vmatpush1.msra.mxu0 0.0
    %640 = vmatprep.subr.mxu0 0.0
    %641 = vmatpush1.msra.mxu0 0.0
    %642 = vmatprep.subr.mxu0 0.0
    %643 = vmatpush1.msra.mxu0 0.0
    %644 = vmatprep.subr.mxu0 0.0
    %645 = vmatpush1.msra.mxu0 0.0
    %646 = vmatprep.subr.mxu0 0.0
    %647 = vmatpush1.msra.mxu0 0.0
    %648 = vmatprep.subr.mxu0 0.0
    %649 = vmatpush1.msra.mxu0 0.0
    %650 = vmatprep.subr.mxu0 0.0
    %651 = vmatpush1.msra.mxu0 0.0
    %652 = vmatprep.subr.mxu0 0.0
    %653 = vmatpush1.msra.mxu0 0.0
    %654 = vmatprep.subr.mxu0 0.0
    %655 = vmatpush1.msra.mxu0 0.0
    %656 = vmatprep.subr.mxu0 0.0
    %657 = vmatpush1.msra.mxu0 0.0
    %658 = vmatprep.subr.mxu0 0.0
    %659 = vmatpush1.msra.mxu0 0.0
    %660 = vmatprep.subr.mxu0 0.0
    %661 = vmatpush1.msra.mxu0 0.0
    %662 = vmatprep.mubr.f32.mxu0 0.0
    %v663 = vand.u32 %v69, 4294901760
    %664 = vmatmul.mubr.f32.gmra.mrb[0].mxu0 %v663
    %v665 = vpop.f32.mrb[0].mxu0
    %v666 = vadd.f32 %v243, %v665
    %v667 = vpop.f32.mrb[0].mxu0
    %v668 = vadd.f32 %v245, %v667
    %669 = vmatprep.mubr.f32.mxu0 0.0
    %v670 = vand.u32 %v72, 4294901760
    %671 = vmatmul.mubr.f32.gmra.mrb[0].mxu0 %v670
    %v672 = vpop.f32.mrb[0].mxu0
    %v673 = vadd.f32 %v254, %v672
    %v674 = vpop.f32.mrb[0].mxu0
    %v675 = vadd.f32 %v256, %v674
    %676 = vmatprep.mubr.f32.mxu0 0.0
    %v677 = vand.u32 %v75, 4294901760
    %678 = vmatmul.mubr.f32.gmra.mrb[0].mxu0 %v677
    %v679 = vpop.f32.mrb[0].mxu0
    %v680 = vadd.f32 %v265, %v679
    %v681 = vpop.f32.mrb[0].mxu0
    %v682 = vadd.f32 %v267, %v681
    %683 = vmatprep.mubr.f32.mxu0 0.0
    %v684 = vand.u32 %v78, 4294901760
    %685 = vmatmul.mubr.f32.gmra.mrb[0].mxu0 %v684
    %v686 = vpop.f32.mrb[0].mxu0
    %v687 = vadd.f32 %v276, %v686
    %v688 = vpop.f32.mrb[0].mxu0
    %v689 = vadd.f32 %v278, %v688
    %690 = vmatprep.mubr.f32.mxu0 0.0
    %v691 = vand.u32 %v81, 4294901760
    %692 = vmatmul.mubr.f32.gmra.mrb[0].mxu0 %v691
    %v693 = vpop.f32.mrb[0].mxu0
    %v694 = vadd.f32 %v287, %v693
    %v695 = vpop.f32.mrb[0].mxu0
    %v696 = vadd.f32 %v289, %v695
    %697 = vmatprep.mubr.f32.mxu0 0.0
    %v698 = vand.u32 %v84, 4294901760
    %699 = vmatmul.mubr.f32.gmra.mrb[0].mxu0 %v698
    %v700 = vpop.f32.mrb[0].mxu0
    %v701 = vadd.f32 %v298, %v700
    %v702 = vpop.f32.mrb[0].mxu0
    %v703 = vadd.f32 %v300, %v702
    %704 = vmatprep.mubr.f32.mxu0 0.0
    %v705 = vand.u32 %v87, 4294901760
    %706 = vmatmul.mubr.f32.gmra.mrb[0].mxu0 %v705
    %v707 = vpop.f32.mrb[0].mxu0
    %v708 = vadd.f32 %v309, %v707
    %v709 = vpop.f32.mrb[0].mxu0
    %v710 = vadd.f32 %v311, %v709
    %711 = vmatprep.mubr.f32.mxu0 0.0
    %v712 = vand.u32 %v90, 4294901760
    %713 = vmatmul.mubr.f32.gmra.mrb[0].mxu0 %v712
    %v714 = vpop.f32.mrb[0].mxu0
    %v715 = vadd.f32 %v320, %v714
    %v716 = vpop.f32.mrb[0].mxu0
    %v717 = vadd.f32 %v322, %v716
    %718 = vmatprep.mubr.f32.mxu0 0.0
    %v719 = vand.u32 %v93, 4294901760
    %720 = vmatmul.mubr.f32.gmra.mrb[0].mxu0 %v719
    %v721 = vpop.f32.mrb[0].mxu0
    %v722 = vadd.f32 %v331, %v721
    %v723 = vpop.f32.mrb[0].mxu0
    %v724 = vadd.f32 %v333, %v723
    %725 = vmatprep.mubr.f32.mxu0 0.0
    %v726 = vand.u32 %v96, 4294901760
    %727 = vmatmul.mubr.f32.gmra.mrb[0].mxu0 %v726
    %v728 = vpop.f32.mrb[0].mxu0
    %v729 = vadd.f32 %v342, %v728
    %v730 = vpop.f32.mrb[0].mxu0
    %v731 = vadd.f32 %v344, %v730
    %732 = vmatprep.mubr.f32.mxu0 0.0
    %v733 = vand.u32 %v99, 4294901760
    %734 = vmatmul.mubr.f32.gmra.mrb[0].mxu0 %v733
    %v735 = vpop.f32.mrb[0].mxu0
    %v736 = vadd.f32 %v353, %v735
    %v737 = vpop.f32.mrb[0].mxu0
    %v738 = vadd.f32 %v355, %v737
    %739 = vmatprep.mubr.f32.mxu0 0.0
    %v740 = vand.u32 %v102, 4294901760
    %741 = vmatmul.mubr.f32.gmra.mrb[0].mxu0 %v740
    %v742 = vpop.f32.mrb[0].mxu0
    %v743 = vadd.f32 %v364, %v742
    %v744 = vpop.f32.mrb[0].mxu0
    %v745 = vadd.f32 %v366, %v744
    %746 = vmatprep.mubr.f32.mxu0 0.0
    %v747 = vand.u32 %v105, 4294901760
    %748 = vmatmul.mubr.f32.gmra.mrb[0].mxu0 %v747
    %v749 = vpop.f32.mrb[0].mxu0
    %v750 = vadd.f32 %v375, %v749
    %v751 = vpop.f32.mrb[0].mxu0
    %v752 = vadd.f32 %v377, %v751
    %753 = vmatprep.mubr.f32.mxu0 0.0
    %v754 = vand.u32 %v108, 4294901760
    %755 = vmatmul.mubr.f32.gmra.mrb[0].mxu0 %v754
    %v756 = vpop.f32.mrb[0].mxu0
    %v757 = vadd.f32 %v386, %v756
    %v758 = vpop.f32.mrb[0].mxu0
    %v759 = vadd.f32 %v388, %v758
    %760 = vmatprep.mubr.f32.mxu0 0.0
    %v761 = vand.u32 %v111, 4294901760
    %762 = vmatmul.mubr.f32.gmra.mrb[0].mxu0 %v761
    %v763 = vpop.f32.mrb[0].mxu0
    %v764 = vadd.f32 %v397, %v763
    %v765 = vpop.f32.mrb[0].mxu0
    %v766 = vadd.f32 %v399, %v765
    %767 = vmatprep.mubr.f32.mxu0 0.0
    %v768 = vand.u32 %v114, 4294901760
    %769 = vmatmul.mubr.f32.gmra.mrb[0].mxu0 %v768
    %v770 = vpop.f32.mrb[0].mxu0
    %v771 = vadd.f32 %v408, %v770
    %v772 = vpop.f32.mrb[0].mxu0
    %v773 = vadd.f32 %v410, %v772
    %774 = vmatprep.mubr.f32.mxu0 0.0
    %v775 = vand.u32 %v117, 4294901760
    %776 = vmatmul.mubr.f32.gmra.mrb[0].mxu0 %v775
    %v777 = vpop.f32.mrb[0].mxu0
    %v778 = vadd.f32 %v419, %v777
    %v779 = vpop.f32.mrb[0].mxu0
    %v780 = vadd.f32 %v421, %v779
    %781 = vmatprep.mubr.f32.mxu0 0.0
    %v782 = vand.u32 %v120, 4294901760
    %783 = vmatmul.mubr.f32.gmra.mrb[0].mxu0 %v782
    %v784 = vpop.f32.mrb[0].mxu0
    %v785 = vadd.f32 %v430, %v784
    %v786 = vpop.f32.mrb[0].mxu0
    %v787 = vadd.f32 %v432, %v786
    %788 = vmatprep.mubr.f32.mxu0 0.0
    %v789 = vand.u32 %v123, 4294901760
    %790 = vmatmul.mubr.f32.gmra.mrb[0].mxu0 %v789
    %v791 = vpop.f32.mrb[0].mxu0
    %v792 = vadd.f32 %v441, %v791
    %v793 = vpop.f32.mrb[0].mxu0
    %v794 = vadd.f32 %v443, %v793
    %795 = vmatprep.mubr.f32.mxu0 0.0
    %v796 = vand.u32 %v126, 4294901760
    %797 = vmatmul.mubr.f32.gmra.mrb[0].mxu0 %v796
    %v798 = vpop.f32.mrb[0].mxu0
    %v799 = vadd.f32 %v452, %v798
    %v800 = vpop.f32.mrb[0].mxu0
    %v801 = vadd.f32 %v454, %v800
    %802 = vmatprep.mubr.f32.mxu0 0.0
    %v803 = vand.u32 %v129, 4294901760
    %804 = vmatmul.mubr.f32.gmra.mrb[0].mxu0 %v803
    %v805 = vpop.f32.mrb[0].mxu0
    %v806 = vadd.f32 %v463, %v805
    %v807 = vpop.f32.mrb[0].mxu0
    %v808 = vadd.f32 %v465, %v807
    %809 = vmatprep.mubr.f32.mxu0 0.0
    %v810 = vand.u32 %v132, 4294901760
    %811 = vmatmul.mubr.f32.gmra.mrb[0].mxu0 %v810
    %v812 = vpop.f32.mrb[0].mxu0
    %v813 = vadd.f32 %v474, %v812
    %v814 = vpop.f32.mrb[0].mxu0
    %v815 = vadd.f32 %v476, %v814
    %816 = vmatprep.mubr.f32.mxu0 0.0
    %v817 = vand.u32 %v135, 4294901760
    %818 = vmatmul.mubr.f32.gmra.mrb[0].mxu0 %v817
    %v819 = vpop.f32.mrb[0].mxu0
    %v820 = vadd.f32 %v485, %v819
    %v821 = vpop.f32.mrb[0].mxu0
    %v822 = vadd.f32 %v487, %v821
    %823 = vmatprep.mubr.f32.mxu0 0.0
    %v824 = vand.u32 %v138, 4294901760
    %825 = vmatmul.mubr.f32.gmra.mrb[0].mxu0 %v824
    %v826 = vpop.f32.mrb[0].mxu0
    %v827 = vadd.f32 %v496, %v826
    %v828 = vpop.f32.mrb[0].mxu0
    %v829 = vadd.f32 %v498, %v828
    %830 = vmatprep.mubr.f32.mxu0 0.0
    %v831 = vand.u32 %v141, 4294901760
    %832 = vmatmul.mubr.f32.gmra.mrb[0].mxu0 %v831
    %v833 = vpop.f32.mrb[0].mxu0
    %v834 = vadd.f32 %v507, %v833
    %v835 = vpop.f32.mrb[0].mxu0
    %v836 = vadd.f32 %v509, %v835
    %837 = vmatprep.mubr.f32.mxu0 0.0
    %v838 = vand.u32 %v144, 4294901760
    %839 = vmatmul.mubr.f32.gmra.mrb[0].mxu0 %v838
    %v840 = vpop.f32.mrb[0].mxu0
    %v841 = vadd.f32 %v518, %v840
    %v842 = vpop.f32.mrb[0].mxu0
    %v843 = vadd.f32 %v520, %v842
    %844 = vmatprep.mubr.f32.mxu0 0.0
    %v845 = vand.u32 %v147, 4294901760
    %846 = vmatmul.mubr.f32.gmra.mrb[0].mxu0 %v845
    %v847 = vpop.f32.mrb[0].mxu0
    %v848 = vadd.f32 %v529, %v847
    %v849 = vpop.f32.mrb[0].mxu0
    %v850 = vadd.f32 %v531, %v849
    %851 = vmatprep.mubr.f32.mxu0 0.0
    %v852 = vand.u32 %v150, 4294901760
    %853 = vmatmul.mubr.f32.gmra.mrb[0].mxu0 %v852
    %v854 = vpop.f32.mrb[0].mxu0
    %v855 = vadd.f32 %v540, %v854
    %v856 = vpop.f32.mrb[0].mxu0
    %v857 = vadd.f32 %v542, %v856
    %858 = vmatprep.mubr.f32.mxu0 0.0
    %v859 = vand.u32 %v153, 4294901760
    %860 = vmatmul.mubr.f32.gmra.mrb[0].mxu0 %v859
    %v861 = vpop.f32.mrb[0].mxu0
    %v862 = vadd.f32 %v551, %v861
    %v863 = vpop.f32.mrb[0].mxu0
    %v864 = vadd.f32 %v553, %v863
    %865 = vmatprep.mubr.f32.mxu0 0.0
    %v866 = vand.u32 %v156, 4294901760
    %867 = vmatmul.mubr.f32.gmra.mrb[0].mxu0 %v866
    %v868 = vpop.f32.mrb[0].mxu0
    %v869 = vadd.f32 %v562, %v868
    %v870 = vpop.f32.mrb[0].mxu0
    %v871 = vadd.f32 %v564, %v870
    %872 = vmatprep.mubr.f32.mxu0 0.0
    %v873 = vand.u32 %v159, 4294901760
    %874 = vmatmul.mubr.f32.gmra.mrb[0].mxu0 %v873
    %v875 = vpop.f32.mrb[0].mxu0
    %v876 = vadd.f32 %v573, %v875
    %v877 = vpop.f32.mrb[0].mxu0
    %v878 = vadd.f32 %v575, %v877
    %879 = vmatprep.mubr.f32.mxu0 0.0
    %v880 = vand.u32 %v162, 4294901760
    %881 = vmatmul.mubr.f32.gmra.mrb[0].mxu0 %v880
    %v882 = vpop.f32.mrb[0].mxu0
    %v883 = vadd.f32 %v584, %v882
    %v884 = vpop.f32.mrb[0].mxu0
    %v885 = vadd.f32 %v586, %v884
    %886 = vdwg.mxu0
    %v887 = vand.u32 %v167, 4294901760
    %v888 = vsub.f32 %v167, %v887
    %889 = vmatprep.subr.mxu0 %v888
    %v890 = vand.u32 %v165, 4294901760
    %v891 = vsub.f32 %v165, %v890
    %892 = vmatpush1.msra.mxu0 %v891
    %893 = vmatprep.subr.mxu0 0.0
    %894 = vmatpush1.msra.mxu0 0.0
    %895 = vmatprep.subr.mxu0 0.0
    %896 = vmatpush1.msra.mxu0 0.0
    %897 = vmatprep.subr.mxu0 0.0
    %898 = vmatpush1.msra.mxu0 0.0
    %899 = vmatprep.subr.mxu0 0.0
    %900 = vmatpush1.msra.mxu0 0.0
    %901 = vmatprep.subr.mxu0 0.0
    %902 = vmatpush1.msra.mxu0 0.0
    %903 = vmatprep.subr.mxu0 0.0
    %904 = vmatpush1.msra.mxu0 0.0
    %905 = vmatprep.subr.mxu0 0.0
    %906 = vmatpush1.msra.mxu0 0.0
    %907 = vmatprep.subr.mxu0 0.0
    %908 = vmatpush1.msra.mxu0 0.0
    %909 = vmatprep.subr.mxu0 0.0
    %910 = vmatpush1.msra.mxu0 0.0
    %911 = vmatprep.subr.mxu0 0.0
    %912 = vmatpush1.msra.mxu0 0.0
    %913 = vmatprep.subr.mxu0 0.0
    %914 = vmatpush1.msra.mxu0 0.0
    %915 = vmatprep.subr.mxu0 0.0
    %916 = vmatpush1.msra.mxu0 0.0
    %917 = vmatprep.subr.mxu0 0.0
    %918 = vmatpush1.msra.mxu0 0.0
    %919 = vmatprep.subr.mxu0 0.0
    %920 = vmatpush1.msra.mxu0 0.0
    %921 = vmatprep.subr.mxu0 0.0
    %922 = vmatpush1.msra.mxu0 0.0
    %923 = vmatprep.subr.mxu0 0.0
    %924 = vmatpush1.msra.mxu0 0.0
    %925 = vmatprep.subr.mxu0 0.0
    %926 = vmatpush1.msra.mxu0 0.0
    %927 = vmatprep.subr.mxu0 0.0
    %928 = vmatpush1.msra.mxu0 0.0
    %929 = vmatprep.subr.mxu0 0.0
    %930 = vmatpush1.msra.mxu0 0.0
    %931 = vmatprep.subr.mxu0 0.0
    %932 = vmatpush1.msra.mxu0 0.0
    %933 = vmatprep.subr.mxu0 0.0
    %934 = vmatpush1.msra.mxu0 0.0
    %935 = vmatprep.subr.mxu0 0.0
    %936 = vmatpush1.msra.mxu0 0.0
    %937 = vmatprep.subr.mxu0 0.0
    %938 = vmatpush1.msra.mxu0 0.0
    %939 = vmatprep.subr.mxu0 0.0
    %940 = vmatpush1.msra.mxu0 0.0
    %941 = vmatprep.subr.mxu0 0.0
    %942 = vmatpush1.msra.mxu0 0.0
    %943 = vmatprep.subr.mxu0 0.0
    %944 = vmatpush1.msra.mxu0 0.0
    %945 = vmatprep.subr.mxu0 0.0
    %946 = vmatpush1.msra.mxu0 0.0
    %947 = vmatprep.subr.mxu0 0.0
    %948 = vmatpush1.msra.mxu0 0.0
    %949 = vmatprep.subr.mxu0 0.0
    %950 = vmatpush1.msra.mxu0 0.0
    %951 = vmatprep.subr.mxu0 0.0
    %952 = vmatpush1.msra.mxu0 0.0
    %953 = vmatprep.subr.mxu0 0.0
    %954 = vmatpush1.msra.mxu0 0.0
    %955 = vmatprep.mubr.f32.mxu0 0.0
    %v956 = vand.u32 %v69, 4294901760
    %v957 = vsub.f32 %v69, %v956
    %958 = vmatmul.mubr.f32.gmra.mrb[0].mxu0 %v957
    %v959 = vpop.f32.mrb[0].mxu0
    %v960 = vadd.f32 %v666, %v959
    %v961 = vpop.f32.mrb[0].mxu0
    %v962 = vadd.f32 %v668, %v961
    %963 = vmatprep.mubr.f32.mxu0 0.0
    %v964 = vand.u32 %v72, 4294901760
    %v965 = vsub.f32 %v72, %v964
    %966 = vmatmul.mubr.f32.gmra.mrb[0].mxu0 %v965
    %v967 = vpop.f32.mrb[0].mxu0
    %v968 = vadd.f32 %v673, %v967
    %v969 = vpop.f32.mrb[0].mxu0
    %v970 = vadd.f32 %v675, %v969
    %971 = vmatprep.mubr.f32.mxu0 0.0
    %v972 = vand.u32 %v75, 4294901760
    %v973 = vsub.f32 %v75, %v972
    %974 = vmatmul.mubr.f32.gmra.mrb[0].mxu0 %v973
    %v975 = vpop.f32.mrb[0].mxu0
    %v976 = vadd.f32 %v680, %v975
    %v977 = vpop.f32.mrb[0].mxu0
    %v978 = vadd.f32 %v682, %v977
    %979 = vmatprep.mubr.f32.mxu0 0.0
    %v980 = vand.u32 %v78, 4294901760
    %v981 = vsub.f32 %v78, %v980
    %982 = vmatmul.mubr.f32.gmra.mrb[0].mxu0 %v981
    %v983 = vpop.f32.mrb[0].mxu0
    %v984 = vadd.f32 %v687, %v983
    %v985 = vpop.f32.mrb[0].mxu0
    %v986 = vadd.f32 %v689, %v985
    %987 = vmatprep.mubr.f32.mxu0 0.0
    %v988 = vand.u32 %v81, 4294901760
    %v989 = vsub.f32 %v81, %v988
    %990 = vmatmul.mubr.f32.gmra.mrb[0].mxu0 %v989
    %v991 = vpop.f32.mrb[0].mxu0
    %v992 = vadd.f32 %v694, %v991
    %v993 = vpop.f32.mrb[0].mxu0
    %v994 = vadd.f32 %v696, %v993
    %995 = vmatprep.mubr.f32.mxu0 0.0
    %v996 = vand.u32 %v84, 4294901760
    %v997 = vsub.f32 %v84, %v996
    %998 = vmatmul.mubr.f32.gmra.mrb[0].mxu0 %v997
    %v999 = vpop.f32.mrb[0].mxu0
    %v1000 = vadd.f32 %v701, %v999
    %v1001 = vpop.f32.mrb[0].mxu0
    %v1002 = vadd.f32 %v703, %v1001
    %1003 = vmatprep.mubr.f32.mxu0 0.0
    %v1004 = vand.u32 %v87, 4294901760
    %v1005 = vsub.f32 %v87, %v1004
    %1006 = vmatmul.mubr.f32.gmra.mrb[0].mxu0 %v1005
    %v1007 = vpop.f32.mrb[0].mxu0
    %v1008 = vadd.f32 %v708, %v1007
    %v1009 = vpop.f32.mrb[0].mxu0
    %v1010 = vadd.f32 %v710, %v1009
    %1011 = vmatprep.mubr.f32.mxu0 0.0
    %v1012 = vand.u32 %v90, 4294901760
    %v1013 = vsub.f32 %v90, %v1012
    %1014 = vmatmul.mubr.f32.gmra.mrb[0].mxu0 %v1013
    %v1015 = vpop.f32.mrb[0].mxu0
    %v1016 = vadd.f32 %v715, %v1015
    %v1017 = vpop.f32.mrb[0].mxu0
    %v1018 = vadd.f32 %v717, %v1017
    %1019 = vmatprep.mubr.f32.mxu0 0.0
    %v1020 = vand.u32 %v93, 4294901760
    %v1021 = vsub.f32 %v93, %v1020
    %1022 = vmatmul.mubr.f32.gmra.mrb[0].mxu0 %v1021
    %v1023 = vpop.f32.mrb[0].mxu0
    %v1024 = vadd.f32 %v722, %v1023
    %v1025 = vpop.f32.mrb[0].mxu0
    %v1026 = vadd.f32 %v724, %v1025
    %1027 = vmatprep.mubr.f32.mxu0 0.0
    %v1028 = vand.u32 %v96, 4294901760
    %v1029 = vsub.f32 %v96, %v1028
    %1030 = vmatmul.mubr.f32.gmra.mrb[0].mxu0 %v1029
    %v1031 = vpop.f32.mrb[0].mxu0
    %v1032 = vadd.f32 %v729, %v1031
    %v1033 = vpop.f32.mrb[0].mxu0
    %v1034 = vadd.f32 %v731, %v1033
    %1035 = vmatprep.mubr.f32.mxu0 0.0
    %v1036 = vand.u32 %v99, 4294901760
    %v1037 = vsub.f32 %v99, %v1036
    %1038 = vmatmul.mubr.f32.gmra.mrb[0].mxu0 %v1037
    %v1039 = vpop.f32.mrb[0].mxu0
    %v1040 = vadd.f32 %v736, %v1039
    %v1041 = vpop.f32.mrb[0].mxu0
    %v1042 = vadd.f32 %v738, %v1041
    %1043 = vmatprep.mubr.f32.mxu0 0.0
    %v1044 = vand.u32 %v102, 4294901760
    %v1045 = vsub.f32 %v102, %v1044
    %1046 = vmatmul.mubr.f32.gmra.mrb[0].mxu0 %v1045
    %v1047 = vpop.f32.mrb[0].mxu0
    %v1048 = vadd.f32 %v743, %v1047
    %v1049 = vpop.f32.mrb[0].mxu0
    %v1050 = vadd.f32 %v745, %v1049
    %1051 = vmatprep.mubr.f32.mxu0 0.0
    %v1052 = vand.u32 %v105, 4294901760
    %v1053 = vsub.f32 %v105, %v1052
    %1054 = vmatmul.mubr.f32.gmra.mrb[0].mxu0 %v1053
    %v1055 = vpop.f32.mrb[0].mxu0
    %v1056 = vadd.f32 %v750, %v1055
    %v1057 = vpop.f32.mrb[0].mxu0
    %v1058 = vadd.f32 %v752, %v1057
    %1059 = vmatprep.mubr.f32.mxu0 0.0
    %v1060 = vand.u32 %v108, 4294901760
    %v1061 = vsub.f32 %v108, %v1060
    %1062 = vmatmul.mubr.f32.gmra.mrb[0].mxu0 %v1061
    %v1063 = vpop.f32.mrb[0].mxu0
    %v1064 = vadd.f32 %v757, %v1063
    %v1065 = vpop.f32.mrb[0].mxu0
    %v1066 = vadd.f32 %v759, %v1065
    %1067 = vmatprep.mubr.f32.mxu0 0.0
    %v1068 = vand.u32 %v111, 4294901760
    %v1069 = vsub.f32 %v111, %v1068
    %1070 = vmatmul.mubr.f32.gmra.mrb[0].mxu0 %v1069
    %v1071 = vpop.f32.mrb[0].mxu0
    %v1072 = vadd.f32 %v764, %v1071
    %v1073 = vpop.f32.mrb[0].mxu0
    %v1074 = vadd.f32 %v766, %v1073
    %1075 = vmatprep.mubr.f32.mxu0 0.0
    %v1076 = vand.u32 %v114, 4294901760
    %v1077 = vsub.f32 %v114, %v1076
    %1078 = vmatmul.mubr.f32.gmra.mrb[0].mxu0 %v1077
    %v1079 = vpop.f32.mrb[0].mxu0
    %v1080 = vadd.f32 %v771, %v1079
    %v1081 = vpop.f32.mrb[0].mxu0
    %v1082 = vadd.f32 %v773, %v1081
    %1083 = vmatprep.mubr.f32.mxu0 0.0
    %v1084 = vand.u32 %v117, 4294901760
    %v1085 = vsub.f32 %v117, %v1084
    %1086 = vmatmul.mubr.f32.gmra.mrb[0].mxu0 %v1085
    %v1087 = vpop.f32.mrb[0].mxu0
    %v1088 = vadd.f32 %v778, %v1087
    %v1089 = vpop.f32.mrb[0].mxu0
    %v1090 = vadd.f32 %v780, %v1089
    %1091 = vmatprep.mubr.f32.mxu0 0.0
    %v1092 = vand.u32 %v120, 4294901760
    %v1093 = vsub.f32 %v120, %v1092
    %1094 = vmatmul.mubr.f32.gmra.mrb[0].mxu0 %v1093
    %v1095 = vpop.f32.mrb[0].mxu0
    %v1096 = vadd.f32 %v785, %v1095
    %v1097 = vpop.f32.mrb[0].mxu0
    %v1098 = vadd.f32 %v787, %v1097
    %1099 = vmatprep.mubr.f32.mxu0 0.0
    %v1100 = vand.u32 %v123, 4294901760
    %v1101 = vsub.f32 %v123, %v1100
    %1102 = vmatmul.mubr.f32.gmra.mrb[0].mxu0 %v1101
    %v1103 = vpop.f32.mrb[0].mxu0
    %v1104 = vadd.f32 %v792, %v1103
    %v1105 = vpop.f32.mrb[0].mxu0
    %v1106 = vadd.f32 %v794, %v1105
    %1107 = vmatprep.mubr.f32.mxu0 0.0
    %v1108 = vand.u32 %v126, 4294901760
    %v1109 = vsub.f32 %v126, %v1108
    %1110 = vmatmul.mubr.f32.gmra.mrb[0].mxu0 %v1109
    %v1111 = vpop.f32.mrb[0].mxu0
    %v1112 = vadd.f32 %v799, %v1111
    %v1113 = vpop.f32.mrb[0].mxu0
    %v1114 = vadd.f32 %v801, %v1113
    %1115 = vmatprep.mubr.f32.mxu0 0.0
    %v1116 = vand.u32 %v129, 4294901760
    %v1117 = vsub.f32 %v129, %v1116
    %1118 = vmatmul.mubr.f32.gmra.mrb[0].mxu0 %v1117
    %v1119 = vpop.f32.mrb[0].mxu0
    %v1120 = vadd.f32 %v806, %v1119
    %v1121 = vpop.f32.mrb[0].mxu0
    %v1122 = vadd.f32 %v808, %v1121
    %1123 = vmatprep.mubr.f32.mxu0 0.0
    %v1124 = vand.u32 %v132, 4294901760
    %v1125 = vsub.f32 %v132, %v1124
    %1126 = vmatmul.mubr.f32.gmra.mrb[0].mxu0 %v1125
    %v1127 = vpop.f32.mrb[0].mxu0
    %v1128 = vadd.f32 %v813, %v1127
    %v1129 = vpop.f32.mrb[0].mxu0
    %v1130 = vadd.f32 %v815, %v1129
    %1131 = vmatprep.mubr.f32.mxu0 0.0
    %v1132 = vand.u32 %v135, 4294901760
    %v1133 = vsub.f32 %v135, %v1132
    %1134 = vmatmul.mubr.f32.gmra.mrb[0].mxu0 %v1133
    %v1135 = vpop.f32.mrb[0].mxu0
    %v1136 = vadd.f32 %v820, %v1135
    %v1137 = vpop.f32.mrb[0].mxu0
    %v1138 = vadd.f32 %v822, %v1137
    %1139 = vmatprep.mubr.f32.mxu0 0.0
    %v1140 = vand.u32 %v138, 4294901760
    %v1141 = vsub.f32 %v138, %v1140
    %1142 = vmatmul.mubr.f32.gmra.mrb[0].mxu0 %v1141
    %v1143 = vpop.f32.mrb[0].mxu0
    %v1144 = vadd.f32 %v827, %v1143
    %v1145 = vpop.f32.mrb[0].mxu0
    %v1146 = vadd.f32 %v829, %v1145
    %1147 = vmatprep.mubr.f32.mxu0 0.0
    %v1148 = vand.u32 %v141, 4294901760
    %v1149 = vsub.f32 %v141, %v1148
    %1150 = vmatmul.mubr.f32.gmra.mrb[0].mxu0 %v1149
    %v1151 = vpop.f32.mrb[0].mxu0
    %v1152 = vadd.f32 %v834, %v1151
    %v1153 = vpop.f32.mrb[0].mxu0
    %v1154 = vadd.f32 %v836, %v1153
    %1155 = vmatprep.mubr.f32.mxu0 0.0
    %v1156 = vand.u32 %v144, 4294901760
    %v1157 = vsub.f32 %v144, %v1156
    %1158 = vmatmul.mubr.f32.gmra.mrb[0].mxu0 %v1157
    %v1159 = vpop.f32.mrb[0].mxu0
    %v1160 = vadd.f32 %v841, %v1159
    %v1161 = vpop.f32.mrb[0].mxu0
    %v1162 = vadd.f32 %v843, %v1161
    %1163 = vmatprep.mubr.f32.mxu0 0.0
    %v1164 = vand.u32 %v147, 4294901760
    %v1165 = vsub.f32 %v147, %v1164
    %1166 = vmatmul.mubr.f32.gmra.mrb[0].mxu0 %v1165
    %v1167 = vpop.f32.mrb[0].mxu0
    %v1168 = vadd.f32 %v848, %v1167
    %v1169 = vpop.f32.mrb[0].mxu0
    %v1170 = vadd.f32 %v850, %v1169
    %1171 = vmatprep.mubr.f32.mxu0 0.0
    %v1172 = vand.u32 %v150, 4294901760
    %v1173 = vsub.f32 %v150, %v1172
    %1174 = vmatmul.mubr.f32.gmra.mrb[0].mxu0 %v1173
    %v1175 = vpop.f32.mrb[0].mxu0
    %v1176 = vadd.f32 %v855, %v1175
    %v1177 = vpop.f32.mrb[0].mxu0
    %v1178 = vadd.f32 %v857, %v1177
    %1179 = vmatprep.mubr.f32.mxu0 0.0
    %v1180 = vand.u32 %v153, 4294901760
    %v1181 = vsub.f32 %v153, %v1180
    %1182 = vmatmul.mubr.f32.gmra.mrb[0].mxu0 %v1181
    %v1183 = vpop.f32.mrb[0].mxu0
    %v1184 = vadd.f32 %v862, %v1183
    %v1185 = vpop.f32.mrb[0].mxu0
    %v1186 = vadd.f32 %v864, %v1185
    %1187 = vmatprep.mubr.f32.mxu0 0.0
    %v1188 = vand.u32 %v156, 4294901760
    %v1189 = vsub.f32 %v156, %v1188
    %1190 = vmatmul.mubr.f32.gmra.mrb[0].mxu0 %v1189
    %v1191 = vpop.f32.mrb[0].mxu0
    %v1192 = vadd.f32 %v869, %v1191
    %v1193 = vpop.f32.mrb[0].mxu0
    %v1194 = vadd.f32 %v871, %v1193
    %1195 = vmatprep.mubr.f32.mxu0 0.0
    %v1196 = vand.u32 %v159, 4294901760
    %v1197 = vsub.f32 %v159, %v1196
    %1198 = vmatmul.mubr.f32.gmra.mrb[0].mxu0 %v1197
    %v1199 = vpop.f32.mrb[0].mxu0
    %v1200 = vadd.f32 %v876, %v1199
    %v1201 = vpop.f32.mrb[0].mxu0
    %v1202 = vadd.f32 %v878, %v1201
    %1203 = vmatprep.mubr.f32.mxu0 0.0
    %v1204 = vand.u32 %v162, 4294901760
    %v1205 = vsub.f32 %v162, %v1204
    %1206 = vmatmul.mubr.f32.gmra.mrb[0].mxu0 %v1205
    %v1207 = vpop.f32.mrb[0].mxu0
    %v1208 = vadd.f32 %v883, %v1207
    %v1209 = vpop.f32.mrb[0].mxu0
    %v1210 = vadd.f32 %v885, %v1209
    %1211 = vdwg.mxu0
    %v1212 = vand.u32 %v167, 4294901760
    %1213 = vmatprep.subr.mxu0 %v1212
    %v1214 = vand.u32 %v165, 4294901760
    %1215 = vmatpush1.msra.mxu0 %v1214
    %1216 = vmatprep.subr.mxu0 0.0
    %1217 = vmatpush1.msra.mxu0 0.0
    %1218 = vmatprep.subr.mxu0 0.0
    %1219 = vmatpush1.msra.mxu0 0.0
    %1220 = vmatprep.subr.mxu0 0.0
    %1221 = vmatpush1.msra.mxu0 0.0
    %1222 = vmatprep.subr.mxu0 0.0
    %1223 = vmatpush1.msra.mxu0 0.0
    %1224 = vmatprep.subr.mxu0 0.0
    %1225 = vmatpush1.msra.mxu0 0.0
    %1226 = vmatprep.subr.mxu0 0.0
    %1227 = vmatpush1.msra.mxu0 0.0
    %1228 = vmatprep.subr.mxu0 0.0
    %1229 = vmatpush1.msra.mxu0 0.0
    %1230 = vmatprep.subr.mxu0 0.0
    %1231 = vmatpush1.msra.mxu0 0.0
    %1232 = vmatprep.subr.mxu0 0.0
    %1233 = vmatpush1.msra.mxu0 0.0
    %1234 = vmatprep.subr.mxu0 0.0
    %1235 = vmatpush1.msra.mxu0 0.0
    %1236 = vmatprep.subr.mxu0 0.0
    %1237 = vmatpush1.msra.mxu0 0.0
    %1238 = vmatprep.subr.mxu0 0.0
    %1239 = vmatpush1.msra.mxu0 0.0
    %1240 = vmatprep.subr.mxu0 0.0
    %1241 = vmatpush1.msra.mxu0 0.0
    %1242 = vmatprep.subr.mxu0 0.0
    %1243 = vmatpush1.msra.mxu0 0.0
    %1244 = vmatprep.subr.mxu0 0.0
    %1245 = vmatpush1.msra.mxu0 0.0
    %1246 = vmatprep.subr.mxu0 0.0
    %1247 = vmatpush1.msra.mxu0 0.0
    %1248 = vmatprep.subr.mxu0 0.0
    %1249 = vmatpush1.msra.mxu0 0.0
    %1250 = vmatprep.subr.mxu0 0.0
    %1251 = vmatpush1.msra.mxu0 0.0
    %1252 = vmatprep.subr.mxu0 0.0
    %1253 = vmatpush1.msra.mxu0 0.0
    %1254 = vmatprep.subr.mxu0 0.0
    %1255 = vmatpush1.msra.mxu0 0.0
    %1256 = vmatprep.subr.mxu0 0.0
    %1257 = vmatpush1.msra.mxu0 0.0
    %1258 = vmatprep.subr.mxu0 0.0
    %1259 = vmatpush1.msra.mxu0 0.0
    %1260 = vmatprep.subr.mxu0 0.0
    %1261 = vmatpush1.msra.mxu0 0.0
    %1262 = vmatprep.subr.mxu0 0.0
    %1263 = vmatpush1.msra.mxu0 0.0
    %1264 = vmatprep.subr.mxu0 0.0
    %1265 = vmatpush1.msra.mxu0 0.0
    %1266 = vmatprep.subr.mxu0 0.0
    %1267 = vmatpush1.msra.mxu0 0.0
    %1268 = vmatprep.subr.mxu0 0.0
    %1269 = vmatpush1.msra.mxu0 0.0
    %1270 = vmatprep.subr.mxu0 0.0
    %1271 = vmatpush1.msra.mxu0 0.0
    %1272 = vmatprep.subr.mxu0 0.0
    %1273 = vmatpush1.msra.mxu0 0.0
    %1274 = vmatprep.subr.mxu0 0.0
    %1275 = vmatpush1.msra.mxu0 0.0
    %1276 = vmatprep.subr.mxu0 0.0
    %1277 = vmatpush1.msra.mxu0 0.0
    %1278 = vmatprep.mubr.f32.mxu0 0.0
    %v1279 = vand.u32 %v69, 4294901760
    %v1280 = vsub.f32 %v69, %v1279
    %v1281 = vand.u32 %v1280, 4294901760
    %1282 = vmatmul.mubr.f32.gmra.mrb[0].mxu0 %v1281
    %v1283 = vpop.f32.mrb[0].mxu0
    %v1284 = vadd.f32 %v960, %v1283
    %v1285 = vpop.f32.mrb[0].mxu0
    %v1286 = vadd.f32 %v962, %v1285
    %1287 = vmatprep.mubr.f32.mxu0 0.0
    %v1288 = vand.u32 %v72, 4294901760
    %v1289 = vsub.f32 %v72, %v1288
    %v1290 = vand.u32 %v1289, 4294901760
    %1291 = vmatmul.mubr.f32.gmra.mrb[0].mxu0 %v1290
    %v1292 = vpop.f32.mrb[0].mxu0
    %v1293 = vadd.f32 %v968, %v1292
    %v1294 = vpop.f32.mrb[0].mxu0
    %v1295 = vadd.f32 %v970, %v1294
    %1296 = vmatprep.mubr.f32.mxu0 0.0
    %v1297 = vand.u32 %v75, 4294901760
    %v1298 = vsub.f32 %v75, %v1297
    %v1299 = vand.u32 %v1298, 4294901760
    %1300 = vmatmul.mubr.f32.gmra.mrb[0].mxu0 %v1299
    %v1301 = vpop.f32.mrb[0].mxu0
    %v1302 = vadd.f32 %v976, %v1301
    %v1303 = vpop.f32.mrb[0].mxu0
    %v1304 = vadd.f32 %v978, %v1303
    %1305 = vmatprep.mubr.f32.mxu0 0.0
    %v1306 = vand.u32 %v78, 4294901760
    %v1307 = vsub.f32 %v78, %v1306
    %v1308 = vand.u32 %v1307, 4294901760
    %1309 = vmatmul.mubr.f32.gmra.mrb[0].mxu0 %v1308
    %v1310 = vpop.f32.mrb[0].mxu0
    %v1311 = vadd.f32 %v984, %v1310
    %v1312 = vpop.f32.mrb[0].mxu0
    %v1313 = vadd.f32 %v986, %v1312
    %1314 = vmatprep.mubr.f32.mxu0 0.0
    %v1315 = vand.u32 %v81, 4294901760
    %v1316 = vsub.f32 %v81, %v1315
    %v1317 = vand.u32 %v1316, 4294901760
    %1318 = vmatmul.mubr.f32.gmra.mrb[0].mxu0 %v1317
    %v1319 = vpop.f32.mrb[0].mxu0
    %v1320 = vadd.f32 %v992, %v1319
    %v1321 = vpop.f32.mrb[0].mxu0
    %v1322 = vadd.f32 %v994, %v1321
    %1323 = vmatprep.mubr.f32.mxu0 0.0
    %v1324 = vand.u32 %v84, 4294901760
    %v1325 = vsub.f32 %v84, %v1324
    %v1326 = vand.u32 %v1325, 4294901760
    %1327 = vmatmul.mubr.f32.gmra.mrb[0].mxu0 %v1326
    %v1328 = vpop.f32.mrb[0].mxu0
    %v1329 = vadd.f32 %v1000, %v1328
    %v1330 = vpop.f32.mrb[0].mxu0
    %v1331 = vadd.f32 %v1002, %v1330
    %1332 = vmatprep.mubr.f32.mxu0 0.0
    %v1333 = vand.u32 %v87, 4294901760
    %v1334 = vsub.f32 %v87, %v1333
    %v1335 = vand.u32 %v1334, 4294901760
    %1336 = vmatmul.mubr.f32.gmra.mrb[0].mxu0 %v1335
    %v1337 = vpop.f32.mrb[0].mxu0
    %v1338 = vadd.f32 %v1008, %v1337
    %v1339 = vpop.f32.mrb[0].mxu0
    %v1340 = vadd.f32 %v1010, %v1339
    %1341 = vmatprep.mubr.f32.mxu0 0.0
    %v1342 = vand.u32 %v90, 4294901760
    %v1343 = vsub.f32 %v90, %v1342
    %v1344 = vand.u32 %v1343, 4294901760
    %1345 = vmatmul.mubr.f32.gmra.mrb[0].mxu0 %v1344
    %v1346 = vpop.f32.mrb[0].mxu0
    %v1347 = vadd.f32 %v1016, %v1346
    %v1348 = vpop.f32.mrb[0].mxu0
    %v1349 = vadd.f32 %v1018, %v1348
    %1350 = vmatprep.mubr.f32.mxu0 0.0
    %v1351 = vand.u32 %v93, 4294901760
    %v1352 = vsub.f32 %v93, %v1351
    %v1353 = vand.u32 %v1352, 4294901760
    %1354 = vmatmul.mubr.f32.gmra.mrb[0].mxu0 %v1353
    %v1355 = vpop.f32.mrb[0].mxu0
    %v1356 = vadd.f32 %v1024, %v1355
    %v1357 = vpop.f32.mrb[0].mxu0
    %v1358 = vadd.f32 %v1026, %v1357
    %1359 = vmatprep.mubr.f32.mxu0 0.0
    %v1360 = vand.u32 %v96, 4294901760
    %v1361 = vsub.f32 %v96, %v1360
    %v1362 = vand.u32 %v1361, 4294901760
    %1363 = vmatmul.mubr.f32.gmra.mrb[0].mxu0 %v1362
    %v1364 = vpop.f32.mrb[0].mxu0
    %v1365 = vadd.f32 %v1032, %v1364
    %v1366 = vpop.f32.mrb[0].mxu0
    %v1367 = vadd.f32 %v1034, %v1366
    %1368 = vmatprep.mubr.f32.mxu0 0.0
    %v1369 = vand.u32 %v99, 4294901760
    %v1370 = vsub.f32 %v99, %v1369
    %v1371 = vand.u32 %v1370, 4294901760
    %1372 = vmatmul.mubr.f32.gmra.mrb[0].mxu0 %v1371
    %v1373 = vpop.f32.mrb[0].mxu0
    %v1374 = vadd.f32 %v1040, %v1373
    %v1375 = vpop.f32.mrb[0].mxu0
    %v1376 = vadd.f32 %v1042, %v1375
    %1377 = vmatprep.mubr.f32.mxu0 0.0
    %v1378 = vand.u32 %v102, 4294901760
    %v1379 = vsub.f32 %v102, %v1378
    %v1380 = vand.u32 %v1379, 4294901760
    %1381 = vmatmul.mubr.f32.gmra.mrb[0].mxu0 %v1380
    %v1382 = vpop.f32.mrb[0].mxu0
    %v1383 = vadd.f32 %v1048, %v1382
    %v1384 = vpop.f32.mrb[0].mxu0
    %v1385 = vadd.f32 %v1050, %v1384
    %1386 = vmatprep.mubr.f32.mxu0 0.0
    %v1387 = vand.u32 %v105, 4294901760
    %v1388 = vsub.f32 %v105, %v1387
    %v1389 = vand.u32 %v1388, 4294901760
    %1390 = vmatmul.mubr.f32.gmra.mrb[0].mxu0 %v1389
    %v1391 = vpop.f32.mrb[0].mxu0
    %v1392 = vadd.f32 %v1056, %v1391
    %v1393 = vpop.f32.mrb[0].mxu0
    %v1394 = vadd.f32 %v1058, %v1393
    %1395 = vmatprep.mubr.f32.mxu0 0.0
    %v1396 = vand.u32 %v108, 4294901760
    %v1397 = vsub.f32 %v108, %v1396
    %v1398 = vand.u32 %v1397, 4294901760
    %1399 = vmatmul.mubr.f32.gmra.mrb[0].mxu0 %v1398
    %v1400 = vpop.f32.mrb[0].mxu0
    %v1401 = vadd.f32 %v1064, %v1400
    %v1402 = vpop.f32.mrb[0].mxu0
    %v1403 = vadd.f32 %v1066, %v1402
    %1404 = vmatprep.mubr.f32.mxu0 0.0
    %v1405 = vand.u32 %v111, 4294901760
    %v1406 = vsub.f32 %v111, %v1405
    %v1407 = vand.u32 %v1406, 4294901760
    %1408 = vmatmul.mubr.f32.gmra.mrb[0].mxu0 %v1407
    %v1409 = vpop.f32.mrb[0].mxu0
    %v1410 = vadd.f32 %v1072, %v1409
    %v1411 = vpop.f32.mrb[0].mxu0
    %v1412 = vadd.f32 %v1074, %v1411
    %1413 = vmatprep.mubr.f32.mxu0 0.0
    %v1414 = vand.u32 %v114, 4294901760
    %v1415 = vsub.f32 %v114, %v1414
    %v1416 = vand.u32 %v1415, 4294901760
    %1417 = vmatmul.mubr.f32.gmra.mrb[0].mxu0 %v1416
    %v1418 = vpop.f32.mrb[0].mxu0
    %v1419 = vadd.f32 %v1080, %v1418
    %v1420 = vpop.f32.mrb[0].mxu0
    %v1421 = vadd.f32 %v1082, %v1420
    %1422 = vmatprep.mubr.f32.mxu0 0.0
    %v1423 = vand.u32 %v117, 4294901760
    %v1424 = vsub.f32 %v117, %v1423
    %v1425 = vand.u32 %v1424, 4294901760
    %1426 = vmatmul.mubr.f32.gmra.mrb[0].mxu0 %v1425
    %v1427 = vpop.f32.mrb[0].mxu0
    %v1428 = vadd.f32 %v1088, %v1427
    %v1429 = vpop.f32.mrb[0].mxu0
    %v1430 = vadd.f32 %v1090, %v1429
    %1431 = vmatprep.mubr.f32.mxu0 0.0
    %v1432 = vand.u32 %v120, 4294901760
    %v1433 = vsub.f32 %v120, %v1432
    %v1434 = vand.u32 %v1433, 4294901760
    %1435 = vmatmul.mubr.f32.gmra.mrb[0].mxu0 %v1434
    %v1436 = vpop.f32.mrb[0].mxu0
    %v1437 = vadd.f32 %v1096, %v1436
    %v1438 = vpop.f32.mrb[0].mxu0
    %v1439 = vadd.f32 %v1098, %v1438
    %1440 = vmatprep.mubr.f32.mxu0 0.0
    %v1441 = vand.u32 %v123, 4294901760
    %v1442 = vsub.f32 %v123, %v1441
    %v1443 = vand.u32 %v1442, 4294901760
    %1444 = vmatmul.mubr.f32.gmra.mrb[0].mxu0 %v1443
    %v1445 = vpop.f32.mrb[0].mxu0
    %v1446 = vadd.f32 %v1104, %v1445
    %v1447 = vpop.f32.mrb[0].mxu0
    %v1448 = vadd.f32 %v1106, %v1447
    %1449 = vmatprep.mubr.f32.mxu0 0.0
    %v1450 = vand.u32 %v126, 4294901760
    %v1451 = vsub.f32 %v126, %v1450
    %v1452 = vand.u32 %v1451, 4294901760
    %1453 = vmatmul.mubr.f32.gmra.mrb[0].mxu0 %v1452
    %v1454 = vpop.f32.mrb[0].mxu0
    %v1455 = vadd.f32 %v1112, %v1454
    %v1456 = vpop.f32.mrb[0].mxu0
    %v1457 = vadd.f32 %v1114, %v1456
    %1458 = vmatprep.mubr.f32.mxu0 0.0
    %v1459 = vand.u32 %v129, 4294901760
    %v1460 = vsub.f32 %v129, %v1459
    %v1461 = vand.u32 %v1460, 4294901760
    %1462 = vmatmul.mubr.f32.gmra.mrb[0].mxu0 %v1461
    %v1463 = vpop.f32.mrb[0].mxu0
    %v1464 = vadd.f32 %v1120, %v1463
    %v1465 = vpop.f32.mrb[0].mxu0
    %v1466 = vadd.f32 %v1122, %v1465
    %1467 = vmatprep.mubr.f32.mxu0 0.0
    %v1468 = vand.u32 %v132, 4294901760
    %v1469 = vsub.f32 %v132, %v1468
    %v1470 = vand.u32 %v1469, 4294901760
    %1471 = vmatmul.mubr.f32.gmra.mrb[0].mxu0 %v1470
    %v1472 = vpop.f32.mrb[0].mxu0
    %v1473 = vadd.f32 %v1128, %v1472
    %v1474 = vpop.f32.mrb[0].mxu0
    %v1475 = vadd.f32 %v1130, %v1474
    %1476 = vmatprep.mubr.f32.mxu0 0.0
    %v1477 = vand.u32 %v135, 4294901760
    %v1478 = vsub.f32 %v135, %v1477
    %v1479 = vand.u32 %v1478, 4294901760
    %1480 = vmatmul.mubr.f32.gmra.mrb[0].mxu0 %v1479
    %v1481 = vpop.f32.mrb[0].mxu0
    %v1482 = vadd.f32 %v1136, %v1481
    %v1483 = vpop.f32.mrb[0].mxu0
    %v1484 = vadd.f32 %v1138, %v1483
    %1485 = vmatprep.mubr.f32.mxu0 0.0
    %v1486 = vand.u32 %v138, 4294901760
    %v1487 = vsub.f32 %v138, %v1486
    %v1488 = vand.u32 %v1487, 4294901760
    %1489 = vmatmul.mubr.f32.gmra.mrb[0].mxu0 %v1488
    %v1490 = vpop.f32.mrb[0].mxu0
    %v1491 = vadd.f32 %v1144, %v1490
    %v1492 = vpop.f32.mrb[0].mxu0
    %v1493 = vadd.f32 %v1146, %v1492
    %1494 = vmatprep.mubr.f32.mxu0 0.0
    %v1495 = vand.u32 %v141, 4294901760
    %v1496 = vsub.f32 %v141, %v1495
    %v1497 = vand.u32 %v1496, 4294901760
    %1498 = vmatmul.mubr.f32.gmra.mrb[0].mxu0 %v1497
    %v1499 = vpop.f32.mrb[0].mxu0
    %v1500 = vadd.f32 %v1152, %v1499
    %v1501 = vpop.f32.mrb[0].mxu0
    %v1502 = vadd.f32 %v1154, %v1501
    %1503 = vmatprep.mubr.f32.mxu0 0.0
    %v1504 = vand.u32 %v144, 4294901760
    %v1505 = vsub.f32 %v144, %v1504
    %v1506 = vand.u32 %v1505, 4294901760
    %1507 = vmatmul.mubr.f32.gmra.mrb[0].mxu0 %v1506
    %v1508 = vpop.f32.mrb[0].mxu0
    %v1509 = vadd.f32 %v1160, %v1508
    %v1510 = vpop.f32.mrb[0].mxu0
    %v1511 = vadd.f32 %v1162, %v1510
    %1512 = vmatprep.mubr.f32.mxu0 0.0
    %v1513 = vand.u32 %v147, 4294901760
    %v1514 = vsub.f32 %v147, %v1513
    %v1515 = vand.u32 %v1514, 4294901760
    %1516 = vmatmul.mubr.f32.gmra.mrb[0].mxu0 %v1515
    %v1517 = vpop.f32.mrb[0].mxu0
    %v1518 = vadd.f32 %v1168, %v1517
    %v1519 = vpop.f32.mrb[0].mxu0
    %v1520 = vadd.f32 %v1170, %v1519
    %1521 = vmatprep.mubr.f32.mxu0 0.0
    %v1522 = vand.u32 %v150, 4294901760
    %v1523 = vsub.f32 %v150, %v1522
    %v1524 = vand.u32 %v1523, 4294901760
    %1525 = vmatmul.mubr.f32.gmra.mrb[0].mxu0 %v1524
    %v1526 = vpop.f32.mrb[0].mxu0
    %v1527 = vadd.f32 %v1176, %v1526
    %v1528 = vpop.f32.mrb[0].mxu0
    %v1529 = vadd.f32 %v1178, %v1528
    %1530 = vmatprep.mubr.f32.mxu0 0.0
    %v1531 = vand.u32 %v153, 4294901760
    %v1532 = vsub.f32 %v153, %v1531
    %v1533 = vand.u32 %v1532, 4294901760
    %1534 = vmatmul.mubr.f32.gmra.mrb[0].mxu0 %v1533
    %v1535 = vpop.f32.mrb[0].mxu0
    %v1536 = vadd.f32 %v1184, %v1535
    %v1537 = vpop.f32.mrb[0].mxu0
    %v1538 = vadd.f32 %v1186, %v1537
    %1539 = vmatprep.mubr.f32.mxu0 0.0
    %v1540 = vand.u32 %v156, 4294901760
    %v1541 = vsub.f32 %v156, %v1540
    %v1542 = vand.u32 %v1541, 4294901760
    %1543 = vmatmul.mubr.f32.gmra.mrb[0].mxu0 %v1542
    %v1544 = vpop.f32.mrb[0].mxu0
    %v1545 = vadd.f32 %v1192, %v1544
    %v1546 = vpop.f32.mrb[0].mxu0
    %v1547 = vadd.f32 %v1194, %v1546
    %1548 = vmatprep.mubr.f32.mxu0 0.0
    %v1549 = vand.u32 %v159, 4294901760
    %v1550 = vsub.f32 %v159, %v1549
    %v1551 = vand.u32 %v1550, 4294901760
    %1552 = vmatmul.mubr.f32.gmra.mrb[0].mxu0 %v1551
    %v1553 = vpop.f32.mrb[0].mxu0
    %v1554 = vadd.f32 %v1200, %v1553
    %v1555 = vpop.f32.mrb[0].mxu0
    %v1556 = vadd.f32 %v1202, %v1555
    %1557 = vmatprep.mubr.f32.mxu0 0.0
    %v1558 = vand.u32 %v162, 4294901760
    %v1559 = vsub.f32 %v162, %v1558
    %v1560 = vand.u32 %v1559, 4294901760
    %1561 = vmatmul.mubr.f32.gmra.mrb[0].mxu0 %v1560
    %v1562 = vpop.f32.mrb[0].mxu0
    %v1563 = vadd.f32 %v1208, %v1562
    %v1564 = vpop.f32.mrb[0].mxu0
    %v1565 = vadd.f32 %v1210, %v1564
    %1566 = vdwg.mxu0
    %v1567 = vand.u32 %v167, 4294901760
    %v1568 = vsub.f32 %v167, %v1567
    %v1569 = vand.u32 %v1568, 4294901760
    %1570 = vmatprep.subr.mxu0 %v1569
    %v1571 = vand.u32 %v165, 4294901760
    %v1572 = vsub.f32 %v165, %v1571
    %v1573 = vand.u32 %v1572, 4294901760
    %1574 = vmatpush1.msra.mxu0 %v1573
    %1575 = vmatprep.subr.mxu0 0.0
    %1576 = vmatpush1.msra.mxu0 0.0
    %1577 = vmatprep.subr.mxu0 0.0
    %1578 = vmatpush1.msra.mxu0 0.0
    %1579 = vmatprep.subr.mxu0 0.0
    %1580 = vmatpush1.msra.mxu0 0.0
    %1581 = vmatprep.subr.mxu0 0.0
    %1582 = vmatpush1.msra.mxu0 0.0
    %1583 = vmatprep.subr.mxu0 0.0
    %1584 = vmatpush1.msra.mxu0 0.0
    %1585 = vmatprep.subr.mxu0 0.0
    %1586 = vmatpush1.msra.mxu0 0.0
    %1587 = vmatprep.subr.mxu0 0.0
    %1588 = vmatpush1.msra.mxu0 0.0
    %1589 = vmatprep.subr.mxu0 0.0
    %1590 = vmatpush1.msra.mxu0 0.0
    %1591 = vmatprep.subr.mxu0 0.0
    %1592 = vmatpush1.msra.mxu0 0.0
    %1593 = vmatprep.subr.mxu0 0.0
    %1594 = vmatpush1.msra.mxu0 0.0
    %1595 = vmatprep.subr.mxu0 0.0
    %1596 = vmatpush1.msra.mxu0 0.0
    %1597 = vmatprep.subr.mxu0 0.0
    %1598 = vmatpush1.msra.mxu0 0.0
    %1599 = vmatprep.subr.mxu0 0.0
    %1600 = vmatpush1.msra.mxu0 0.0
    %1601 = vmatprep.subr.mxu0 0.0
    %1602 = vmatpush1.msra.mxu0 0.0
    %1603 = vmatprep.subr.mxu0 0.0
    %1604 = vmatpush1.msra.mxu0 0.0
    %1605 = vmatprep.subr.mxu0 0.0
    %1606 = vmatpush1.msra.mxu0 0.0
    %1607 = vmatprep.subr.mxu0 0.0
    %1608 = vmatpush1.msra.mxu0 0.0
    %1609 = vmatprep.subr.mxu0 0.0
    %1610 = vmatpush1.msra.mxu0 0.0
    %1611 = vmatprep.subr.mxu0 0.0
    %1612 = vmatpush1.msra.mxu0 0.0
    %1613 = vmatprep.subr.mxu0 0.0
    %1614 = vmatpush1.msra.mxu0 0.0
    %1615 = vmatprep.subr.mxu0 0.0
    %1616 = vmatpush1.msra.mxu0 0.0
    %1617 = vmatprep.subr.mxu0 0.0
    %1618 = vmatpush1.msra.mxu0 0.0
    %1619 = vmatprep.subr.mxu0 0.0
    %1620 = vmatpush1.msra.mxu0 0.0
    %1621 = vmatprep.subr.mxu0 0.0
    %1622 = vmatpush1.msra.mxu0 0.0
    %1623 = vmatprep.subr.mxu0 0.0
    %1624 = vmatpush1.msra.mxu0 0.0
    %1625 = vmatprep.subr.mxu0 0.0
    %1626 = vmatpush1.msra.mxu0 0.0
    %1627 = vmatprep.subr.mxu0 0.0
    %1628 = vmatpush1.msra.mxu0 0.0
    %1629 = vmatprep.subr.mxu0 0.0
    %1630 = vmatpush1.msra.mxu0 0.0
    %1631 = vmatprep.subr.mxu0 0.0
    %1632 = vmatpush1.msra.mxu0 0.0
    %1633 = vmatprep.subr.mxu0 0.0
    %1634 = vmatpush1.msra.mxu0 0.0
    %1635 = vmatprep.subr.mxu0 0.0
    %1636 = vmatpush1.msra.mxu0 0.0
    %1637 = vmatprep.mubr.f32.mxu0 0.0
    %v1638 = vand.u32 %v69, 4294901760
    %1639 = vmatmul.mubr.f32.gmra.mrb[0].mxu0 %v1638
    %v1640 = vpop.f32.mrb[0].mxu0
    %v1641 = vadd.f32 %v1284, %v1640
    %v1642 = vpop.f32.mrb[0].mxu0
    %v1643 = vadd.f32 %v1286, %v1642
    %1644 = vmatprep.mubr.f32.mxu0 0.0
    %v1645 = vand.u32 %v72, 4294901760
    %1646 = vmatmul.mubr.f32.gmra.mrb[0].mxu0 %v1645
    %v1647 = vpop.f32.mrb[0].mxu0
    %v1648 = vadd.f32 %v1293, %v1647
    %v1649 = vpop.f32.mrb[0].mxu0
    %v1650 = vadd.f32 %v1295, %v1649
    %1651 = vmatprep.mubr.f32.mxu0 0.0
    %v1652 = vand.u32 %v75, 4294901760
    %1653 = vmatmul.mubr.f32.gmra.mrb[0].mxu0 %v1652
    %v1654 = vpop.f32.mrb[0].mxu0
    %v1655 = vadd.f32 %v1302, %v1654
    %v1656 = vpop.f32.mrb[0].mxu0
    %v1657 = vadd.f32 %v1304, %v1656
    %1658 = vmatprep.mubr.f32.mxu0 0.0
    %v1659 = vand.u32 %v78, 4294901760
    %1660 = vmatmul.mubr.f32.gmra.mrb[0].mxu0 %v1659
    %v1661 = vpop.f32.mrb[0].mxu0
    %v1662 = vadd.f32 %v1311, %v1661
    %v1663 = vpop.f32.mrb[0].mxu0
    %v1664 = vadd.f32 %v1313, %v1663
    %1665 = vmatprep.mubr.f32.mxu0 0.0
    %v1666 = vand.u32 %v81, 4294901760
    %1667 = vmatmul.mubr.f32.gmra.mrb[0].mxu0 %v1666
    %v1668 = vpop.f32.mrb[0].mxu0
    %v1669 = vadd.f32 %v1320, %v1668
    %v1670 = vpop.f32.mrb[0].mxu0
    %v1671 = vadd.f32 %v1322, %v1670
    %1672 = vmatprep.mubr.f32.mxu0 0.0
    %v1673 = vand.u32 %v84, 4294901760
    %1674 = vmatmul.mubr.f32.gmra.mrb[0].mxu0 %v1673
    %v1675 = vpop.f32.mrb[0].mxu0
    %v1676 = vadd.f32 %v1329, %v1675
    %v1677 = vpop.f32.mrb[0].mxu0
    %v1678 = vadd.f32 %v1331, %v1677
    %1679 = vmatprep.mubr.f32.mxu0 0.0
    %v1680 = vand.u32 %v87, 4294901760
    %1681 = vmatmul.mubr.f32.gmra.mrb[0].mxu0 %v1680
    %v1682 = vpop.f32.mrb[0].mxu0
    %v1683 = vadd.f32 %v1338, %v1682
    %v1684 = vpop.f32.mrb[0].mxu0
    %v1685 = vadd.f32 %v1340, %v1684
    %1686 = vmatprep.mubr.f32.mxu0 0.0
    %v1687 = vand.u32 %v90, 4294901760
    %1688 = vmatmul.mubr.f32.gmra.mrb[0].mxu0 %v1687
    %v1689 = vpop.f32.mrb[0].mxu0
    %v1690 = vadd.f32 %v1347, %v1689
    %v1691 = vpop.f32.mrb[0].mxu0
    %v1692 = vadd.f32 %v1349, %v1691
    %1693 = vmatprep.mubr.f32.mxu0 0.0
    %v1694 = vand.u32 %v93, 4294901760
    %1695 = vmatmul.mubr.f32.gmra.mrb[0].mxu0 %v1694
    %v1696 = vpop.f32.mrb[0].mxu0
    %v1697 = vadd.f32 %v1356, %v1696
    %v1698 = vpop.f32.mrb[0].mxu0
    %v1699 = vadd.f32 %v1358, %v1698
    %1700 = vmatprep.mubr.f32.mxu0 0.0
    %v1701 = vand.u32 %v96, 4294901760
    %1702 = vmatmul.mubr.f32.gmra.mrb[0].mxu0 %v1701
    %v1703 = vpop.f32.mrb[0].mxu0
    %v1704 = vadd.f32 %v1365, %v1703
    %v1705 = vpop.f32.mrb[0].mxu0
    %v1706 = vadd.f32 %v1367, %v1705
    %1707 = vmatprep.mubr.f32.mxu0 0.0
    %v1708 = vand.u32 %v99, 4294901760
    %1709 = vmatmul.mubr.f32.gmra.mrb[0].mxu0 %v1708
    %v1710 = vpop.f32.mrb[0].mxu0
    %v1711 = vadd.f32 %v1374, %v1710
    %v1712 = vpop.f32.mrb[0].mxu0
    %v1713 = vadd.f32 %v1376, %v1712
    %1714 = vmatprep.mubr.f32.mxu0 0.0
    %v1715 = vand.u32 %v102, 4294901760
    %1716 = vmatmul.mubr.f32.gmra.mrb[0].mxu0 %v1715
    %v1717 = vpop.f32.mrb[0].mxu0
    %v1718 = vadd.f32 %v1383, %v1717
    %v1719 = vpop.f32.mrb[0].mxu0
    %v1720 = vadd.f32 %v1385, %v1719
    %1721 = vmatprep.mubr.f32.mxu0 0.0
    %v1722 = vand.u32 %v105, 4294901760
    %1723 = vmatmul.mubr.f32.gmra.mrb[0].mxu0 %v1722
    %v1724 = vpop.f32.mrb[0].mxu0
    %v1725 = vadd.f32 %v1392, %v1724
    %v1726 = vpop.f32.mrb[0].mxu0
    %v1727 = vadd.f32 %v1394, %v1726
    %1728 = vmatprep.mubr.f32.mxu0 0.0
    %v1729 = vand.u32 %v108, 4294901760
    %1730 = vmatmul.mubr.f32.gmra.mrb[0].mxu0 %v1729
    %v1731 = vpop.f32.mrb[0].mxu0
    %v1732 = vadd.f32 %v1401, %v1731
    %v1733 = vpop.f32.mrb[0].mxu0
    %v1734 = vadd.f32 %v1403, %v1733
    %1735 = vmatprep.mubr.f32.mxu0 0.0
    %v1736 = vand.u32 %v111, 4294901760
    %1737 = vmatmul.mubr.f32.gmra.mrb[0].mxu0 %v1736
    %v1738 = vpop.f32.mrb[0].mxu0
    %v1739 = vadd.f32 %v1410, %v1738
    %v1740 = vpop.f32.mrb[0].mxu0
    %v1741 = vadd.f32 %v1412, %v1740
    %1742 = vmatprep.mubr.f32.mxu0 0.0
    %v1743 = vand.u32 %v114, 4294901760
    %1744 = vmatmul.mubr.f32.gmra.mrb[0].mxu0 %v1743
    %v1745 = vpop.f32.mrb[0].mxu0
    %v1746 = vadd.f32 %v1419, %v1745
    %v1747 = vpop.f32.mrb[0].mxu0
    %v1748 = vadd.f32 %v1421, %v1747
    %1749 = vmatprep.mubr.f32.mxu0 0.0
    %v1750 = vand.u32 %v117, 4294901760
    %1751 = vmatmul.mubr.f32.gmra.mrb[0].mxu0 %v1750
    %v1752 = vpop.f32.mrb[0].mxu0
    %v1753 = vadd.f32 %v1428, %v1752
    %v1754 = vpop.f32.mrb[0].mxu0
    %v1755 = vadd.f32 %v1430, %v1754
    %1756 = vmatprep.mubr.f32.mxu0 0.0
    %v1757 = vand.u32 %v120, 4294901760
    %1758 = vmatmul.mubr.f32.gmra.mrb[0].mxu0 %v1757
    %v1759 = vpop.f32.mrb[0].mxu0
    %v1760 = vadd.f32 %v1437, %v1759
    %v1761 = vpop.f32.mrb[0].mxu0
    %v1762 = vadd.f32 %v1439, %v1761
    %1763 = vmatprep.mubr.f32.mxu0 0.0
    %v1764 = vand.u32 %v123, 4294901760
    %1765 = vmatmul.mubr.f32.gmra.mrb[0].mxu0 %v1764
    %v1766 = vpop.f32.mrb[0].mxu0
    %v1767 = vadd.f32 %v1446, %v1766
    %v1768 = vpop.f32.mrb[0].mxu0
    %v1769 = vadd.f32 %v1448, %v1768
    %1770 = vmatprep.mubr.f32.mxu0 0.0
    %v1771 = vand.u32 %v126, 4294901760
    %1772 = vmatmul.mubr.f32.gmra.mrb[0].mxu0 %v1771
    %v1773 = vpop.f32.mrb[0].mxu0
    %v1774 = vadd.f32 %v1455, %v1773
    %v1775 = vpop.f32.mrb[0].mxu0
    %v1776 = vadd.f32 %v1457, %v1775
    %1777 = vmatprep.mubr.f32.mxu0 0.0
    %v1778 = vand.u32 %v129, 4294901760
    %1779 = vmatmul.mubr.f32.gmra.mrb[0].mxu0 %v1778
    %v1780 = vpop.f32.mrb[0].mxu0
    %v1781 = vadd.f32 %v1464, %v1780
    %v1782 = vpop.f32.mrb[0].mxu0
    %v1783 = vadd.f32 %v1466, %v1782
    %1784 = vmatprep.mubr.f32.mxu0 0.0
    %v1785 = vand.u32 %v132, 4294901760
    %1786 = vmatmul.mubr.f32.gmra.mrb[0].mxu0 %v1785
    %v1787 = vpop.f32.mrb[0].mxu0
    %v1788 = vadd.f32 %v1473, %v1787
    %v1789 = vpop.f32.mrb[0].mxu0
    %v1790 = vadd.f32 %v1475, %v1789
    %1791 = vmatprep.mubr.f32.mxu0 0.0
    %v1792 = vand.u32 %v135, 4294901760
    %1793 = vmatmul.mubr.f32.gmra.mrb[0].mxu0 %v1792
    %v1794 = vpop.f32.mrb[0].mxu0
    %v1795 = vadd.f32 %v1482, %v1794
    %v1796 = vpop.f32.mrb[0].mxu0
    %v1797 = vadd.f32 %v1484, %v1796
    %1798 = vmatprep.mubr.f32.mxu0 0.0
    %v1799 = vand.u32 %v138, 4294901760
    %1800 = vmatmul.mubr.f32.gmra.mrb[0].mxu0 %v1799
    %v1801 = vpop.f32.mrb[0].mxu0
    %v1802 = vadd.f32 %v1491, %v1801
    %v1803 = vpop.f32.mrb[0].mxu0
    %v1804 = vadd.f32 %v1493, %v1803
    %1805 = vmatprep.mubr.f32.mxu0 0.0
    %v1806 = vand.u32 %v141, 4294901760
    %1807 = vmatmul.mubr.f32.gmra.mrb[0].mxu0 %v1806
    %v1808 = vpop.f32.mrb[0].mxu0
    %v1809 = vadd.f32 %v1500, %v1808
    %v1810 = vpop.f32.mrb[0].mxu0
    %v1811 = vadd.f32 %v1502, %v1810
    %1812 = vmatprep.mubr.f32.mxu0 0.0
    %v1813 = vand.u32 %v144, 4294901760
    %1814 = vmatmul.mubr.f32.gmra.mrb[0].mxu0 %v1813
    %v1815 = vpop.f32.mrb[0].mxu0
    %v1816 = vadd.f32 %v1509, %v1815
    %v1817 = vpop.f32.mrb[0].mxu0
    %v1818 = vadd.f32 %v1511, %v1817
    %1819 = vmatprep.mubr.f32.mxu0 0.0
    %v1820 = vand.u32 %v147, 4294901760
    %1821 = vmatmul.mubr.f32.gmra.mrb[0].mxu0 %v1820
    %v1822 = vpop.f32.mrb[0].mxu0
    %v1823 = vadd.f32 %v1518, %v1822
    %v1824 = vpop.f32.mrb[0].mxu0
    %v1825 = vadd.f32 %v1520, %v1824
    %1826 = vmatprep.mubr.f32.mxu0 0.0
    %v1827 = vand.u32 %v150, 4294901760
    %1828 = vmatmul.mubr.f32.gmra.mrb[0].mxu0 %v1827
    %v1829 = vpop.f32.mrb[0].mxu0
    %v1830 = vadd.f32 %v1527, %v1829
    %v1831 = vpop.f32.mrb[0].mxu0
    %v1832 = vadd.f32 %v1529, %v1831
    %1833 = vmatprep.mubr.f32.mxu0 0.0
    %v1834 = vand.u32 %v153, 4294901760
    %1835 = vmatmul.mubr.f32.gmra.mrb[0].mxu0 %v1834
    %v1836 = vpop.f32.mrb[0].mxu0
    %v1837 = vadd.f32 %v1536, %v1836
    %v1838 = vpop.f32.mrb[0].mxu0
    %v1839 = vadd.f32 %v1538, %v1838
    %1840 = vmatprep.mubr.f32.mxu0 0.0
    %v1841 = vand.u32 %v156, 4294901760
    %1842 = vmatmul.mubr.f32.gmra.mrb[0].mxu0 %v1841
    %v1843 = vpop.f32.mrb[0].mxu0
    %v1844 = vadd.f32 %v1545, %v1843
    %v1845 = vpop.f32.mrb[0].mxu0
    %v1846 = vadd.f32 %v1547, %v1845
    %1847 = vmatprep.mubr.f32.mxu0 0.0
    %v1848 = vand.u32 %v159, 4294901760
    %1849 = vmatmul.mubr.f32.gmra.mrb[0].mxu0 %v1848
    %v1850 = vpop.f32.mrb[0].mxu0
    %v1851 = vadd.f32 %v1554, %v1850
    %v1852 = vpop.f32.mrb[0].mxu0
    %v1853 = vadd.f32 %v1556, %v1852
    %1854 = vmatprep.mubr.f32.mxu0 0.0
    %v1855 = vand.u32 %v162, 4294901760
    %1856 = vmatmul.mubr.f32.gmra.mrb[0].mxu0 %v1855
    %v1857 = vpop.f32.mrb[0].mxu0
    %v1858 = vadd.f32 %v1563, %v1857
    %v1859 = vpop.f32.mrb[0].mxu0
    %v1860 = vadd.f32 %v1565, %v1859
    %1861 = vdwg.mxu0
    %v1862 = vand.u32 %v167, 4294901760
    %1863 = vmatprep.subr.mxu0 %v1862
    %v1864 = vand.u32 %v165, 4294901760
    %1865 = vmatpush1.msra.mxu0 %v1864
    %1866 = vmatprep.subr.mxu0 0.0
    %1867 = vmatpush1.msra.mxu0 0.0
    %1868 = vmatprep.subr.mxu0 0.0
    %1869 = vmatpush1.msra.mxu0 0.0
    %1870 = vmatprep.subr.mxu0 0.0
    %1871 = vmatpush1.msra.mxu0 0.0
    %1872 = vmatprep.subr.mxu0 0.0
    %1873 = vmatpush1.msra.mxu0 0.0
    %1874 = vmatprep.subr.mxu0 0.0
    %1875 = vmatpush1.msra.mxu0 0.0
    %1876 = vmatprep.subr.mxu0 0.0
    %1877 = vmatpush1.msra.mxu0 0.0
    %1878 = vmatprep.subr.mxu0 0.0
    %1879 = vmatpush1.msra.mxu0 0.0
    %1880 = vmatprep.subr.mxu0 0.0
    %1881 = vmatpush1.msra.mxu0 0.0
    %1882 = vmatprep.subr.mxu0 0.0
    %1883 = vmatpush1.msra.mxu0 0.0
    %1884 = vmatprep.subr.mxu0 0.0
    %1885 = vmatpush1.msra.mxu0 0.0
    %1886 = vmatprep.subr.mxu0 0.0
    %1887 = vmatpush1.msra.mxu0 0.0
    %1888 = vmatprep.subr.mxu0 0.0
    %1889 = vmatpush1.msra.mxu0 0.0
    %1890 = vmatprep.subr.mxu0 0.0
    %1891 = vmatpush1.msra.mxu0 0.0
    %1892 = vmatprep.subr.mxu0 0.0
    %1893 = vmatpush1.msra.mxu0 0.0
    %1894 = vmatprep.subr.mxu0 0.0
    %1895 = vmatpush1.msra.mxu0 0.0
    %1896 = vmatprep.subr.mxu0 0.0
    %1897 = vmatpush1.msra.mxu0 0.0
    %1898 = vmatprep.subr.mxu0 0.0
    %1899 = vmatpush1.msra.mxu0 0.0
    %1900 = vmatprep.subr.mxu0 0.0
    %1901 = vmatpush1.msra.mxu0 0.0
    %1902 = vmatprep.subr.mxu0 0.0
    %1903 = vmatpush1.msra.mxu0 0.0
    %1904 = vmatprep.subr.mxu0 0.0
    %1905 = vmatpush1.msra.mxu0 0.0
    %1906 = vmatprep.subr.mxu0 0.0
    %1907 = vmatpush1.msra.mxu0 0.0
    %1908 = vmatprep.subr.mxu0 0.0
    %1909 = vmatpush1.msra.mxu0 0.0
    %1910 = vmatprep.subr.mxu0 0.0
    %1911 = vmatpush1.msra.mxu0 0.0
    %1912 = vmatprep.subr.mxu0 0.0
    %1913 = vmatpush1.msra.mxu0 0.0
    %1914 = vmatprep.subr.mxu0 0.0
    %1915 = vmatpush1.msra.mxu0 0.0
    %1916 = vmatprep.subr.mxu0 0.0
    %1917 = vmatpush1.msra.mxu0 0.0
    %1918 = vmatprep.subr.mxu0 0.0
    %1919 = vmatpush1.msra.mxu0 0.0
    %1920 = vmatprep.subr.mxu0 0.0
    %1921 = vmatpush1.msra.mxu0 0.0
    %1922 = vmatprep.subr.mxu0 0.0
    %1923 = vmatpush1.msra.mxu0 0.0
    %1924 = vmatprep.subr.mxu0 0.0
    %1925 = vmatpush1.msra.mxu0 0.0
    %1926 = vmatprep.subr.mxu0 0.0
    %1927 = vmatpush1.msra.mxu0 0.0
    %1928 = vmatprep.mubr.f32.mxu0 0.0
    %v1929 = vand.u32 %v69, 4294901760
    %1930 = vmatmul.mubr.f32.gmra.mrb[0].mxu0 %v1929
    %v1931 = vpop.f32.mrb[0].mxu0
    %v1932 = vadd.f32 %v1641, %v1931
    %v1933 = vpop.f32.mrb[0].mxu0
    %v1934 = vadd.f32 %v1643, %v1933
    %1935 = vmatprep.mubr.f32.mxu0 0.0
    %v1936 = vand.u32 %v72, 4294901760
    %1937 = vmatmul.mubr.f32.gmra.mrb[0].mxu0 %v1936
    %v1938 = vpop.f32.mrb[0].mxu0
    %v1939 = vadd.f32 %v1648, %v1938
    %v1940 = vpop.f32.mrb[0].mxu0
    %v1941 = vadd.f32 %v1650, %v1940
    %1942 = vmatprep.mubr.f32.mxu0 0.0
    %v1943 = vand.u32 %v75, 4294901760
    %1944 = vmatmul.mubr.f32.gmra.mrb[0].mxu0 %v1943
    %v1945 = vpop.f32.mrb[0].mxu0
    %v1946 = vadd.f32 %v1655, %v1945
    %v1947 = vpop.f32.mrb[0].mxu0
    %v1948 = vadd.f32 %v1657, %v1947
    %1949 = vmatprep.mubr.f32.mxu0 0.0
    %v1950 = vand.u32 %v78, 4294901760
    %1951 = vmatmul.mubr.f32.gmra.mrb[0].mxu0 %v1950
    %v1952 = vpop.f32.mrb[0].mxu0
    %v1953 = vadd.f32 %v1662, %v1952
    %v1954 = vpop.f32.mrb[0].mxu0
    %v1955 = vadd.f32 %v1664, %v1954
    %1956 = vmatprep.mubr.f32.mxu0 0.0
    %v1957 = vand.u32 %v81, 4294901760
    %1958 = vmatmul.mubr.f32.gmra.mrb[0].mxu0 %v1957
    %v1959 = vpop.f32.mrb[0].mxu0
    %v1960 = vadd.f32 %v1669, %v1959
    %v1961 = vpop.f32.mrb[0].mxu0
    %v1962 = vadd.f32 %v1671, %v1961
    %1963 = vmatprep.mubr.f32.mxu0 0.0
    %v1964 = vand.u32 %v84, 4294901760
    %1965 = vmatmul.mubr.f32.gmra.mrb[0].mxu0 %v1964
    %v1966 = vpop.f32.mrb[0].mxu0
    %v1967 = vadd.f32 %v1676, %v1966
    %v1968 = vpop.f32.mrb[0].mxu0
    %v1969 = vadd.f32 %v1678, %v1968
    %1970 = vmatprep.mubr.f32.mxu0 0.0
    %v1971 = vand.u32 %v87, 4294901760
    %1972 = vmatmul.mubr.f32.gmra.mrb[0].mxu0 %v1971
    %v1973 = vpop.f32.mrb[0].mxu0
    %v1974 = vadd.f32 %v1683, %v1973
    %v1975 = vpop.f32.mrb[0].mxu0
    %v1976 = vadd.f32 %v1685, %v1975
    %1977 = vmatprep.mubr.f32.mxu0 0.0
    %v1978 = vand.u32 %v90, 4294901760
    %1979 = vmatmul.mubr.f32.gmra.mrb[0].mxu0 %v1978
    %v1980 = vpop.f32.mrb[0].mxu0
    %v1981 = vadd.f32 %v1690, %v1980
    %v1982 = vpop.f32.mrb[0].mxu0
    %v1983 = vadd.f32 %v1692, %v1982
    %1984 = vmatprep.mubr.f32.mxu0 0.0
    %v1985 = vand.u32 %v93, 4294901760
    %1986 = vmatmul.mubr.f32.gmra.mrb[0].mxu0 %v1985
    %v1987 = vpop.f32.mrb[0].mxu0
    %v1988 = vadd.f32 %v1697, %v1987
    %v1989 = vpop.f32.mrb[0].mxu0
    %v1990 = vadd.f32 %v1699, %v1989
    %1991 = vmatprep.mubr.f32.mxu0 0.0
    %v1992 = vand.u32 %v96, 4294901760
    %1993 = vmatmul.mubr.f32.gmra.mrb[0].mxu0 %v1992
    %v1994 = vpop.f32.mrb[0].mxu0
    %v1995 = vadd.f32 %v1704, %v1994
    %v1996 = vpop.f32.mrb[0].mxu0
    %v1997 = vadd.f32 %v1706, %v1996
    %1998 = vmatprep.mubr.f32.mxu0 0.0
    %v1999 = vand.u32 %v99, 4294901760
    %2000 = vmatmul.mubr.f32.gmra.mrb[0].mxu0 %v1999
    %v2001 = vpop.f32.mrb[0].mxu0
    %v2002 = vadd.f32 %v1711, %v2001
    %v2003 = vpop.f32.mrb[0].mxu0
    %v2004 = vadd.f32 %v1713, %v2003
    %2005 = vmatprep.mubr.f32.mxu0 0.0
    %v2006 = vand.u32 %v102, 4294901760
    %2007 = vmatmul.mubr.f32.gmra.mrb[0].mxu0 %v2006
    %v2008 = vpop.f32.mrb[0].mxu0
    %v2009 = vadd.f32 %v1718, %v2008
    %v2010 = vpop.f32.mrb[0].mxu0
    %v2011 = vadd.f32 %v1720, %v2010
    %2012 = vmatprep.mubr.f32.mxu0 0.0
    %v2013 = vand.u32 %v105, 4294901760
    %2014 = vmatmul.mubr.f32.gmra.mrb[0].mxu0 %v2013
    %v2015 = vpop.f32.mrb[0].mxu0
    %v2016 = vadd.f32 %v1725, %v2015
    %v2017 = vpop.f32.mrb[0].mxu0
    %v2018 = vadd.f32 %v1727, %v2017
    %2019 = vmatprep.mubr.f32.mxu0 0.0
    %v2020 = vand.u32 %v108, 4294901760
    %2021 = vmatmul.mubr.f32.gmra.mrb[0].mxu0 %v2020
    %v2022 = vpop.f32.mrb[0].mxu0
    %v2023 = vadd.f32 %v1732, %v2022
    %v2024 = vpop.f32.mrb[0].mxu0
    %v2025 = vadd.f32 %v1734, %v2024
    %2026 = vmatprep.mubr.f32.mxu0 0.0
    %v2027 = vand.u32 %v111, 4294901760
    %2028 = vmatmul.mubr.f32.gmra.mrb[0].mxu0 %v2027
    %v2029 = vpop.f32.mrb[0].mxu0
    %v2030 = vadd.f32 %v1739, %v2029
    %v2031 = vpop.f32.mrb[0].mxu0
    %v2032 = vadd.f32 %v1741, %v2031
    %2033 = vmatprep.mubr.f32.mxu0 0.0
    %v2034 = vand.u32 %v114, 4294901760
    %2035 = vmatmul.mubr.f32.gmra.mrb[0].mxu0 %v2034
    %v2036 = vpop.f32.mrb[0].mxu0
    %v2037 = vadd.f32 %v1746, %v2036
    %v2038 = vpop.f32.mrb[0].mxu0
    %v2039 = vadd.f32 %v1748, %v2038
    %2040 = vmatprep.mubr.f32.mxu0 0.0
    %v2041 = vand.u32 %v117, 4294901760
    %2042 = vmatmul.mubr.f32.gmra.mrb[0].mxu0 %v2041
    %v2043 = vpop.f32.mrb[0].mxu0
    %v2044 = vadd.f32 %v1753, %v2043
    %v2045 = vpop.f32.mrb[0].mxu0
    %v2046 = vadd.f32 %v1755, %v2045
    %2047 = vmatprep.mubr.f32.mxu0 0.0
    %v2048 = vand.u32 %v120, 4294901760
    %2049 = vmatmul.mubr.f32.gmra.mrb[0].mxu0 %v2048
    %v2050 = vpop.f32.mrb[0].mxu0
    %v2051 = vadd.f32 %v1760, %v2050
    %v2052 = vpop.f32.mrb[0].mxu0
    %v2053 = vadd.f32 %v1762, %v2052
    %2054 = vmatprep.mubr.f32.mxu0 0.0
    %v2055 = vand.u32 %v123, 4294901760
    %2056 = vmatmul.mubr.f32.gmra.mrb[0].mxu0 %v2055
    %v2057 = vpop.f32.mrb[0].mxu0
    %v2058 = vadd.f32 %v1767, %v2057
    %v2059 = vpop.f32.mrb[0].mxu0
    %v2060 = vadd.f32 %v1769, %v2059
    %2061 = vmatprep.mubr.f32.mxu0 0.0
    %v2062 = vand.u32 %v126, 4294901760
    %2063 = vmatmul.mubr.f32.gmra.mrb[0].mxu0 %v2062
    %v2064 = vpop.f32.mrb[0].mxu0
    %v2065 = vadd.f32 %v1774, %v2064
    %v2066 = vpop.f32.mrb[0].mxu0
    %v2067 = vadd.f32 %v1776, %v2066
    %2068 = vmatprep.mubr.f32.mxu0 0.0
    %v2069 = vand.u32 %v129, 4294901760
    %2070 = vmatmul.mubr.f32.gmra.mrb[0].mxu0 %v2069
    %v2071 = vpop.f32.mrb[0].mxu0
    %v2072 = vadd.f32 %v1781, %v2071
    %v2073 = vpop.f32.mrb[0].mxu0
    %v2074 = vadd.f32 %v1783, %v2073
    %2075 = vmatprep.mubr.f32.mxu0 0.0
    %v2076 = vand.u32 %v132, 4294901760
    %2077 = vmatmul.mubr.f32.gmra.mrb[0].mxu0 %v2076
    %v2078 = vpop.f32.mrb[0].mxu0
    %v2079 = vadd.f32 %v1788, %v2078
    %v2080 = vpop.f32.mrb[0].mxu0
    %v2081 = vadd.f32 %v1790, %v2080
    %2082 = vmatprep.mubr.f32.mxu0 0.0
    %v2083 = vand.u32 %v135, 4294901760
    %2084 = vmatmul.mubr.f32.gmra.mrb[0].mxu0 %v2083
    %v2085 = vpop.f32.mrb[0].mxu0
    %v2086 = vadd.f32 %v1795, %v2085
    %v2087 = vpop.f32.mrb[0].mxu0
    %v2088 = vadd.f32 %v1797, %v2087
    %2089 = vmatprep.mubr.f32.mxu0 0.0
    %v2090 = vand.u32 %v138, 4294901760
    %2091 = vmatmul.mubr.f32.gmra.mrb[0].mxu0 %v2090
    %v2092 = vpop.f32.mrb[0].mxu0
    %v2093 = vadd.f32 %v1802, %v2092
    %v2094 = vpop.f32.mrb[0].mxu0
    %v2095 = vadd.f32 %v1804, %v2094
    %2096 = vmatprep.mubr.f32.mxu0 0.0
    %v2097 = vand.u32 %v141, 4294901760
    %2098 = vmatmul.mubr.f32.gmra.mrb[0].mxu0 %v2097
    %v2099 = vpop.f32.mrb[0].mxu0
    %v2100 = vadd.f32 %v1809, %v2099
    %v2101 = vpop.f32.mrb[0].mxu0
    %v2102 = vadd.f32 %v1811, %v2101
    %2103 = vmatprep.mubr.f32.mxu0 0.0
    %v2104 = vand.u32 %v144, 4294901760
    %2105 = vmatmul.mubr.f32.gmra.mrb[0].mxu0 %v2104
    %v2106 = vpop.f32.mrb[0].mxu0
    %v2107 = vadd.f32 %v1816, %v2106
    %v2108 = vpop.f32.mrb[0].mxu0
    %v2109 = vadd.f32 %v1818, %v2108
    %2110 = vmatprep.mubr.f32.mxu0 0.0
    %v2111 = vand.u32 %v147, 4294901760
    %2112 = vmatmul.mubr.f32.gmra.mrb[0].mxu0 %v2111
    %v2113 = vpop.f32.mrb[0].mxu0
    %v2114 = vadd.f32 %v1823, %v2113
    %v2115 = vpop.f32.mrb[0].mxu0
    %v2116 = vadd.f32 %v1825, %v2115
    %2117 = vmatprep.mubr.f32.mxu0 0.0
    %v2118 = vand.u32 %v150, 4294901760
    %2119 = vmatmul.mubr.f32.gmra.mrb[0].mxu0 %v2118
    %v2120 = vpop.f32.mrb[0].mxu0
    %v2121 = vadd.f32 %v1830, %v2120
    %v2122 = vpop.f32.mrb[0].mxu0
    %v2123 = vadd.f32 %v1832, %v2122
    %2124 = vmatprep.mubr.f32.mxu0 0.0
    %v2125 = vand.u32 %v153, 4294901760
    %2126 = vmatmul.mubr.f32.gmra.mrb[0].mxu0 %v2125
    %v2127 = vpop.f32.mrb[0].mxu0
    %v2128 = vadd.f32 %v1837, %v2127
    %v2129 = vpop.f32.mrb[0].mxu0
    %v2130 = vadd.f32 %v1839, %v2129
    %2131 = vmatprep.mubr.f32.mxu0 0.0
    %v2132 = vand.u32 %v156, 4294901760
    %2133 = vmatmul.mubr.f32.gmra.mrb[0].mxu0 %v2132
    %v2134 = vpop.f32.mrb[0].mxu0
    %v2135 = vadd.f32 %v1844, %v2134
    %v2136 = vpop.f32.mrb[0].mxu0
    %v2137 = vadd.f32 %v1846, %v2136
    %2138 = vmatprep.mubr.f32.mxu0 0.0
    %v2139 = vand.u32 %v159, 4294901760
    %2140 = vmatmul.mubr.f32.gmra.mrb[0].mxu0 %v2139
    %v2141 = vpop.f32.mrb[0].mxu0
    %v2142 = vadd.f32 %v1851, %v2141
    %v2143 = vpop.f32.mrb[0].mxu0
    %v2144 = vadd.f32 %v1853, %v2143
    %2145 = vmatprep.mubr.f32.mxu0 0.0
    %v2146 = vand.u32 %v162, 4294901760
    %2147 = vmatmul.mubr.f32.gmra.mrb[0].mxu0 %v2146
    %v2148 = vpop.f32.mrb[0].mxu0
    %v2149 = vadd.f32 %v1858, %v2148
    %v2150 = vpop.f32.mrb[0].mxu0
    %v2151 = vadd.f32 %v1860, %v2150
    %2152 = vdwg.mxu0
    %v2153 = vmax.f32 %v1932, 0.0
    %v2154 = vmax.f32 %v1934, 0.0
    %v2155 = vmax.f32 %v1939, 0.0
    %v2156 = vmax.f32 %v1941, 0.0
    %v2157 = vmax.f32 %v1946, 0.0
    %v2158 = vmax.f32 %v1948, 0.0
    %v2159 = vmax.f32 %v1953, 0.0
    %v2160 = vmax.f32 %v1955, 0.0
    %v2161 = vmax.f32 %v1960, 0.0
    %v2162 = vmax.f32 %v1962, 0.0
    %v2163 = vmax.f32 %v1967, 0.0
    %v2164 = vmax.f32 %v1969, 0.0
    %v2165 = vmax.f32 %v1974, 0.0
    %v2166 = vmax.f32 %v1976, 0.0
    %v2167 = vmax.f32 %v1981, 0.0
    %v2168 = vmax.f32 %v1983, 0.0
    %v2169 = vmax.f32 %v1988, 0.0
    %v2170 = vmax.f32 %v1990, 0.0
    %v2171 = vmax.f32 %v1995, 0.0
    %v2172 = vmax.f32 %v1997, 0.0
    %v2173 = vmax.f32 %v2002, 0.0
    %v2174 = vmax.f32 %v2004, 0.0
    %v2175 = vmax.f32 %v2009, 0.0
    %v2176 = vmax.f32 %v2011, 0.0
    %v2177 = vmax.f32 %v2016, 0.0
    %v2178 = vmax.f32 %v2018, 0.0
    %v2179 = vmax.f32 %v2023, 0.0
    %v2180 = vmax.f32 %v2025, 0.0
    %v2181 = vmax.f32 %v2030, 0.0
    %v2182 = vmax.f32 %v2032, 0.0
    %v2183 = vmax.f32 %v2037, 0.0
    %v2184 = vmax.f32 %v2039, 0.0
    %v2185 = vmax.f32 %v2044, 0.0
    %v2186 = vmax.f32 %v2046, 0.0
    %v2187 = vmax.f32 %v2051, 0.0
    %v2188 = vmax.f32 %v2053, 0.0
    %v2189 = vmax.f32 %v2058, 0.0
    %v2190 = vmax.f32 %v2060, 0.0
    %v2191 = vmax.f32 %v2065, 0.0
    %v2192 = vmax.f32 %v2067, 0.0
    %v2193 = vmax.f32 %v2072, 0.0
    %v2194 = vmax.f32 %v2074, 0.0
    %v2195 = vmax.f32 %v2079, 0.0
    %v2196 = vmax.f32 %v2081, 0.0
    %v2197 = vmax.f32 %v2086, 0.0
    %v2198 = vmax.f32 %v2088, 0.0
    %v2199 = vmax.f32 %v2093, 0.0
    %v2200 = vmax.f32 %v2095, 0.0
    %v2201 = vmax.f32 %v2100, 0.0
    %v2202 = vmax.f32 %v2102, 0.0
    %v2203 = vmax.f32 %v2107, 0.0
    %v2204 = vmax.f32 %v2109, 0.0
    %v2205 = vmax.f32 %v2114, 0.0
    %v2206 = vmax.f32 %v2116, 0.0
    %v2207 = vmax.f32 %v2121, 0.0
    %v2208 = vmax.f32 %v2123, 0.0
    %v2209 = vmax.f32 %v2128, 0.0
    %v2210 = vmax.f32 %v2130, 0.0
    %v2211 = vmax.f32 %v2135, 0.0
    %v2212 = vmax.f32 %v2137, 0.0
    %v2213 = vmax.f32 %v2142, 0.0
    %v2214 = vmax.f32 %v2144, 0.0
    %v2215 = vmax.f32 %v2149, 0.0
    %v2216 = vmax.f32 %v2151, 0.0
    %v2217 = vld [vmem:[%s2] sm:$0xff]
    %v2218 = vld [vmem:[%s2 + $0x8] sm:$0xff]
    %v2219 = vld [vmem:[%s2 + $0x10] sm:$0xff]
    %v2220 = vld [vmem:[%s2 + $0x18] sm:$0xff]
    %v2221 = vld [vmem:[%s2 + $0x20] sm:$0xff]
    %v2222 = vld [vmem:[%s2 + $0x28] sm:$0xff]
    %v2223 = vld [vmem:[%s2 + $0x30] sm:$0xff]
    %v2224 = vld [vmem:[%s2 + $0x38] sm:$0xff]
    %v2225 = vld [vmem:[%s2 + $0x40] sm:$0xff]
    %v2226 = vld [vmem:[%s2 + $0x48] sm:$0xff]
    %v2227 = vld [vmem:[%s2 + $0x50] sm:$0xff]
    %v2228 = vld [vmem:[%s2 + $0x58] sm:$0xff]
    %v2229 = vld [vmem:[%s2 + $0x60] sm:$0xff]
    %v2230 = vld [vmem:[%s2 + $0x68] sm:$0xff]
    %v2231 = vld [vmem:[%s2 + $0x70] sm:$0xff]
    %v2232 = vld [vmem:[%s2 + $0x78] sm:$0xff]
    %v2233 = vld [vmem:[%s2 + $0x80] sm:$0xff]
    %v2234 = vld [vmem:[%s2 + $0x88] sm:$0xff]
    %v2235 = vld [vmem:[%s2 + $0x90] sm:$0xff]
    %v2236 = vld [vmem:[%s2 + $0x98] sm:$0xff]
    %v2237 = vld [vmem:[%s2 + $0xa0] sm:$0xff]
    %v2238 = vld [vmem:[%s2 + $0xa8] sm:$0xff]
    %v2239 = vld [vmem:[%s2 + $0xb0] sm:$0xff]
    %v2240 = vld [vmem:[%s2 + $0xb8] sm:$0xff]
    %v2241 = vld [vmem:[%s2 + $0xc0] sm:$0xff]
    %v2242 = vld [vmem:[%s2 + $0xc8] sm:$0xff]
    %v2243 = vld [vmem:[%s2 + $0xd0] sm:$0xff]
    %v2244 = vld [vmem:[%s2 + $0xd8] sm:$0xff]
    %v2245 = vld [vmem:[%s2 + $0xe0] sm:$0xff]
    %v2246 = vld [vmem:[%s2 + $0xe8] sm:$0xff]
    %v2247 = vld [vmem:[%s2 + $0xf0] sm:$0xff]
    %v2248 = vld [vmem:[%s2 + $0xf8] sm:$0xff]
    %v2249 = vld [vmem:[%s3] sm:$0xff]
    %v2250 = vld [vmem:[%s3 + $0x8] sm:$0xff]
    %v2251 = vld [vmem:[%s3 + $0x10] sm:$0xff]
    %v2252 = vld [vmem:[%s3 + $0x18] sm:$0xff]
    %v2253 = vld [vmem:[%s3 + $0x20] sm:$0xff]
    %v2254 = vld [vmem:[%s3 + $0x28] sm:$0xff]
    %v2255 = vld [vmem:[%s3 + $0x30] sm:$0xff]
    %v2256 = vld [vmem:[%s3 + $0x38] sm:$0xff]
    %v2257 = vld [vmem:[%s3 + $0x40] sm:$0xff]
    %v2258 = vld [vmem:[%s3 + $0x48] sm:$0xff]
    %v2259 = vld [vmem:[%s3 + $0x50] sm:$0xff]
    %v2260 = vld [vmem:[%s3 + $0x58] sm:$0xff]
    %v2261 = vld [vmem:[%s3 + $0x60] sm:$0xff]
    %v2262 = vld [vmem:[%s3 + $0x68] sm:$0xff]
    %v2263 = vld [vmem:[%s3 + $0x70] sm:$0xff]
    %v2264 = vld [vmem:[%s3 + $0x78] sm:$0xff]
    %2266 = vset.pattern.permute.xlu0 0
    %2267 = vperm.xlu0 %2266, %v2249
    %v2268 = vpop.permute.xlu0 %2267
    %2271 = vset.pattern.permute.xlu0 0
    %2272 = vperm.xlu0 %2271, %v2250
    %v2273 = vpop.permute.xlu0 %2272
    %2276 = vset.pattern.permute.xlu0 0
    %2277 = vperm.xlu0 %2276, %v2251
    %v2278 = vpop.permute.xlu0 %2277
    %2281 = vset.pattern.permute.xlu0 0
    %2282 = vperm.xlu0 %2281, %v2252
    %v2283 = vpop.permute.xlu0 %2282
    %2286 = vset.pattern.permute.xlu0 0
    %2287 = vperm.xlu0 %2286, %v2253
    %v2288 = vpop.permute.xlu0 %2287
    %2291 = vset.pattern.permute.xlu0 0
    %2292 = vperm.xlu0 %2291, %v2254
    %v2293 = vpop.permute.xlu0 %2292
    %2296 = vset.pattern.permute.xlu0 0
    %2297 = vperm.xlu0 %2296, %v2255
    %v2298 = vpop.permute.xlu0 %2297
    %2301 = vset.pattern.permute.xlu0 0
    %2302 = vperm.xlu0 %2301, %v2256
    %v2303 = vpop.permute.xlu0 %2302
    %2306 = vset.pattern.permute.xlu0 0
    %2307 = vperm.xlu0 %2306, %v2257
    %v2308 = vpop.permute.xlu0 %2307
    %2311 = vset.pattern.permute.xlu0 0
    %2312 = vperm.xlu0 %2311, %v2258
    %v2313 = vpop.permute.xlu0 %2312
    %2316 = vset.pattern.permute.xlu0 0
    %2317 = vperm.xlu0 %2316, %v2259
    %v2318 = vpop.permute.xlu0 %2317
    %2321 = vset.pattern.permute.xlu0 0
    %2322 = vperm.xlu0 %2321, %v2260
    %v2323 = vpop.permute.xlu0 %2322
    %2326 = vset.pattern.permute.xlu0 0
    %2327 = vperm.xlu0 %2326, %v2261
    %v2328 = vpop.permute.xlu0 %2327
    %2331 = vset.pattern.permute.xlu0 0
    %2332 = vperm.xlu0 %2331, %v2262
    %v2333 = vpop.permute.xlu0 %2332
    %2336 = vset.pattern.permute.xlu0 0
    %2337 = vperm.xlu0 %2336, %v2263
    %v2338 = vpop.permute.xlu0 %2337
    %2341 = vset.pattern.permute.xlu0 0
    %2342 = vperm.xlu0 %2341, %v2264
    %v2343 = vpop.permute.xlu0 %2342
    %v2345 = vand.u32 %v2154, 4294901760
    %2346 = vmatprep.subr.mxu0 %v2345
    %v2347 = vand.u32 %v2153, 4294901760
    %2348 = vmatpush1.msra.mxu0 %v2347
    %v2349 = vand.u32 %v2156, 4294901760
    %2350 = vmatprep.subr.mxu0 %v2349
    %v2351 = vand.u32 %v2155, 4294901760
    %2352 = vmatpush1.msra.mxu0 %v2351
    %v2353 = vand.u32 %v2158, 4294901760
    %2354 = vmatprep.subr.mxu0 %v2353
    %v2355 = vand.u32 %v2157, 4294901760
    %2356 = vmatpush1.msra.mxu0 %v2355
    %v2357 = vand.u32 %v2160, 4294901760
    %2358 = vmatprep.subr.mxu0 %v2357
    %v2359 = vand.u32 %v2159, 4294901760
    %2360 = vmatpush1.msra.mxu0 %v2359
    %v2361 = vand.u32 %v2162, 4294901760
    %2362 = vmatprep.subr.mxu0 %v2361
    %v2363 = vand.u32 %v2161, 4294901760
    %2364 = vmatpush1.msra.mxu0 %v2363
    %v2365 = vand.u32 %v2164, 4294901760
    %2366 = vmatprep.subr.mxu0 %v2365
    %v2367 = vand.u32 %v2163, 4294901760
    %2368 = vmatpush1.msra.mxu0 %v2367
    %v2369 = vand.u32 %v2166, 4294901760
    %2370 = vmatprep.subr.mxu0 %v2369
    %v2371 = vand.u32 %v2165, 4294901760
    %2372 = vmatpush1.msra.mxu0 %v2371
    %v2373 = vand.u32 %v2168, 4294901760
    %2374 = vmatprep.subr.mxu0 %v2373
    %v2375 = vand.u32 %v2167, 4294901760
    %2376 = vmatpush1.msra.mxu0 %v2375
    %v2377 = vand.u32 %v2170, 4294901760
    %2378 = vmatprep.subr.mxu0 %v2377
    %v2379 = vand.u32 %v2169, 4294901760
    %2380 = vmatpush1.msra.mxu0 %v2379
    %v2381 = vand.u32 %v2172, 4294901760
    %2382 = vmatprep.subr.mxu0 %v2381
    %v2383 = vand.u32 %v2171, 4294901760
    %2384 = vmatpush1.msra.mxu0 %v2383
    %v2385 = vand.u32 %v2174, 4294901760
    %2386 = vmatprep.subr.mxu0 %v2385
    %v2387 = vand.u32 %v2173, 4294901760
    %2388 = vmatpush1.msra.mxu0 %v2387
    %v2389 = vand.u32 %v2176, 4294901760
    %2390 = vmatprep.subr.mxu0 %v2389
    %v2391 = vand.u32 %v2175, 4294901760
    %2392 = vmatpush1.msra.mxu0 %v2391
    %v2393 = vand.u32 %v2178, 4294901760
    %2394 = vmatprep.subr.mxu0 %v2393
    %v2395 = vand.u32 %v2177, 4294901760
    %2396 = vmatpush1.msra.mxu0 %v2395
    %v2397 = vand.u32 %v2180, 4294901760
    %2398 = vmatprep.subr.mxu0 %v2397
    %v2399 = vand.u32 %v2179, 4294901760
    %2400 = vmatpush1.msra.mxu0 %v2399
    %v2401 = vand.u32 %v2182, 4294901760
    %2402 = vmatprep.subr.mxu0 %v2401
    %v2403 = vand.u32 %v2181, 4294901760
    %2404 = vmatpush1.msra.mxu0 %v2403
    %v2405 = vand.u32 %v2184, 4294901760
    %2406 = vmatprep.subr.mxu0 %v2405
    %v2407 = vand.u32 %v2183, 4294901760
    %2408 = vmatpush1.msra.mxu0 %v2407
    %v2409 = vand.u32 %v2186, 4294901760
    %2410 = vmatprep.subr.mxu0 %v2409
    %v2411 = vand.u32 %v2185, 4294901760
    %2412 = vmatpush1.msra.mxu0 %v2411
    %v2413 = vand.u32 %v2188, 4294901760
    %2414 = vmatprep.subr.mxu0 %v2413
    %v2415 = vand.u32 %v2187, 4294901760
    %2416 = vmatpush1.msra.mxu0 %v2415
    %v2417 = vand.u32 %v2190, 4294901760
    %2418 = vmatprep.subr.mxu0 %v2417
    %v2419 = vand.u32 %v2189, 4294901760
    %2420 = vmatpush1.msra.mxu0 %v2419
    %v2421 = vand.u32 %v2192, 4294901760
    %2422 = vmatprep.subr.mxu0 %v2421
    %v2423 = vand.u32 %v2191, 4294901760
    %2424 = vmatpush1.msra.mxu0 %v2423
    %v2425 = vand.u32 %v2194, 4294901760
    %2426 = vmatprep.subr.mxu0 %v2425
    %v2427 = vand.u32 %v2193, 4294901760
    %2428 = vmatpush1.msra.mxu0 %v2427
    %v2429 = vand.u32 %v2196, 4294901760
    %2430 = vmatprep.subr.mxu0 %v2429
    %v2431 = vand.u32 %v2195, 4294901760
    %2432 = vmatpush1.msra.mxu0 %v2431
    %v2433 = vand.u32 %v2198, 4294901760
    %2434 = vmatprep.subr.mxu0 %v2433
    %v2435 = vand.u32 %v2197, 4294901760
    %2436 = vmatpush1.msra.mxu0 %v2435
    %v2437 = vand.u32 %v2200, 4294901760
    %2438 = vmatprep.subr.mxu0 %v2437
    %v2439 = vand.u32 %v2199, 4294901760
    %2440 = vmatpush1.msra.mxu0 %v2439
    %v2441 = vand.u32 %v2202, 4294901760
    %2442 = vmatprep.subr.mxu0 %v2441
    %v2443 = vand.u32 %v2201, 4294901760
    %2444 = vmatpush1.msra.mxu0 %v2443
    %v2445 = vand.u32 %v2204, 4294901760
    %2446 = vmatprep.subr.mxu0 %v2445
    %v2447 = vand.u32 %v2203, 4294901760
    %2448 = vmatpush1.msra.mxu0 %v2447
    %v2449 = vand.u32 %v2206, 4294901760
    %2450 = vmatprep.subr.mxu0 %v2449
    %v2451 = vand.u32 %v2205, 4294901760
    %2452 = vmatpush1.msra.mxu0 %v2451
    %v2453 = vand.u32 %v2208, 4294901760
    %2454 = vmatprep.subr.mxu0 %v2453
    %v2455 = vand.u32 %v2207, 4294901760
    %2456 = vmatpush1.msra.mxu0 %v2455
    %v2457 = vand.u32 %v2210, 4294901760
    %2458 = vmatprep.subr.mxu0 %v2457
    %v2459 = vand.u32 %v2209, 4294901760
    %2460 = vmatpush1.msra.mxu0 %v2459
    %v2461 = vand.u32 %v2212, 4294901760
    %2462 = vmatprep.subr.mxu0 %v2461
    %v2463 = vand.u32 %v2211, 4294901760
    %2464 = vmatpush1.msra.mxu0 %v2463
    %v2465 = vand.u32 %v2214, 4294901760
    %2466 = vmatprep.subr.mxu0 %v2465
    %v2467 = vand.u32 %v2213, 4294901760
    %2468 = vmatpush1.msra.mxu0 %v2467
    %v2469 = vand.u32 %v2216, 4294901760
    %2470 = vmatprep.subr.mxu0 %v2469
    %v2471 = vand.u32 %v2215, 4294901760
    %2472 = vmatpush1.msra.mxu0 %v2471
    %v2473 = vand.u32 %v2218, 4294901760
    %v2474 = vsub.f32 %v2218, %v2473
    %v2475 = vand.u32 %v2474, 4294901760
    %v2476 = vsub.f32 %v2474, %v2475
    %v2477 = vand.u32 %v2476, 4294901760
    %2478 = vmatprep.mubr.f32.mxu0 %v2477
    %v2479 = vand.u32 %v2217, 4294901760
    %v2480 = vsub.f32 %v2217, %v2479
    %v2481 = vand.u32 %v2480, 4294901760
    %v2482 = vsub.f32 %v2480, %v2481
    %v2483 = vand.u32 %v2482, 4294901760
    %2484 = vmatmul.mubr.f32.gmra.mrb[0].mxu0 %v2483
    %v2485 = vpop.f32.mrb[0].mxu0
    %v2486 = vadd.f32 %v2268, %v2485
    %v2487 = vpop.f32.mrb[0].mxu0
    %v2488 = vadd.f32 %v2268, %v2487
    %v2489 = vand.u32 %v2220, 4294901760
    %v2490 = vsub.f32 %v2220, %v2489
    %v2491 = vand.u32 %v2490, 4294901760
    %v2492 = vsub.f32 %v2490, %v2491
    %v2493 = vand.u32 %v2492, 4294901760
    %2494 = vmatprep.mubr.f32.mxu0 %v2493
    %v2495 = vand.u32 %v2219, 4294901760
    %v2496 = vsub.f32 %v2219, %v2495
    %v2497 = vand.u32 %v2496, 4294901760
    %v2498 = vsub.f32 %v2496, %v2497
    %v2499 = vand.u32 %v2498, 4294901760
    %2500 = vmatmul.mubr.f32.gmra.mrb[0].mxu0 %v2499
    %v2501 = vpop.f32.mrb[0].mxu0
    %v2502 = vadd.f32 %v2273, %v2501
    %v2503 = vpop.f32.mrb[0].mxu0
    %v2504 = vadd.f32 %v2273, %v2503
    %v2505 = vand.u32 %v2222, 4294901760
    %v2506 = vsub.f32 %v2222, %v2505
    %v2507 = vand.u32 %v2506, 4294901760
    %v2508 = vsub.f32 %v2506, %v2507
    %v2509 = vand.u32 %v2508, 4294901760
    %2510 = vmatprep.mubr.f32.mxu0 %v2509
    %v2511 = vand.u32 %v2221, 4294901760
    %v2512 = vsub.f32 %v2221, %v2511
    %v2513 = vand.u32 %v2512, 4294901760
    %v2514 = vsub.f32 %v2512, %v2513
    %v2515 = vand.u32 %v2514, 4294901760
    %2516 = vmatmul.mubr.f32.gmra.mrb[0].mxu0 %v2515
    %v2517 = vpop.f32.mrb[0].mxu0
    %v2518 = vadd.f32 %v2278, %v2517
    %v2519 = vpop.f32.mrb[0].mxu0
    %v2520 = vadd.f32 %v2278, %v2519
    %v2521 = vand.u32 %v2224, 4294901760
    %v2522 = vsub.f32 %v2224, %v2521
    %v2523 = vand.u32 %v2522, 4294901760
    %v2524 = vsub.f32 %v2522, %v2523
    %v2525 = vand.u32 %v2524, 4294901760
    %2526 = vmatprep.mubr.f32.mxu0 %v2525
    %v2527 = vand.u32 %v2223, 4294901760
    %v2528 = vsub.f32 %v2223, %v2527
    %v2529 = vand.u32 %v2528, 4294901760
    %v2530 = vsub.f32 %v2528, %v2529
    %v2531 = vand.u32 %v2530, 4294901760
    %2532 = vmatmul.mubr.f32.gmra.mrb[0].mxu0 %v2531
    %v2533 = vpop.f32.mrb[0].mxu0
    %v2534 = vadd.f32 %v2283, %v2533
    %v2535 = vpop.f32.mrb[0].mxu0
    %v2536 = vadd.f32 %v2283, %v2535
    %v2537 = vand.u32 %v2226, 4294901760
    %v2538 = vsub.f32 %v2226, %v2537
    %v2539 = vand.u32 %v2538, 4294901760
    %v2540 = vsub.f32 %v2538, %v2539
    %v2541 = vand.u32 %v2540, 4294901760
    %2542 = vmatprep.mubr.f32.mxu0 %v2541
    %v2543 = vand.u32 %v2225, 4294901760
    %v2544 = vsub.f32 %v2225, %v2543
    %v2545 = vand.u32 %v2544, 4294901760
    %v2546 = vsub.f32 %v2544, %v2545
    %v2547 = vand.u32 %v2546, 4294901760
    %2548 = vmatmul.mubr.f32.gmra.mrb[0].mxu0 %v2547
    %v2549 = vpop.f32.mrb[0].mxu0
    %v2550 = vadd.f32 %v2288, %v2549
    %v2551 = vpop.f32.mrb[0].mxu0
    %v2552 = vadd.f32 %v2288, %v2551
    %v2553 = vand.u32 %v2228, 4294901760
    %v2554 = vsub.f32 %v2228, %v2553
    %v2555 = vand.u32 %v2554, 4294901760
    %v2556 = vsub.f32 %v2554, %v2555
    %v2557 = vand.u32 %v2556, 4294901760
    %2558 = vmatprep.mubr.f32.mxu0 %v2557
    %v2559 = vand.u32 %v2227, 4294901760
    %v2560 = vsub.f32 %v2227, %v2559
    %v2561 = vand.u32 %v2560, 4294901760
    %v2562 = vsub.f32 %v2560, %v2561
    %v2563 = vand.u32 %v2562, 4294901760
    %2564 = vmatmul.mubr.f32.gmra.mrb[0].mxu0 %v2563
    %v2565 = vpop.f32.mrb[0].mxu0
    %v2566 = vadd.f32 %v2293, %v2565
    %v2567 = vpop.f32.mrb[0].mxu0
    %v2568 = vadd.f32 %v2293, %v2567
    %v2569 = vand.u32 %v2230, 4294901760
    %v2570 = vsub.f32 %v2230, %v2569
    %v2571 = vand.u32 %v2570, 4294901760
    %v2572 = vsub.f32 %v2570, %v2571
    %v2573 = vand.u32 %v2572, 4294901760
    %2574 = vmatprep.mubr.f32.mxu0 %v2573
    %v2575 = vand.u32 %v2229, 4294901760
    %v2576 = vsub.f32 %v2229, %v2575
    %v2577 = vand.u32 %v2576, 4294901760
    %v2578 = vsub.f32 %v2576, %v2577
    %v2579 = vand.u32 %v2578, 4294901760
    %2580 = vmatmul.mubr.f32.gmra.mrb[0].mxu0 %v2579
    %v2581 = vpop.f32.mrb[0].mxu0
    %v2582 = vadd.f32 %v2298, %v2581
    %v2583 = vpop.f32.mrb[0].mxu0
    %v2584 = vadd.f32 %v2298, %v2583
    %v2585 = vand.u32 %v2232, 4294901760
    %v2586 = vsub.f32 %v2232, %v2585
    %v2587 = vand.u32 %v2586, 4294901760
    %v2588 = vsub.f32 %v2586, %v2587
    %v2589 = vand.u32 %v2588, 4294901760
    %2590 = vmatprep.mubr.f32.mxu0 %v2589
    %v2591 = vand.u32 %v2231, 4294901760
    %v2592 = vsub.f32 %v2231, %v2591
    %v2593 = vand.u32 %v2592, 4294901760
    %v2594 = vsub.f32 %v2592, %v2593
    %v2595 = vand.u32 %v2594, 4294901760
    %2596 = vmatmul.mubr.f32.gmra.mrb[0].mxu0 %v2595
    %v2597 = vpop.f32.mrb[0].mxu0
    %v2598 = vadd.f32 %v2303, %v2597
    %v2599 = vpop.f32.mrb[0].mxu0
    %v2600 = vadd.f32 %v2303, %v2599
    %v2601 = vand.u32 %v2234, 4294901760
    %v2602 = vsub.f32 %v2234, %v2601
    %v2603 = vand.u32 %v2602, 4294901760
    %v2604 = vsub.f32 %v2602, %v2603
    %v2605 = vand.u32 %v2604, 4294901760
    %2606 = vmatprep.mubr.f32.mxu0 %v2605
    %v2607 = vand.u32 %v2233, 4294901760
    %v2608 = vsub.f32 %v2233, %v2607
    %v2609 = vand.u32 %v2608, 4294901760
    %v2610 = vsub.f32 %v2608, %v2609
    %v2611 = vand.u32 %v2610, 4294901760
    %2612 = vmatmul.mubr.f32.gmra.mrb[0].mxu0 %v2611
    %v2613 = vpop.f32.mrb[0].mxu0
    %v2614 = vadd.f32 %v2308, %v2613
    %v2615 = vpop.f32.mrb[0].mxu0
    %v2616 = vadd.f32 %v2308, %v2615
    %v2617 = vand.u32 %v2236, 4294901760
    %v2618 = vsub.f32 %v2236, %v2617
    %v2619 = vand.u32 %v2618, 4294901760
    %v2620 = vsub.f32 %v2618, %v2619
    %v2621 = vand.u32 %v2620, 4294901760
    %2622 = vmatprep.mubr.f32.mxu0 %v2621
    %v2623 = vand.u32 %v2235, 4294901760
    %v2624 = vsub.f32 %v2235, %v2623
    %v2625 = vand.u32 %v2624, 4294901760
    %v2626 = vsub.f32 %v2624, %v2625
    %v2627 = vand.u32 %v2626, 4294901760
    %2628 = vmatmul.mubr.f32.gmra.mrb[0].mxu0 %v2627
    %v2629 = vpop.f32.mrb[0].mxu0
    %v2630 = vadd.f32 %v2313, %v2629
    %v2631 = vpop.f32.mrb[0].mxu0
    %v2632 = vadd.f32 %v2313, %v2631
    %v2633 = vand.u32 %v2238, 4294901760
    %v2634 = vsub.f32 %v2238, %v2633
    %v2635 = vand.u32 %v2634, 4294901760
    %v2636 = vsub.f32 %v2634, %v2635
    %v2637 = vand.u32 %v2636, 4294901760
    %2638 = vmatprep.mubr.f32.mxu0 %v2637
    %v2639 = vand.u32 %v2237, 4294901760
    %v2640 = vsub.f32 %v2237, %v2639
    %v2641 = vand.u32 %v2640, 4294901760
    %v2642 = vsub.f32 %v2640, %v2641
    %v2643 = vand.u32 %v2642, 4294901760
    %2644 = vmatmul.mubr.f32.gmra.mrb[0].mxu0 %v2643
    %v2645 = vpop.f32.mrb[0].mxu0
    %v2646 = vadd.f32 %v2318, %v2645
    %v2647 = vpop.f32.mrb[0].mxu0
    %v2648 = vadd.f32 %v2318, %v2647
    %v2649 = vand.u32 %v2240, 4294901760
    %v2650 = vsub.f32 %v2240, %v2649
    %v2651 = vand.u32 %v2650, 4294901760
    %v2652 = vsub.f32 %v2650, %v2651
    %v2653 = vand.u32 %v2652, 4294901760
    %2654 = vmatprep.mubr.f32.mxu0 %v2653
    %v2655 = vand.u32 %v2239, 4294901760
    %v2656 = vsub.f32 %v2239, %v2655
    %v2657 = vand.u32 %v2656, 4294901760
    %v2658 = vsub.f32 %v2656, %v2657
    %v2659 = vand.u32 %v2658, 4294901760
    %2660 = vmatmul.mubr.f32.gmra.mrb[0].mxu0 %v2659
    %v2661 = vpop.f32.mrb[0].mxu0
    %v2662 = vadd.f32 %v2323, %v2661
    %v2663 = vpop.f32.mrb[0].mxu0
    %v2664 = vadd.f32 %v2323, %v2663
    %v2665 = vand.u32 %v2242, 4294901760
    %v2666 = vsub.f32 %v2242, %v2665
    %v2667 = vand.u32 %v2666, 4294901760
    %v2668 = vsub.f32 %v2666, %v2667
    %v2669 = vand.u32 %v2668, 4294901760
    %2670 = vmatprep.mubr.f32.mxu0 %v2669
    %v2671 = vand.u32 %v2241, 4294901760
    %v2672 = vsub.f32 %v2241, %v2671
    %v2673 = vand.u32 %v2672, 4294901760
    %v2674 = vsub.f32 %v2672, %v2673
    %v2675 = vand.u32 %v2674, 4294901760
    %2676 = vmatmul.mubr.f32.gmra.mrb[0].mxu0 %v2675
    %v2677 = vpop.f32.mrb[0].mxu0
    %v2678 = vadd.f32 %v2328, %v2677
    %v2679 = vpop.f32.mrb[0].mxu0
    %v2680 = vadd.f32 %v2328, %v2679
    %v2681 = vand.u32 %v2244, 4294901760
    %v2682 = vsub.f32 %v2244, %v2681
    %v2683 = vand.u32 %v2682, 4294901760
    %v2684 = vsub.f32 %v2682, %v2683
    %v2685 = vand.u32 %v2684, 4294901760
    %2686 = vmatprep.mubr.f32.mxu0 %v2685
    %v2687 = vand.u32 %v2243, 4294901760
    %v2688 = vsub.f32 %v2243, %v2687
    %v2689 = vand.u32 %v2688, 4294901760
    %v2690 = vsub.f32 %v2688, %v2689
    %v2691 = vand.u32 %v2690, 4294901760
    %2692 = vmatmul.mubr.f32.gmra.mrb[0].mxu0 %v2691
    %v2693 = vpop.f32.mrb[0].mxu0
    %v2694 = vadd.f32 %v2333, %v2693
    %v2695 = vpop.f32.mrb[0].mxu0
    %v2696 = vadd.f32 %v2333, %v2695
    %v2697 = vand.u32 %v2246, 4294901760
    %v2698 = vsub.f32 %v2246, %v2697
    %v2699 = vand.u32 %v2698, 4294901760
    %v2700 = vsub.f32 %v2698, %v2699
    %v2701 = vand.u32 %v2700, 4294901760
    %2702 = vmatprep.mubr.f32.mxu0 %v2701
    %v2703 = vand.u32 %v2245, 4294901760
    %v2704 = vsub.f32 %v2245, %v2703
    %v2705 = vand.u32 %v2704, 4294901760
    %v2706 = vsub.f32 %v2704, %v2705
    %v2707 = vand.u32 %v2706, 4294901760
    %2708 = vmatmul.mubr.f32.gmra.mrb[0].mxu0 %v2707
    %v2709 = vpop.f32.mrb[0].mxu0
    %v2710 = vadd.f32 %v2338, %v2709
    %v2711 = vpop.f32.mrb[0].mxu0
    %v2712 = vadd.f32 %v2338, %v2711
    %v2713 = vand.u32 %v2248, 4294901760
    %v2714 = vsub.f32 %v2248, %v2713
    %v2715 = vand.u32 %v2714, 4294901760
    %v2716 = vsub.f32 %v2714, %v2715
    %v2717 = vand.u32 %v2716, 4294901760
    %2718 = vmatprep.mubr.f32.mxu0 %v2717
    %v2719 = vand.u32 %v2247, 4294901760
    %v2720 = vsub.f32 %v2247, %v2719
    %v2721 = vand.u32 %v2720, 4294901760
    %v2722 = vsub.f32 %v2720, %v2721
    %v2723 = vand.u32 %v2722, 4294901760
    %2724 = vmatmul.mubr.f32.gmra.mrb[0].mxu0 %v2723
    %v2725 = vpop.f32.mrb[0].mxu0
    %v2726 = vadd.f32 %v2343, %v2725
    %v2727 = vpop.f32.mrb[0].mxu0
    %v2728 = vadd.f32 %v2343, %v2727
    %2729 = vdwg.mxu0
    %v2730 = vand.u32 %v2154, 4294901760
    %v2731 = vsub.f32 %v2154, %v2730
    %v2732 = vand.u32 %v2731, 4294901760
    %v2733 = vsub.f32 %v2731, %v2732
    %v2734 = vand.u32 %v2733, 4294901760
    %2735 = vmatprep.subr.mxu0 %v2734
    %v2736 = vand.u32 %v2153, 4294901760
    %v2737 = vsub.f32 %v2153, %v2736
    %v2738 = vand.u32 %v2737, 4294901760
    %v2739 = vsub.f32 %v2737, %v2738
    %v2740 = vand.u32 %v2739, 4294901760
    %2741 = vmatpush1.msra.mxu0 %v2740
    %v2742 = vand.u32 %v2156, 4294901760
    %v2743 = vsub.f32 %v2156, %v2742
    %v2744 = vand.u32 %v2743, 4294901760
    %v2745 = vsub.f32 %v2743, %v2744
    %v2746 = vand.u32 %v2745, 4294901760
    %2747 = vmatprep.subr.mxu0 %v2746
    %v2748 = vand.u32 %v2155, 4294901760
    %v2749 = vsub.f32 %v2155, %v2748
    %v2750 = vand.u32 %v2749, 4294901760
    %v2751 = vsub.f32 %v2749, %v2750
    %v2752 = vand.u32 %v2751, 4294901760
    %2753 = vmatpush1.msra.mxu0 %v2752
    %v2754 = vand.u32 %v2158, 4294901760
    %v2755 = vsub.f32 %v2158, %v2754
    %v2756 = vand.u32 %v2755, 4294901760
    %v2757 = vsub.f32 %v2755, %v2756
    %v2758 = vand.u32 %v2757, 4294901760
    %2759 = vmatprep.subr.mxu0 %v2758
    %v2760 = vand.u32 %v2157, 4294901760
    %v2761 = vsub.f32 %v2157, %v2760
    %v2762 = vand.u32 %v2761, 4294901760
    %v2763 = vsub.f32 %v2761, %v2762
    %v2764 = vand.u32 %v2763, 4294901760
    %2765 = vmatpush1.msra.mxu0 %v2764
    %v2766 = vand.u32 %v2160, 4294901760
    %v2767 = vsub.f32 %v2160, %v2766
    %v2768 = vand.u32 %v2767, 4294901760
    %v2769 = vsub.f32 %v2767, %v2768
    %v2770 = vand.u32 %v2769, 4294901760
    %2771 = vmatprep.subr.mxu0 %v2770
    %v2772 = vand.u32 %v2159, 4294901760
    %v2773 = vsub.f32 %v2159, %v2772
    %v2774 = vand.u32 %v2773, 4294901760
    %v2775 = vsub.f32 %v2773, %v2774
    %v2776 = vand.u32 %v2775, 4294901760
    %2777 = vmatpush1.msra.mxu0 %v2776
    %v2778 = vand.u32 %v2162, 4294901760
    %v2779 = vsub.f32 %v2162, %v2778
    %v2780 = vand.u32 %v2779, 4294901760
    %v2781 = vsub.f32 %v2779, %v2780
    %v2782 = vand.u32 %v2781, 4294901760
    %2783 = vmatprep.subr.mxu0 %v2782
    %v2784 = vand.u32 %v2161, 4294901760
    %v2785 = vsub.f32 %v2161, %v2784
    %v2786 = vand.u32 %v2785, 4294901760
    %v2787 = vsub.f32 %v2785, %v2786
    %v2788 = vand.u32 %v2787, 4294901760
    %2789 = vmatpush1.msra.mxu0 %v2788
    %v2790 = vand.u32 %v2164, 4294901760
    %v2791 = vsub.f32 %v2164, %v2790
    %v2792 = vand.u32 %v2791, 4294901760
    %v2793 = vsub.f32 %v2791, %v2792
    %v2794 = vand.u32 %v2793, 4294901760
    %2795 = vmatprep.subr.mxu0 %v2794
    %v2796 = vand.u32 %v2163, 4294901760
    %v2797 = vsub.f32 %v2163, %v2796
    %v2798 = vand.u32 %v2797, 4294901760
    %v2799 = vsub.f32 %v2797, %v2798
    %v2800 = vand.u32 %v2799, 4294901760
    %2801 = vmatpush1.msra.mxu0 %v2800
    %v2802 = vand.u32 %v2166, 4294901760
    %v2803 = vsub.f32 %v2166, %v2802
    %v2804 = vand.u32 %v2803, 4294901760
    %v2805 = vsub.f32 %v2803, %v2804
    %v2806 = vand.u32 %v2805, 4294901760
    %2807 = vmatprep.subr.mxu0 %v2806
    %v2808 = vand.u32 %v2165, 4294901760
    %v2809 = vsub.f32 %v2165, %v2808
    %v2810 = vand.u32 %v2809, 4294901760
    %v2811 = vsub.f32 %v2809, %v2810
    %v2812 = vand.u32 %v2811, 4294901760
    %2813 = vmatpush1.msra.mxu0 %v2812
    %v2814 = vand.u32 %v2168, 4294901760
    %v2815 = vsub.f32 %v2168, %v2814
    %v2816 = vand.u32 %v2815, 4294901760
    %v2817 = vsub.f32 %v2815, %v2816
    %v2818 = vand.u32 %v2817, 4294901760
    %2819 = vmatprep.subr.mxu0 %v2818
    %v2820 = vand.u32 %v2167, 4294901760
    %v2821 = vsub.f32 %v2167, %v2820
    %v2822 = vand.u32 %v2821, 4294901760
    %v2823 = vsub.f32 %v2821, %v2822
    %v2824 = vand.u32 %v2823, 4294901760
    %2825 = vmatpush1.msra.mxu0 %v2824
    %v2826 = vand.u32 %v2170, 4294901760
    %v2827 = vsub.f32 %v2170, %v2826
    %v2828 = vand.u32 %v2827, 4294901760
    %v2829 = vsub.f32 %v2827, %v2828
    %v2830 = vand.u32 %v2829, 4294901760
    %2831 = vmatprep.subr.mxu0 %v2830
    %v2832 = vand.u32 %v2169, 4294901760
    %v2833 = vsub.f32 %v2169, %v2832
    %v2834 = vand.u32 %v2833, 4294901760
    %v2835 = vsub.f32 %v2833, %v2834
    %v2836 = vand.u32 %v2835, 4294901760
    %2837 = vmatpush1.msra.mxu0 %v2836
    %v2838 = vand.u32 %v2172, 4294901760
    %v2839 = vsub.f32 %v2172, %v2838
    %v2840 = vand.u32 %v2839, 4294901760
    %v2841 = vsub.f32 %v2839, %v2840
    %v2842 = vand.u32 %v2841, 4294901760
    %2843 = vmatprep.subr.mxu0 %v2842
    %v2844 = vand.u32 %v2171, 4294901760
    %v2845 = vsub.f32 %v2171, %v2844
    %v2846 = vand.u32 %v2845, 4294901760
    %v2847 = vsub.f32 %v2845, %v2846
    %v2848 = vand.u32 %v2847, 4294901760
    %2849 = vmatpush1.msra.mxu0 %v2848
    %v2850 = vand.u32 %v2174, 4294901760
    %v2851 = vsub.f32 %v2174, %v2850
    %v2852 = vand.u32 %v2851, 4294901760
    %v2853 = vsub.f32 %v2851, %v2852
    %v2854 = vand.u32 %v2853, 4294901760
    %2855 = vmatprep.subr.mxu0 %v2854
    %v2856 = vand.u32 %v2173, 4294901760
    %v2857 = vsub.f32 %v2173, %v2856
    %v2858 = vand.u32 %v2857, 4294901760
    %v2859 = vsub.f32 %v2857, %v2858
    %v2860 = vand.u32 %v2859, 4294901760
    %2861 = vmatpush1.msra.mxu0 %v2860
    %v2862 = vand.u32 %v2176, 4294901760
    %v2863 = vsub.f32 %v2176, %v2862
    %v2864 = vand.u32 %v2863, 4294901760
    %v2865 = vsub.f32 %v2863, %v2864
    %v2866 = vand.u32 %v2865, 4294901760
    %2867 = vmatprep.subr.mxu0 %v2866
    %v2868 = vand.u32 %v2175, 4294901760
    %v2869 = vsub.f32 %v2175, %v2868
    %v2870 = vand.u32 %v2869, 4294901760
    %v2871 = vsub.f32 %v2869, %v2870
    %v2872 = vand.u32 %v2871, 4294901760
    %2873 = vmatpush1.msra.mxu0 %v2872
    %v2874 = vand.u32 %v2178, 4294901760
    %v2875 = vsub.f32 %v2178, %v2874
    %v2876 = vand.u32 %v2875, 4294901760
    %v2877 = vsub.f32 %v2875, %v2876
    %v2878 = vand.u32 %v2877, 4294901760
    %2879 = vmatprep.subr.mxu0 %v2878
    %v2880 = vand.u32 %v2177, 4294901760
    %v2881 = vsub.f32 %v2177, %v2880
    %v2882 = vand.u32 %v2881, 4294901760
    %v2883 = vsub.f32 %v2881, %v2882
    %v2884 = vand.u32 %v2883, 4294901760
    %2885 = vmatpush1.msra.mxu0 %v2884
    %v2886 = vand.u32 %v2180, 4294901760
    %v2887 = vsub.f32 %v2180, %v2886
    %v2888 = vand.u32 %v2887, 4294901760
    %v2889 = vsub.f32 %v2887, %v2888
    %v2890 = vand.u32 %v2889, 4294901760
    %2891 = vmatprep.subr.mxu0 %v2890
    %v2892 = vand.u32 %v2179, 4294901760
    %v2893 = vsub.f32 %v2179, %v2892
    %v2894 = vand.u32 %v2893, 4294901760
    %v2895 = vsub.f32 %v2893, %v2894
    %v2896 = vand.u32 %v2895, 4294901760
    %2897 = vmatpush1.msra.mxu0 %v2896
    %v2898 = vand.u32 %v2182, 4294901760
    %v2899 = vsub.f32 %v2182, %v2898
    %v2900 = vand.u32 %v2899, 4294901760
    %v2901 = vsub.f32 %v2899, %v2900
    %v2902 = vand.u32 %v2901, 4294901760
    %2903 = vmatprep.subr.mxu0 %v2902
    %v2904 = vand.u32 %v2181, 4294901760
    %v2905 = vsub.f32 %v2181, %v2904
    %v2906 = vand.u32 %v2905, 4294901760
    %v2907 = vsub.f32 %v2905, %v2906
    %v2908 = vand.u32 %v2907, 4294901760
    %2909 = vmatpush1.msra.mxu0 %v2908
    %v2910 = vand.u32 %v2184, 4294901760
    %v2911 = vsub.f32 %v2184, %v2910
    %v2912 = vand.u32 %v2911, 4294901760
    %v2913 = vsub.f32 %v2911, %v2912
    %v2914 = vand.u32 %v2913, 4294901760
    %2915 = vmatprep.subr.mxu0 %v2914
    %v2916 = vand.u32 %v2183, 4294901760
    %v2917 = vsub.f32 %v2183, %v2916
    %v2918 = vand.u32 %v2917, 4294901760
    %v2919 = vsub.f32 %v2917, %v2918
    %v2920 = vand.u32 %v2919, 4294901760
    %2921 = vmatpush1.msra.mxu0 %v2920
    %v2922 = vand.u32 %v2186, 4294901760
    %v2923 = vsub.f32 %v2186, %v2922
    %v2924 = vand.u32 %v2923, 4294901760
    %v2925 = vsub.f32 %v2923, %v2924
    %v2926 = vand.u32 %v2925, 4294901760
    %2927 = vmatprep.subr.mxu0 %v2926
    %v2928 = vand.u32 %v2185, 4294901760
    %v2929 = vsub.f32 %v2185, %v2928
    %v2930 = vand.u32 %v2929, 4294901760
    %v2931 = vsub.f32 %v2929, %v2930
    %v2932 = vand.u32 %v2931, 4294901760
    %2933 = vmatpush1.msra.mxu0 %v2932
    %v2934 = vand.u32 %v2188, 4294901760
    %v2935 = vsub.f32 %v2188, %v2934
    %v2936 = vand.u32 %v2935, 4294901760
    %v2937 = vsub.f32 %v2935, %v2936
    %v2938 = vand.u32 %v2937, 4294901760
    %2939 = vmatprep.subr.mxu0 %v2938
    %v2940 = vand.u32 %v2187, 4294901760
    %v2941 = vsub.f32 %v2187, %v2940
    %v2942 = vand.u32 %v2941, 4294901760
    %v2943 = vsub.f32 %v2941, %v2942
    %v2944 = vand.u32 %v2943, 4294901760
    %2945 = vmatpush1.msra.mxu0 %v2944
    %v2946 = vand.u32 %v2190, 4294901760
    %v2947 = vsub.f32 %v2190, %v2946
    %v2948 = vand.u32 %v2947, 4294901760
    %v2949 = vsub.f32 %v2947, %v2948
    %v2950 = vand.u32 %v2949, 4294901760
    %2951 = vmatprep.subr.mxu0 %v2950
    %v2952 = vand.u32 %v2189, 4294901760
    %v2953 = vsub.f32 %v2189, %v2952
    %v2954 = vand.u32 %v2953, 4294901760
    %v2955 = vsub.f32 %v2953, %v2954
    %v2956 = vand.u32 %v2955, 4294901760
    %2957 = vmatpush1.msra.mxu0 %v2956
    %v2958 = vand.u32 %v2192, 4294901760
    %v2959 = vsub.f32 %v2192, %v2958
    %v2960 = vand.u32 %v2959, 4294901760
    %v2961 = vsub.f32 %v2959, %v2960
    %v2962 = vand.u32 %v2961, 4294901760
    %2963 = vmatprep.subr.mxu0 %v2962
    %v2964 = vand.u32 %v2191, 4294901760
    %v2965 = vsub.f32 %v2191, %v2964
    %v2966 = vand.u32 %v2965, 4294901760
    %v2967 = vsub.f32 %v2965, %v2966
    %v2968 = vand.u32 %v2967, 4294901760
    %2969 = vmatpush1.msra.mxu0 %v2968
    %v2970 = vand.u32 %v2194, 4294901760
    %v2971 = vsub.f32 %v2194, %v2970
    %v2972 = vand.u32 %v2971, 4294901760
    %v2973 = vsub.f32 %v2971, %v2972
    %v2974 = vand.u32 %v2973, 4294901760
    %2975 = vmatprep.subr.mxu0 %v2974
    %v2976 = vand.u32 %v2193, 4294901760
    %v2977 = vsub.f32 %v2193, %v2976
    %v2978 = vand.u32 %v2977, 4294901760
    %v2979 = vsub.f32 %v2977, %v2978
    %v2980 = vand.u32 %v2979, 4294901760
    %2981 = vmatpush1.msra.mxu0 %v2980
    %v2982 = vand.u32 %v2196, 4294901760
    %v2983 = vsub.f32 %v2196, %v2982
    %v2984 = vand.u32 %v2983, 4294901760
    %v2985 = vsub.f32 %v2983, %v2984
    %v2986 = vand.u32 %v2985, 4294901760
    %2987 = vmatprep.subr.mxu0 %v2986
    %v2988 = vand.u32 %v2195, 4294901760
    %v2989 = vsub.f32 %v2195, %v2988
    %v2990 = vand.u32 %v2989, 4294901760
    %v2991 = vsub.f32 %v2989, %v2990
    %v2992 = vand.u32 %v2991, 4294901760
    %2993 = vmatpush1.msra.mxu0 %v2992
    %v2994 = vand.u32 %v2198, 4294901760
    %v2995 = vsub.f32 %v2198, %v2994
    %v2996 = vand.u32 %v2995, 4294901760
    %v2997 = vsub.f32 %v2995, %v2996
    %v2998 = vand.u32 %v2997, 4294901760
    %2999 = vmatprep.subr.mxu0 %v2998
    %v3000 = vand.u32 %v2197, 4294901760
    %v3001 = vsub.f32 %v2197, %v3000
    %v3002 = vand.u32 %v3001, 4294901760
    %v3003 = vsub.f32 %v3001, %v3002
    %v3004 = vand.u32 %v3003, 4294901760
    %3005 = vmatpush1.msra.mxu0 %v3004
    %v3006 = vand.u32 %v2200, 4294901760
    %v3007 = vsub.f32 %v2200, %v3006
    %v3008 = vand.u32 %v3007, 4294901760
    %v3009 = vsub.f32 %v3007, %v3008
    %v3010 = vand.u32 %v3009, 4294901760
    %3011 = vmatprep.subr.mxu0 %v3010
    %v3012 = vand.u32 %v2199, 4294901760
    %v3013 = vsub.f32 %v2199, %v3012
    %v3014 = vand.u32 %v3013, 4294901760
    %v3015 = vsub.f32 %v3013, %v3014
    %v3016 = vand.u32 %v3015, 4294901760
    %3017 = vmatpush1.msra.mxu0 %v3016
    %v3018 = vand.u32 %v2202, 4294901760
    %v3019 = vsub.f32 %v2202, %v3018
    %v3020 = vand.u32 %v3019, 4294901760
    %v3021 = vsub.f32 %v3019, %v3020
    %v3022 = vand.u32 %v3021, 4294901760
    %3023 = vmatprep.subr.mxu0 %v3022
    %v3024 = vand.u32 %v2201, 4294901760
    %v3025 = vsub.f32 %v2201, %v3024
    %v3026 = vand.u32 %v3025, 4294901760
    %v3027 = vsub.f32 %v3025, %v3026
    %v3028 = vand.u32 %v3027, 4294901760
    %3029 = vmatpush1.msra.mxu0 %v3028
    %v3030 = vand.u32 %v2204, 4294901760
    %v3031 = vsub.f32 %v2204, %v3030
    %v3032 = vand.u32 %v3031, 4294901760
    %v3033 = vsub.f32 %v3031, %v3032
    %v3034 = vand.u32 %v3033, 4294901760
    %3035 = vmatprep.subr.mxu0 %v3034
    %v3036 = vand.u32 %v2203, 4294901760
    %v3037 = vsub.f32 %v2203, %v3036
    %v3038 = vand.u32 %v3037, 4294901760
    %v3039 = vsub.f32 %v3037, %v3038
    %v3040 = vand.u32 %v3039, 4294901760
    %3041 = vmatpush1.msra.mxu0 %v3040
    %v3042 = vand.u32 %v2206, 4294901760
    %v3043 = vsub.f32 %v2206, %v3042
    %v3044 = vand.u32 %v3043, 4294901760
    %v3045 = vsub.f32 %v3043, %v3044
    %v3046 = vand.u32 %v3045, 4294901760
    %3047 = vmatprep.subr.mxu0 %v3046
    %v3048 = vand.u32 %v2205, 4294901760
    %v3049 = vsub.f32 %v2205, %v3048
    %v3050 = vand.u32 %v3049, 4294901760
    %v3051 = vsub.f32 %v3049, %v3050
    %v3052 = vand.u32 %v3051, 4294901760
    %3053 = vmatpush1.msra.mxu0 %v3052
    %v3054 = vand.u32 %v2208, 4294901760
    %v3055 = vsub.f32 %v2208, %v3054
    %v3056 = vand.u32 %v3055, 4294901760
    %v3057 = vsub.f32 %v3055, %v3056
    %v3058 = vand.u32 %v3057, 4294901760
    %3059 = vmatprep.subr.mxu0 %v3058
    %v3060 = vand.u32 %v2207, 4294901760
    %v3061 = vsub.f32 %v2207, %v3060
    %v3062 = vand.u32 %v3061, 4294901760
    %v3063 = vsub.f32 %v3061, %v3062
    %v3064 = vand.u32 %v3063, 4294901760
    %3065 = vmatpush1.msra.mxu0 %v3064
    %v3066 = vand.u32 %v2210, 4294901760
    %v3067 = vsub.f32 %v2210, %v3066
    %v3068 = vand.u32 %v3067, 4294901760
    %v3069 = vsub.f32 %v3067, %v3068
    %v3070 = vand.u32 %v3069, 4294901760
    %3071 = vmatprep.subr.mxu0 %v3070
    %v3072 = vand.u32 %v2209, 4294901760
    %v3073 = vsub.f32 %v2209, %v3072
    %v3074 = vand.u32 %v3073, 4294901760
    %v3075 = vsub.f32 %v3073, %v3074
    %v3076 = vand.u32 %v3075, 4294901760
    %3077 = vmatpush1.msra.mxu0 %v3076
    %v3078 = vand.u32 %v2212, 4294901760
    %v3079 = vsub.f32 %v2212, %v3078
    %v3080 = vand.u32 %v3079, 4294901760
    %v3081 = vsub.f32 %v3079, %v3080
    %v3082 = vand.u32 %v3081, 4294901760
    %3083 = vmatprep.subr.mxu0 %v3082
    %v3084 = vand.u32 %v2211, 4294901760
    %v3085 = vsub.f32 %v2211, %v3084
    %v3086 = vand.u32 %v3085, 4294901760
    %v3087 = vsub.f32 %v3085, %v3086
    %v3088 = vand.u32 %v3087, 4294901760
    %3089 = vmatpush1.msra.mxu0 %v3088
    %v3090 = vand.u32 %v2214, 4294901760
    %v3091 = vsub.f32 %v2214, %v3090
    %v3092 = vand.u32 %v3091, 4294901760
    %v3093 = vsub.f32 %v3091, %v3092
    %v3094 = vand.u32 %v3093, 4294901760
    %3095 = vmatprep.subr.mxu0 %v3094
    %v3096 = vand.u32 %v2213, 4294901760
    %v3097 = vsub.f32 %v2213, %v3096
    %v3098 = vand.u32 %v3097, 4294901760
    %v3099 = vsub.f32 %v3097, %v3098
    %v3100 = vand.u32 %v3099, 4294901760
    %3101 = vmatpush1.msra.mxu0 %v3100
    %v3102 = vand.u32 %v2216, 4294901760
    %v3103 = vsub.f32 %v2216, %v3102
    %v3104 = vand.u32 %v3103, 4294901760
    %v3105 = vsub.f32 %v3103, %v3104
    %v3106 = vand.u32 %v3105, 4294901760
    %3107 = vmatprep.subr.mxu0 %v3106
    %v3108 = vand.u32 %v2215, 4294901760
    %v3109 = vsub.f32 %v2215, %v3108
    %v3110 = vand.u32 %v3109, 4294901760
    %v3111 = vsub.f32 %v3109, %v3110
    %v3112 = vand.u32 %v3111, 4294901760
    %3113 = vmatpush1.msra.mxu0 %v3112
    %v3114 = vand.u32 %v2218, 4294901760
    %3115 = vmatprep.mubr.f32.mxu0 %v3114
    %v3116 = vand.u32 %v2217, 4294901760
    %3117 = vmatmul.mubr.f32.gmra.mrb[0].mxu0 %v3116
    %v3118 = vpop.f32.mrb[0].mxu0
    %v3119 = vadd.f32 %v2486, %v3118
    %v3120 = vpop.f32.mrb[0].mxu0
    %v3121 = vadd.f32 %v2488, %v3120
    %v3122 = vand.u32 %v2220, 4294901760
    %3123 = vmatprep.mubr.f32.mxu0 %v3122
    %v3124 = vand.u32 %v2219, 4294901760
    %3125 = vmatmul.mubr.f32.gmra.mrb[0].mxu0 %v3124
    %v3126 = vpop.f32.mrb[0].mxu0
    %v3127 = vadd.f32 %v2502, %v3126
    %v3128 = vpop.f32.mrb[0].mxu0
    %v3129 = vadd.f32 %v2504, %v3128
    %v3130 = vand.u32 %v2222, 4294901760
    %3131 = vmatprep.mubr.f32.mxu0 %v3130
    %v3132 = vand.u32 %v2221, 4294901760
    %3133 = vmatmul.mubr.f32.gmra.mrb[0].mxu0 %v3132
    %v3134 = vpop.f32.mrb[0].mxu0
    %v3135 = vadd.f32 %v2518, %v3134
    %v3136 = vpop.f32.mrb[0].mxu0
    %v3137 = vadd.f32 %v2520, %v3136
    %v3138 = vand.u32 %v2224, 4294901760
    %3139 = vmatprep.mubr.f32.mxu0 %v3138
    %v3140 = vand.u32 %v2223, 4294901760
    %3141 = vmatmul.mubr.f32.gmra.mrb[0].mxu0 %v3140
    %v3142 = vpop.f32.mrb[0].mxu0
    %v3143 = vadd.f32 %v2534, %v3142
    %v3144 = vpop.f32.mrb[0].mxu0
    %v3145 = vadd.f32 %v2536, %v3144
    %v3146 = vand.u32 %v2226, 4294901760
    %3147 = vmatprep.mubr.f32.mxu0 %v3146
    %v3148 = vand.u32 %v2225, 4294901760
    %3149 = vmatmul.mubr.f32.gmra.mrb[0].mxu0 %v3148
    %v3150 = vpop.f32.mrb[0].mxu0
    %v3151 = vadd.f32 %v2550, %v3150
    %v3152 = vpop.f32.mrb[0].mxu0
    %v3153 = vadd.f32 %v2552, %v3152
    %v3154 = vand.u32 %v2228, 4294901760
    %3155 = vmatprep.mubr.f32.mxu0 %v3154
    %v3156 = vand.u32 %v2227, 4294901760
    %3157 = vmatmul.mubr.f32.gmra.mrb[0].mxu0 %v3156
    %v3158 = vpop.f32.mrb[0].mxu0
    %v3159 = vadd.f32 %v2566, %v3158
    %v3160 = vpop.f32.mrb[0].mxu0
    %v3161 = vadd.f32 %v2568, %v3160
    %v3162 = vand.u32 %v2230, 4294901760
    %3163 = vmatprep.mubr.f32.mxu0 %v3162
    %v3164 = vand.u32 %v2229, 4294901760
    %3165 = vmatmul.mubr.f32.gmra.mrb[0].mxu0 %v3164
    %v3166 = vpop.f32.mrb[0].mxu0
    %v3167 = vadd.f32 %v2582, %v3166
    %v3168 = vpop.f32.mrb[0].mxu0
    %v3169 = vadd.f32 %v2584, %v3168
    %v3170 = vand.u32 %v2232, 4294901760
    %3171 = vmatprep.mubr.f32.mxu0 %v3170
    %v3172 = vand.u32 %v2231, 4294901760
    %3173 = vmatmul.mubr.f32.gmra.mrb[0].mxu0 %v3172
    %v3174 = vpop.f32.mrb[0].mxu0
    %v3175 = vadd.f32 %v2598, %v3174
    %v3176 = vpop.f32.mrb[0].mxu0
    %v3177 = vadd.f32 %v2600, %v3176
    %v3178 = vand.u32 %v2234, 4294901760
    %3179 = vmatprep.mubr.f32.mxu0 %v3178
    %v3180 = vand.u32 %v2233, 4294901760
    %3181 = vmatmul.mubr.f32.gmra.mrb[0].mxu0 %v3180
    %v3182 = vpop.f32.mrb[0].mxu0
    %v3183 = vadd.f32 %v2614, %v3182
    %v3184 = vpop.f32.mrb[0].mxu0
    %v3185 = vadd.f32 %v2616, %v3184
    %v3186 = vand.u32 %v2236, 4294901760
    %3187 = vmatprep.mubr.f32.mxu0 %v3186
    %v3188 = vand.u32 %v2235, 4294901760
    %3189 = vmatmul.mubr.f32.gmra.mrb[0].mxu0 %v3188
    %v3190 = vpop.f32.mrb[0].mxu0
    %v3191 = vadd.f32 %v2630, %v3190
    %v3192 = vpop.f32.mrb[0].mxu0
    %v3193 = vadd.f32 %v2632, %v3192
    %v3194 = vand.u32 %v2238, 4294901760
    %3195 = vmatprep.mubr.f32.mxu0 %v3194
    %v3196 = vand.u32 %v2237, 4294901760
    %3197 = vmatmul.mubr.f32.gmra.mrb[0].mxu0 %v3196
    %v3198 = vpop.f32.mrb[0].mxu0
    %v3199 = vadd.f32 %v2646, %v3198
    %v3200 = vpop.f32.mrb[0].mxu0
    %v3201 = vadd.f32 %v2648, %v3200
    %v3202 = vand.u32 %v2240, 4294901760
    %3203 = vmatprep.mubr.f32.mxu0 %v3202
    %v3204 = vand.u32 %v2239, 4294901760
    %3205 = vmatmul.mubr.f32.gmra.mrb[0].mxu0 %v3204
    %v3206 = vpop.f32.mrb[0].mxu0
    %v3207 = vadd.f32 %v2662, %v3206
    %v3208 = vpop.f32.mrb[0].mxu0
    %v3209 = vadd.f32 %v2664, %v3208
    %v3210 = vand.u32 %v2242, 4294901760
    %3211 = vmatprep.mubr.f32.mxu0 %v3210
    %v3212 = vand.u32 %v2241, 4294901760
    %3213 = vmatmul.mubr.f32.gmra.mrb[0].mxu0 %v3212
    %v3214 = vpop.f32.mrb[0].mxu0
    %v3215 = vadd.f32 %v2678, %v3214
    %v3216 = vpop.f32.mrb[0].mxu0
    %v3217 = vadd.f32 %v2680, %v3216
    %v3218 = vand.u32 %v2244, 4294901760
    %3219 = vmatprep.mubr.f32.mxu0 %v3218
    %v3220 = vand.u32 %v2243, 4294901760
    %3221 = vmatmul.mubr.f32.gmra.mrb[0].mxu0 %v3220
    %v3222 = vpop.f32.mrb[0].mxu0
    %v3223 = vadd.f32 %v2694, %v3222
    %v3224 = vpop.f32.mrb[0].mxu0
    %v3225 = vadd.f32 %v2696, %v3224
    %v3226 = vand.u32 %v2246, 4294901760
    %3227 = vmatprep.mubr.f32.mxu0 %v3226
    %v3228 = vand.u32 %v2245, 4294901760
    %3229 = vmatmul.mubr.f32.gmra.mrb[0].mxu0 %v3228
    %v3230 = vpop.f32.mrb[0].mxu0
    %v3231 = vadd.f32 %v2710, %v3230
    %v3232 = vpop.f32.mrb[0].mxu0
    %v3233 = vadd.f32 %v2712, %v3232
    %v3234 = vand.u32 %v2248, 4294901760
    %3235 = vmatprep.mubr.f32.mxu0 %v3234
    %v3236 = vand.u32 %v2247, 4294901760
    %3237 = vmatmul.mubr.f32.gmra.mrb[0].mxu0 %v3236
    %v3238 = vpop.f32.mrb[0].mxu0
    %v3239 = vadd.f32 %v2726, %v3238
    %v3240 = vpop.f32.mrb[0].mxu0
    %v3241 = vadd.f32 %v2728, %v3240
    %3242 = vdwg.mxu0
    %v3243 = vand.u32 %v2154, 4294901760
    %v3244 = vsub.f32 %v2154, %v3243
    %3245 = vmatprep.subr.mxu0 %v3244
    %v3246 = vand.u32 %v2153, 4294901760
    %v3247 = vsub.f32 %v2153, %v3246
    %3248 = vmatpush1.msra.mxu0 %v3247
    %v3249 = vand.u32 %v2156, 4294901760
    %v3250 = vsub.f32 %v2156, %v3249
    %3251 = vmatprep.subr.mxu0 %v3250
    %v3252 = vand.u32 %v2155, 4294901760
    %v3253 = vsub.f32 %v2155, %v3252
    %3254 = vmatpush1.msra.mxu0 %v3253
    %v3255 = vand.u32 %v2158, 4294901760
    %v3256 = vsub.f32 %v2158, %v3255
    %3257 = vmatprep.subr.mxu0 %v3256
    %v3258 = vand.u32 %v2157, 4294901760
    %v3259 = vsub.f32 %v2157, %v3258
    %3260 = vmatpush1.msra.mxu0 %v3259
    %v3261 = vand.u32 %v2160, 4294901760
    %v3262 = vsub.f32 %v2160, %v3261
    %3263 = vmatprep.subr.mxu0 %v3262
    %v3264 = vand.u32 %v2159, 4294901760
    %v3265 = vsub.f32 %v2159, %v3264
    %3266 = vmatpush1.msra.mxu0 %v3265
    %v3267 = vand.u32 %v2162, 4294901760
    %v3268 = vsub.f32 %v2162, %v3267
    %3269 = vmatprep.subr.mxu0 %v3268
    %v3270 = vand.u32 %v2161, 4294901760
    %v3271 = vsub.f32 %v2161, %v3270
    %3272 = vmatpush1.msra.mxu0 %v3271
    %v3273 = vand.u32 %v2164, 4294901760
    %v3274 = vsub.f32 %v2164, %v3273
    %3275 = vmatprep.subr.mxu0 %v3274
    %v3276 = vand.u32 %v2163, 4294901760
    %v3277 = vsub.f32 %v2163, %v3276
    %3278 = vmatpush1.msra.mxu0 %v3277
    %v3279 = vand.u32 %v2166, 4294901760
    %v3280 = vsub.f32 %v2166, %v3279
    %3281 = vmatprep.subr.mxu0 %v3280
    %v3282 = vand.u32 %v2165, 4294901760
    %v3283 = vsub.f32 %v2165, %v3282
    %3284 = vmatpush1.msra.mxu0 %v3283
    %v3285 = vand.u32 %v2168, 4294901760
    %v3286 = vsub.f32 %v2168, %v3285
    %3287 = vmatprep.subr.mxu0 %v3286
    %v3288 = vand.u32 %v2167, 4294901760
    %v3289 = vsub.f32 %v2167, %v3288
    %3290 = vmatpush1.msra.mxu0 %v3289
    %v3291 = vand.u32 %v2170, 4294901760
    %v3292 = vsub.f32 %v2170, %v3291
    %3293 = vmatprep.subr.mxu0 %v3292
    %v3294 = vand.u32 %v2169, 4294901760
    %v3295 = vsub.f32 %v2169, %v3294
    %3296 = vmatpush1.msra.mxu0 %v3295
    %v3297 = vand.u32 %v2172, 4294901760
    %v3298 = vsub.f32 %v2172, %v3297
    %3299 = vmatprep.subr.mxu0 %v3298
    %v3300 = vand.u32 %v2171, 4294901760
    %v3301 = vsub.f32 %v2171, %v3300
    %3302 = vmatpush1.msra.mxu0 %v3301
    %v3303 = vand.u32 %v2174, 4294901760
    %v3304 = vsub.f32 %v2174, %v3303
    %3305 = vmatprep.subr.mxu0 %v3304
    %v3306 = vand.u32 %v2173, 4294901760
    %v3307 = vsub.f32 %v2173, %v3306
    %3308 = vmatpush1.msra.mxu0 %v3307
    %v3309 = vand.u32 %v2176, 4294901760
    %v3310 = vsub.f32 %v2176, %v3309
    %3311 = vmatprep.subr.mxu0 %v3310
    %v3312 = vand.u32 %v2175, 4294901760
    %v3313 = vsub.f32 %v2175, %v3312
    %3314 = vmatpush1.msra.mxu0 %v3313
    %v3315 = vand.u32 %v2178, 4294901760
    %v3316 = vsub.f32 %v2178, %v3315
    %3317 = vmatprep.subr.mxu0 %v3316
    %v3318 = vand.u32 %v2177, 4294901760
    %v3319 = vsub.f32 %v2177, %v3318
    %3320 = vmatpush1.msra.mxu0 %v3319
    %v3321 = vand.u32 %v2180, 4294901760
    %v3322 = vsub.f32 %v2180, %v3321
    %3323 = vmatprep.subr.mxu0 %v3322
    %v3324 = vand.u32 %v2179, 4294901760
    %v3325 = vsub.f32 %v2179, %v3324
    %3326 = vmatpush1.msra.mxu0 %v3325
    %v3327 = vand.u32 %v2182, 4294901760
    %v3328 = vsub.f32 %v2182, %v3327
    %3329 = vmatprep.subr.mxu0 %v3328
    %v3330 = vand.u32 %v2181, 4294901760
    %v3331 = vsub.f32 %v2181, %v3330
    %3332 = vmatpush1.msra.mxu0 %v3331
    %v3333 = vand.u32 %v2184, 4294901760
    %v3334 = vsub.f32 %v2184, %v3333
    %3335 = vmatprep.subr.mxu0 %v3334
    %v3336 = vand.u32 %v2183, 4294901760
    %v3337 = vsub.f32 %v2183, %v3336
    %3338 = vmatpush1.msra.mxu0 %v3337
    %v3339 = vand.u32 %v2186, 4294901760
    %v3340 = vsub.f32 %v2186, %v3339
    %3341 = vmatprep.subr.mxu0 %v3340
    %v3342 = vand.u32 %v2185, 4294901760
    %v3343 = vsub.f32 %v2185, %v3342
    %3344 = vmatpush1.msra.mxu0 %v3343
    %v3345 = vand.u32 %v2188, 4294901760
    %v3346 = vsub.f32 %v2188, %v3345
    %3347 = vmatprep.subr.mxu0 %v3346
    %v3348 = vand.u32 %v2187, 4294901760
    %v3349 = vsub.f32 %v2187, %v3348
    %3350 = vmatpush1.msra.mxu0 %v3349
    %v3351 = vand.u32 %v2190, 4294901760
    %v3352 = vsub.f32 %v2190, %v3351
    %3353 = vmatprep.subr.mxu0 %v3352
    %v3354 = vand.u32 %v2189, 4294901760
    %v3355 = vsub.f32 %v2189, %v3354
    %3356 = vmatpush1.msra.mxu0 %v3355
    %v3357 = vand.u32 %v2192, 4294901760
    %v3358 = vsub.f32 %v2192, %v3357
    %3359 = vmatprep.subr.mxu0 %v3358
    %v3360 = vand.u32 %v2191, 4294901760
    %v3361 = vsub.f32 %v2191, %v3360
    %3362 = vmatpush1.msra.mxu0 %v3361
    %v3363 = vand.u32 %v2194, 4294901760
    %v3364 = vsub.f32 %v2194, %v3363
    %3365 = vmatprep.subr.mxu0 %v3364
    %v3366 = vand.u32 %v2193, 4294901760
    %v3367 = vsub.f32 %v2193, %v3366
    %3368 = vmatpush1.msra.mxu0 %v3367
    %v3369 = vand.u32 %v2196, 4294901760
    %v3370 = vsub.f32 %v2196, %v3369
    %3371 = vmatprep.subr.mxu0 %v3370
    %v3372 = vand.u32 %v2195, 4294901760
    %v3373 = vsub.f32 %v2195, %v3372
    %3374 = vmatpush1.msra.mxu0 %v3373
    %v3375 = vand.u32 %v2198, 4294901760
    %v3376 = vsub.f32 %v2198, %v3375
    %3377 = vmatprep.subr.mxu0 %v3376
    %v3378 = vand.u32 %v2197, 4294901760
    %v3379 = vsub.f32 %v2197, %v3378
    %3380 = vmatpush1.msra.mxu0 %v3379
    %v3381 = vand.u32 %v2200, 4294901760
    %v3382 = vsub.f32 %v2200, %v3381
    %3383 = vmatprep.subr.mxu0 %v3382
    %v3384 = vand.u32 %v2199, 4294901760
    %v3385 = vsub.f32 %v2199, %v3384
    %3386 = vmatpush1.msra.mxu0 %v3385
    %v3387 = vand.u32 %v2202, 4294901760
    %v3388 = vsub.f32 %v2202, %v3387
    %3389 = vmatprep.subr.mxu0 %v3388
    %v3390 = vand.u32 %v2201, 4294901760
    %v3391 = vsub.f32 %v2201, %v3390
    %3392 = vmatpush1.msra.mxu0 %v3391
    %v3393 = vand.u32 %v2204, 4294901760
    %v3394 = vsub.f32 %v2204, %v3393
    %3395 = vmatprep.subr.mxu0 %v3394
    %v3396 = vand.u32 %v2203, 4294901760
    %v3397 = vsub.f32 %v2203, %v3396
    %3398 = vmatpush1.msra.mxu0 %v3397
    %v3399 = vand.u32 %v2206, 4294901760
    %v3400 = vsub.f32 %v2206, %v3399
    %3401 = vmatprep.subr.mxu0 %v3400
    %v3402 = vand.u32 %v2205, 4294901760
    %v3403 = vsub.f32 %v2205, %v3402
    %3404 = vmatpush1.msra.mxu0 %v3403
    %v3405 = vand.u32 %v2208, 4294901760
    %v3406 = vsub.f32 %v2208, %v3405
    %3407 = vmatprep.subr.mxu0 %v3406
    %v3408 = vand.u32 %v2207, 4294901760
    %v3409 = vsub.f32 %v2207, %v3408
    %3410 = vmatpush1.msra.mxu0 %v3409
    %v3411 = vand.u32 %v2210, 4294901760
    %v3412 = vsub.f32 %v2210, %v3411
    %3413 = vmatprep.subr.mxu0 %v3412
    %v3414 = vand.u32 %v2209, 4294901760
    %v3415 = vsub.f32 %v2209, %v3414
    %3416 = vmatpush1.msra.mxu0 %v3415
    %v3417 = vand.u32 %v2212, 4294901760
    %v3418 = vsub.f32 %v2212, %v3417
    %3419 = vmatprep.subr.mxu0 %v3418
    %v3420 = vand.u32 %v2211, 4294901760
    %v3421 = vsub.f32 %v2211, %v3420
    %3422 = vmatpush1.msra.mxu0 %v3421
    %v3423 = vand.u32 %v2214, 4294901760
    %v3424 = vsub.f32 %v2214, %v3423
    %3425 = vmatprep.subr.mxu0 %v3424
    %v3426 = vand.u32 %v2213, 4294901760
    %v3427 = vsub.f32 %v2213, %v3426
    %3428 = vmatpush1.msra.mxu0 %v3427
    %v3429 = vand.u32 %v2216, 4294901760
    %v3430 = vsub.f32 %v2216, %v3429
    %3431 = vmatprep.subr.mxu0 %v3430
    %v3432 = vand.u32 %v2215, 4294901760
    %v3433 = vsub.f32 %v2215, %v3432
    %3434 = vmatpush1.msra.mxu0 %v3433
    %v3435 = vand.u32 %v2218, 4294901760
    %v3436 = vsub.f32 %v2218, %v3435
    %3437 = vmatprep.mubr.f32.mxu0 %v3436
    %v3438 = vand.u32 %v2217, 4294901760
    %v3439 = vsub.f32 %v2217, %v3438
    %3440 = vmatmul.mubr.f32.gmra.mrb[0].mxu0 %v3439
    %v3441 = vpop.f32.mrb[0].mxu0
    %v3442 = vadd.f32 %v3119, %v3441
    %v3443 = vpop.f32.mrb[0].mxu0
    %v3444 = vadd.f32 %v3121, %v3443
    %v3445 = vand.u32 %v2220, 4294901760
    %v3446 = vsub.f32 %v2220, %v3445
    %3447 = vmatprep.mubr.f32.mxu0 %v3446
    %v3448 = vand.u32 %v2219, 4294901760
    %v3449 = vsub.f32 %v2219, %v3448
    %3450 = vmatmul.mubr.f32.gmra.mrb[0].mxu0 %v3449
    %v3451 = vpop.f32.mrb[0].mxu0
    %v3452 = vadd.f32 %v3127, %v3451
    %v3453 = vpop.f32.mrb[0].mxu0
    %v3454 = vadd.f32 %v3129, %v3453
    %v3455 = vand.u32 %v2222, 4294901760
    %v3456 = vsub.f32 %v2222, %v3455
    %3457 = vmatprep.mubr.f32.mxu0 %v3456
    %v3458 = vand.u32 %v2221, 4294901760
    %v3459 = vsub.f32 %v2221, %v3458
    %3460 = vmatmul.mubr.f32.gmra.mrb[0].mxu0 %v3459
    %v3461 = vpop.f32.mrb[0].mxu0
    %v3462 = vadd.f32 %v3135, %v3461
    %v3463 = vpop.f32.mrb[0].mxu0
    %v3464 = vadd.f32 %v3137, %v3463
    %v3465 = vand.u32 %v2224, 4294901760
    %v3466 = vsub.f32 %v2224, %v3465
    %3467 = vmatprep.mubr.f32.mxu0 %v3466
    %v3468 = vand.u32 %v2223, 4294901760
    %v3469 = vsub.f32 %v2223, %v3468
    %3470 = vmatmul.mubr.f32.gmra.mrb[0].mxu0 %v3469
    %v3471 = vpop.f32.mrb[0].mxu0
    %v3472 = vadd.f32 %v3143, %v3471
    %v3473 = vpop.f32.mrb[0].mxu0
    %v3474 = vadd.f32 %v3145, %v3473
    %v3475 = vand.u32 %v2226, 4294901760
    %v3476 = vsub.f32 %v2226, %v3475
    %3477 = vmatprep.mubr.f32.mxu0 %v3476
    %v3478 = vand.u32 %v2225, 4294901760
    %v3479 = vsub.f32 %v2225, %v3478
    %3480 = vmatmul.mubr.f32.gmra.mrb[0].mxu0 %v3479
    %v3481 = vpop.f32.mrb[0].mxu0
    %v3482 = vadd.f32 %v3151, %v3481
    %v3483 = vpop.f32.mrb[0].mxu0
    %v3484 = vadd.f32 %v3153, %v3483
    %v3485 = vand.u32 %v2228, 4294901760
    %v3486 = vsub.f32 %v2228, %v3485
    %3487 = vmatprep.mubr.f32.mxu0 %v3486
    %v3488 = vand.u32 %v2227, 4294901760
    %v3489 = vsub.f32 %v2227, %v3488
    %3490 = vmatmul.mubr.f32.gmra.mrb[0].mxu0 %v3489
    %v3491 = vpop.f32.mrb[0].mxu0
    %v3492 = vadd.f32 %v3159, %v3491
    %v3493 = vpop.f32.mrb[0].mxu0
    %v3494 = vadd.f32 %v3161, %v3493
    %v3495 = vand.u32 %v2230, 4294901760
    %v3496 = vsub.f32 %v2230, %v3495
    %3497 = vmatprep.mubr.f32.mxu0 %v3496
    %v3498 = vand.u32 %v2229, 4294901760
    %v3499 = vsub.f32 %v2229, %v3498
    %3500 = vmatmul.mubr.f32.gmra.mrb[0].mxu0 %v3499
    %v3501 = vpop.f32.mrb[0].mxu0
    %v3502 = vadd.f32 %v3167, %v3501
    %v3503 = vpop.f32.mrb[0].mxu0
    %v3504 = vadd.f32 %v3169, %v3503
    %v3505 = vand.u32 %v2232, 4294901760
    %v3506 = vsub.f32 %v2232, %v3505
    %3507 = vmatprep.mubr.f32.mxu0 %v3506
    %v3508 = vand.u32 %v2231, 4294901760
    %v3509 = vsub.f32 %v2231, %v3508
    %3510 = vmatmul.mubr.f32.gmra.mrb[0].mxu0 %v3509
    %v3511 = vpop.f32.mrb[0].mxu0
    %v3512 = vadd.f32 %v3175, %v3511
    %v3513 = vpop.f32.mrb[0].mxu0
    %v3514 = vadd.f32 %v3177, %v3513
    %v3515 = vand.u32 %v2234, 4294901760
    %v3516 = vsub.f32 %v2234, %v3515
    %3517 = vmatprep.mubr.f32.mxu0 %v3516
    %v3518 = vand.u32 %v2233, 4294901760
    %v3519 = vsub.f32 %v2233, %v3518
    %3520 = vmatmul.mubr.f32.gmra.mrb[0].mxu0 %v3519
    %v3521 = vpop.f32.mrb[0].mxu0
    %v3522 = vadd.f32 %v3183, %v3521
    %v3523 = vpop.f32.mrb[0].mxu0
    %v3524 = vadd.f32 %v3185, %v3523
    %v3525 = vand.u32 %v2236, 4294901760
    %v3526 = vsub.f32 %v2236, %v3525
    %3527 = vmatprep.mubr.f32.mxu0 %v3526
    %v3528 = vand.u32 %v2235, 4294901760
    %v3529 = vsub.f32 %v2235, %v3528
    %3530 = vmatmul.mubr.f32.gmra.mrb[0].mxu0 %v3529
    %v3531 = vpop.f32.mrb[0].mxu0
    %v3532 = vadd.f32 %v3191, %v3531
    %v3533 = vpop.f32.mrb[0].mxu0
    %v3534 = vadd.f32 %v3193, %v3533
    %v3535 = vand.u32 %v2238, 4294901760
    %v3536 = vsub.f32 %v2238, %v3535
    %3537 = vmatprep.mubr.f32.mxu0 %v3536
    %v3538 = vand.u32 %v2237, 4294901760
    %v3539 = vsub.f32 %v2237, %v3538
    %3540 = vmatmul.mubr.f32.gmra.mrb[0].mxu0 %v3539
    %v3541 = vpop.f32.mrb[0].mxu0
    %v3542 = vadd.f32 %v3199, %v3541
    %v3543 = vpop.f32.mrb[0].mxu0
    %v3544 = vadd.f32 %v3201, %v3543
    %v3545 = vand.u32 %v2240, 4294901760
    %v3546 = vsub.f32 %v2240, %v3545
    %3547 = vmatprep.mubr.f32.mxu0 %v3546
    %v3548 = vand.u32 %v2239, 4294901760
    %v3549 = vsub.f32 %v2239, %v3548
    %3550 = vmatmul.mubr.f32.gmra.mrb[0].mxu0 %v3549
    %v3551 = vpop.f32.mrb[0].mxu0
    %v3552 = vadd.f32 %v3207, %v3551
    %v3553 = vpop.f32.mrb[0].mxu0
    %v3554 = vadd.f32 %v3209, %v3553
    %v3555 = vand.u32 %v2242, 4294901760
    %v3556 = vsub.f32 %v2242, %v3555
    %3557 = vmatprep.mubr.f32.mxu0 %v3556
    %v3558 = vand.u32 %v2241, 4294901760
    %v3559 = vsub.f32 %v2241, %v3558
    %3560 = vmatmul.mubr.f32.gmra.mrb[0].mxu0 %v3559
    %v3561 = vpop.f32.mrb[0].mxu0
    %v3562 = vadd.f32 %v3215, %v3561
    %v3563 = vpop.f32.mrb[0].mxu0
    %v3564 = vadd.f32 %v3217, %v3563
    %v3565 = vand.u32 %v2244, 4294901760
    %v3566 = vsub.f32 %v2244, %v3565
    %3567 = vmatprep.mubr.f32.mxu0 %v3566
    %v3568 = vand.u32 %v2243, 4294901760
    %v3569 = vsub.f32 %v2243, %v3568
    %3570 = vmatmul.mubr.f32.gmra.mrb[0].mxu0 %v3569
    %v3571 = vpop.f32.mrb[0].mxu0
    %v3572 = vadd.f32 %v3223, %v3571
    %v3573 = vpop.f32.mrb[0].mxu0
    %v3574 = vadd.f32 %v3225, %v3573
    %v3575 = vand.u32 %v2246, 4294901760
    %v3576 = vsub.f32 %v2246, %v3575
    %3577 = vmatprep.mubr.f32.mxu0 %v3576
    %v3578 = vand.u32 %v2245, 4294901760
    %v3579 = vsub.f32 %v2245, %v3578
    %3580 = vmatmul.mubr.f32.gmra.mrb[0].mxu0 %v3579
    %v3581 = vpop.f32.mrb[0].mxu0
    %v3582 = vadd.f32 %v3231, %v3581
    %v3583 = vpop.f32.mrb[0].mxu0
    %v3584 = vadd.f32 %v3233, %v3583
    %v3585 = vand.u32 %v2248, 4294901760
    %v3586 = vsub.f32 %v2248, %v3585
    %3587 = vmatprep.mubr.f32.mxu0 %v3586
    %v3588 = vand.u32 %v2247, 4294901760
    %v3589 = vsub.f32 %v2247, %v3588
    %3590 = vmatmul.mubr.f32.gmra.mrb[0].mxu0 %v3589
    %v3591 = vpop.f32.mrb[0].mxu0
    %v3592 = vadd.f32 %v3239, %v3591
    %v3593 = vpop.f32.mrb[0].mxu0
    %v3594 = vadd.f32 %v3241, %v3593
    %3595 = vdwg.mxu0
    %v3596 = vand.u32 %v2154, 4294901760
    %3597 = vmatprep.subr.mxu0 %v3596
    %v3598 = vand.u32 %v2153, 4294901760
    %3599 = vmatpush1.msra.mxu0 %v3598
    %v3600 = vand.u32 %v2156, 4294901760
    %3601 = vmatprep.subr.mxu0 %v3600
    %v3602 = vand.u32 %v2155, 4294901760
    %3603 = vmatpush1.msra.mxu0 %v3602
    %v3604 = vand.u32 %v2158, 4294901760
    %3605 = vmatprep.subr.mxu0 %v3604
    %v3606 = vand.u32 %v2157, 4294901760
    %3607 = vmatpush1.msra.mxu0 %v3606
    %v3608 = vand.u32 %v2160, 4294901760
    %3609 = vmatprep.subr.mxu0 %v3608
    %v3610 = vand.u32 %v2159, 4294901760
    %3611 = vmatpush1.msra.mxu0 %v3610
    %v3612 = vand.u32 %v2162, 4294901760
    %3613 = vmatprep.subr.mxu0 %v3612
    %v3614 = vand.u32 %v2161, 4294901760
    %3615 = vmatpush1.msra.mxu0 %v3614
    %v3616 = vand.u32 %v2164, 4294901760
    %3617 = vmatprep.subr.mxu0 %v3616
    %v3618 = vand.u32 %v2163, 4294901760
    %3619 = vmatpush1.msra.mxu0 %v3618
    %v3620 = vand.u32 %v2166, 4294901760
    %3621 = vmatprep.subr.mxu0 %v3620
    %v3622 = vand.u32 %v2165, 4294901760
    %3623 = vmatpush1.msra.mxu0 %v3622
    %v3624 = vand.u32 %v2168, 4294901760
    %3625 = vmatprep.subr.mxu0 %v3624
    %v3626 = vand.u32 %v2167, 4294901760
    %3627 = vmatpush1.msra.mxu0 %v3626
    %v3628 = vand.u32 %v2170, 4294901760
    %3629 = vmatprep.subr.mxu0 %v3628
    %v3630 = vand.u32 %v2169, 4294901760
    %3631 = vmatpush1.msra.mxu0 %v3630
    %v3632 = vand.u32 %v2172, 4294901760
    %3633 = vmatprep.subr.mxu0 %v3632
    %v3634 = vand.u32 %v2171, 4294901760
    %3635 = vmatpush1.msra.mxu0 %v3634
    %v3636 = vand.u32 %v2174, 4294901760
    %3637 = vmatprep.subr.mxu0 %v3636
    %v3638 = vand.u32 %v2173, 4294901760
    %3639 = vmatpush1.msra.mxu0 %v3638
    %v3640 = vand.u32 %v2176, 4294901760
    %3641 = vmatprep.subr.mxu0 %v3640
    %v3642 = vand.u32 %v2175, 4294901760
    %3643 = vmatpush1.msra.mxu0 %v3642
    %v3644 = vand.u32 %v2178, 4294901760
    %3645 = vmatprep.subr.mxu0 %v3644
    %v3646 = vand.u32 %v2177, 4294901760
    %3647 = vmatpush1.msra.mxu0 %v3646
    %v3648 = vand.u32 %v2180, 4294901760
    %3649 = vmatprep.subr.mxu0 %v3648
    %v3650 = vand.u32 %v2179, 4294901760
    %3651 = vmatpush1.msra.mxu0 %v3650
    %v3652 = vand.u32 %v2182, 4294901760
    %3653 = vmatprep.subr.mxu0 %v3652
    %v3654 = vand.u32 %v2181, 4294901760
    %3655 = vmatpush1.msra.mxu0 %v3654
    %v3656 = vand.u32 %v2184, 4294901760
    %3657 = vmatprep.subr.mxu0 %v3656
    %v3658 = vand.u32 %v2183, 4294901760
    %3659 = vmatpush1.msra.mxu0 %v3658
    %v3660 = vand.u32 %v2186, 4294901760
    %3661 = vmatprep.subr.mxu0 %v3660
    %v3662 = vand.u32 %v2185, 4294901760
    %3663 = vmatpush1.msra.mxu0 %v3662
    %v3664 = vand.u32 %v2188, 4294901760
    %3665 = vmatprep.subr.mxu0 %v3664
    %v3666 = vand.u32 %v2187, 4294901760
    %3667 = vmatpush1.msra.mxu0 %v3666
    %v3668 = vand.u32 %v2190, 4294901760
    %3669 = vmatprep.subr.mxu0 %v3668
    %v3670 = vand.u32 %v2189, 4294901760
    %3671 = vmatpush1.msra.mxu0 %v3670
    %v3672 = vand.u32 %v2192, 4294901760
    %3673 = vmatprep.subr.mxu0 %v3672
    %v3674 = vand.u32 %v2191, 4294901760
    %3675 = vmatpush1.msra.mxu0 %v3674
    %v3676 = vand.u32 %v2194, 4294901760
    %3677 = vmatprep.subr.mxu0 %v3676
    %v3678 = vand.u32 %v2193, 4294901760
    %3679 = vmatpush1.msra.mxu0 %v3678
    %v3680 = vand.u32 %v2196, 4294901760
    %3681 = vmatprep.subr.mxu0 %v3680
    %v3682 = vand.u32 %v2195, 4294901760
    %3683 = vmatpush1.msra.mxu0 %v3682
    %v3684 = vand.u32 %v2198, 4294901760
    %3685 = vmatprep.subr.mxu0 %v3684
    %v3686 = vand.u32 %v2197, 4294901760
    %3687 = vmatpush1.msra.mxu0 %v3686
    %v3688 = vand.u32 %v2200, 4294901760
    %3689 = vmatprep.subr.mxu0 %v3688
    %v3690 = vand.u32 %v2199, 4294901760
    %3691 = vmatpush1.msra.mxu0 %v3690
    %v3692 = vand.u32 %v2202, 4294901760
    %3693 = vmatprep.subr.mxu0 %v3692
    %v3694 = vand.u32 %v2201, 4294901760
    %3695 = vmatpush1.msra.mxu0 %v3694
    %v3696 = vand.u32 %v2204, 4294901760
    %3697 = vmatprep.subr.mxu0 %v3696
    %v3698 = vand.u32 %v2203, 4294901760
    %3699 = vmatpush1.msra.mxu0 %v3698
    %v3700 = vand.u32 %v2206, 4294901760
    %3701 = vmatprep.subr.mxu0 %v3700
    %v3702 = vand.u32 %v2205, 4294901760
    %3703 = vmatpush1.msra.mxu0 %v3702
    %v3704 = vand.u32 %v2208, 4294901760
    %3705 = vmatprep.subr.mxu0 %v3704
    %v3706 = vand.u32 %v2207, 4294901760
    %3707 = vmatpush1.msra.mxu0 %v3706
    %v3708 = vand.u32 %v2210, 4294901760
    %3709 = vmatprep.subr.mxu0 %v3708
    %v3710 = vand.u32 %v2209, 4294901760
    %3711 = vmatpush1.msra.mxu0 %v3710
    %v3712 = vand.u32 %v2212, 4294901760
    %3713 = vmatprep.subr.mxu0 %v3712
    %v3714 = vand.u32 %v2211, 4294901760
    %3715 = vmatpush1.msra.mxu0 %v3714
    %v3716 = vand.u32 %v2214, 4294901760
    %3717 = vmatprep.subr.mxu0 %v3716
    %v3718 = vand.u32 %v2213, 4294901760
    %3719 = vmatpush1.msra.mxu0 %v3718
    %v3720 = vand.u32 %v2216, 4294901760
    %3721 = vmatprep.subr.mxu0 %v3720
    %v3722 = vand.u32 %v2215, 4294901760
    %3723 = vmatpush1.msra.mxu0 %v3722
    %v3724 = vand.u32 %v2218, 4294901760
    %v3725 = vsub.f32 %v2218, %v3724
    %v3726 = vand.u32 %v3725, 4294901760
    %3727 = vmatprep.mubr.f32.mxu0 %v3726
    %v3728 = vand.u32 %v2217, 4294901760
    %v3729 = vsub.f32 %v2217, %v3728
    %v3730 = vand.u32 %v3729, 4294901760
    %3731 = vmatmul.mubr.f32.gmra.mrb[0].mxu0 %v3730
    %v3732 = vpop.f32.mrb[0].mxu0
    %v3733 = vadd.f32 %v3442, %v3732
    %v3734 = vpop.f32.mrb[0].mxu0
    %v3735 = vadd.f32 %v3444, %v3734
    %v3736 = vand.u32 %v2220, 4294901760
    %v3737 = vsub.f32 %v2220, %v3736
    %v3738 = vand.u32 %v3737, 4294901760
    %3739 = vmatprep.mubr.f32.mxu0 %v3738
    %v3740 = vand.u32 %v2219, 4294901760
    %v3741 = vsub.f32 %v2219, %v3740
    %v3742 = vand.u32 %v3741, 4294901760
    %3743 = vmatmul.mubr.f32.gmra.mrb[0].mxu0 %v3742
    %v3744 = vpop.f32.mrb[0].mxu0
    %v3745 = vadd.f32 %v3452, %v3744
    %v3746 = vpop.f32.mrb[0].mxu0
    %v3747 = vadd.f32 %v3454, %v3746
    %v3748 = vand.u32 %v2222, 4294901760
    %v3749 = vsub.f32 %v2222, %v3748
    %v3750 = vand.u32 %v3749, 4294901760
    %3751 = vmatprep.mubr.f32.mxu0 %v3750
    %v3752 = vand.u32 %v2221, 4294901760
    %v3753 = vsub.f32 %v2221, %v3752
    %v3754 = vand.u32 %v3753, 4294901760
    %3755 = vmatmul.mubr.f32.gmra.mrb[0].mxu0 %v3754
    %v3756 = vpop.f32.mrb[0].mxu0
    %v3757 = vadd.f32 %v3462, %v3756
    %v3758 = vpop.f32.mrb[0].mxu0
    %v3759 = vadd.f32 %v3464, %v3758
    %v3760 = vand.u32 %v2224, 4294901760
    %v3761 = vsub.f32 %v2224, %v3760
    %v3762 = vand.u32 %v3761, 4294901760
    %3763 = vmatprep.mubr.f32.mxu0 %v3762
    %v3764 = vand.u32 %v2223, 4294901760
    %v3765 = vsub.f32 %v2223, %v3764
    %v3766 = vand.u32 %v3765, 4294901760
    %3767 = vmatmul.mubr.f32.gmra.mrb[0].mxu0 %v3766
    %v3768 = vpop.f32.mrb[0].mxu0
    %v3769 = vadd.f32 %v3472, %v3768
    %v3770 = vpop.f32.mrb[0].mxu0
    %v3771 = vadd.f32 %v3474, %v3770
    %v3772 = vand.u32 %v2226, 4294901760
    %v3773 = vsub.f32 %v2226, %v3772
    %v3774 = vand.u32 %v3773, 4294901760
    %3775 = vmatprep.mubr.f32.mxu0 %v3774
    %v3776 = vand.u32 %v2225, 4294901760
    %v3777 = vsub.f32 %v2225, %v3776
    %v3778 = vand.u32 %v3777, 4294901760
    %3779 = vmatmul.mubr.f32.gmra.mrb[0].mxu0 %v3778
    %v3780 = vpop.f32.mrb[0].mxu0
    %v3781 = vadd.f32 %v3482, %v3780
    %v3782 = vpop.f32.mrb[0].mxu0
    %v3783 = vadd.f32 %v3484, %v3782
    %v3784 = vand.u32 %v2228, 4294901760
    %v3785 = vsub.f32 %v2228, %v3784
    %v3786 = vand.u32 %v3785, 4294901760
    %3787 = vmatprep.mubr.f32.mxu0 %v3786
    %v3788 = vand.u32 %v2227, 4294901760
    %v3789 = vsub.f32 %v2227, %v3788
    %v3790 = vand.u32 %v3789, 4294901760
    %3791 = vmatmul.mubr.f32.gmra.mrb[0].mxu0 %v3790
    %v3792 = vpop.f32.mrb[0].mxu0
    %v3793 = vadd.f32 %v3492, %v3792
    %v3794 = vpop.f32.mrb[0].mxu0
    %v3795 = vadd.f32 %v3494, %v3794
    %v3796 = vand.u32 %v2230, 4294901760
    %v3797 = vsub.f32 %v2230, %v3796
    %v3798 = vand.u32 %v3797, 4294901760
    %3799 = vmatprep.mubr.f32.mxu0 %v3798
    %v3800 = vand.u32 %v2229, 4294901760
    %v3801 = vsub.f32 %v2229, %v3800
    %v3802 = vand.u32 %v3801, 4294901760
    %3803 = vmatmul.mubr.f32.gmra.mrb[0].mxu0 %v3802
    %v3804 = vpop.f32.mrb[0].mxu0
    %v3805 = vadd.f32 %v3502, %v3804
    %v3806 = vpop.f32.mrb[0].mxu0
    %v3807 = vadd.f32 %v3504, %v3806
    %v3808 = vand.u32 %v2232, 4294901760
    %v3809 = vsub.f32 %v2232, %v3808
    %v3810 = vand.u32 %v3809, 4294901760
    %3811 = vmatprep.mubr.f32.mxu0 %v3810
    %v3812 = vand.u32 %v2231, 4294901760
    %v3813 = vsub.f32 %v2231, %v3812
    %v3814 = vand.u32 %v3813, 4294901760
    %3815 = vmatmul.mubr.f32.gmra.mrb[0].mxu0 %v3814
    %v3816 = vpop.f32.mrb[0].mxu0
    %v3817 = vadd.f32 %v3512, %v3816
    %v3818 = vpop.f32.mrb[0].mxu0
    %v3819 = vadd.f32 %v3514, %v3818
    %v3820 = vand.u32 %v2234, 4294901760
    %v3821 = vsub.f32 %v2234, %v3820
    %v3822 = vand.u32 %v3821, 4294901760
    %3823 = vmatprep.mubr.f32.mxu0 %v3822
    %v3824 = vand.u32 %v2233, 4294901760
    %v3825 = vsub.f32 %v2233, %v3824
    %v3826 = vand.u32 %v3825, 4294901760
    %3827 = vmatmul.mubr.f32.gmra.mrb[0].mxu0 %v3826
    %v3828 = vpop.f32.mrb[0].mxu0
    %v3829 = vadd.f32 %v3522, %v3828
    %v3830 = vpop.f32.mrb[0].mxu0
    %v3831 = vadd.f32 %v3524, %v3830
    %v3832 = vand.u32 %v2236, 4294901760
    %v3833 = vsub.f32 %v2236, %v3832
    %v3834 = vand.u32 %v3833, 4294901760
    %3835 = vmatprep.mubr.f32.mxu0 %v3834
    %v3836 = vand.u32 %v2235, 4294901760
    %v3837 = vsub.f32 %v2235, %v3836
    %v3838 = vand.u32 %v3837, 4294901760
    %3839 = vmatmul.mubr.f32.gmra.mrb[0].mxu0 %v3838
    %v3840 = vpop.f32.mrb[0].mxu0
    %v3841 = vadd.f32 %v3532, %v3840
    %v3842 = vpop.f32.mrb[0].mxu0
    %v3843 = vadd.f32 %v3534, %v3842
    %v3844 = vand.u32 %v2238, 4294901760
    %v3845 = vsub.f32 %v2238, %v3844
    %v3846 = vand.u32 %v3845, 4294901760
    %3847 = vmatprep.mubr.f32.mxu0 %v3846
    %v3848 = vand.u32 %v2237, 4294901760
    %v3849 = vsub.f32 %v2237, %v3848
    %v3850 = vand.u32 %v3849, 4294901760
    %3851 = vmatmul.mubr.f32.gmra.mrb[0].mxu0 %v3850
    %v3852 = vpop.f32.mrb[0].mxu0
    %v3853 = vadd.f32 %v3542, %v3852
    %v3854 = vpop.f32.mrb[0].mxu0
    %v3855 = vadd.f32 %v3544, %v3854
    %v3856 = vand.u32 %v2240, 4294901760
    %v3857 = vsub.f32 %v2240, %v3856
    %v3858 = vand.u32 %v3857, 4294901760
    %3859 = vmatprep.mubr.f32.mxu0 %v3858
    %v3860 = vand.u32 %v2239, 4294901760
    %v3861 = vsub.f32 %v2239, %v3860
    %v3862 = vand.u32 %v3861, 4294901760
    %3863 = vmatmul.mubr.f32.gmra.mrb[0].mxu0 %v3862
    %v3864 = vpop.f32.mrb[0].mxu0
    %v3865 = vadd.f32 %v3552, %v3864
    %v3866 = vpop.f32.mrb[0].mxu0
    %v3867 = vadd.f32 %v3554, %v3866
    %v3868 = vand.u32 %v2242, 4294901760
    %v3869 = vsub.f32 %v2242, %v3868
    %v3870 = vand.u32 %v3869, 4294901760
    %3871 = vmatprep.mubr.f32.mxu0 %v3870
    %v3872 = vand.u32 %v2241, 4294901760
    %v3873 = vsub.f32 %v2241, %v3872
    %v3874 = vand.u32 %v3873, 4294901760
    %3875 = vmatmul.mubr.f32.gmra.mrb[0].mxu0 %v3874
    %v3876 = vpop.f32.mrb[0].mxu0
    %v3877 = vadd.f32 %v3562, %v3876
    %v3878 = vpop.f32.mrb[0].mxu0
    %v3879 = vadd.f32 %v3564, %v3878
    %v3880 = vand.u32 %v2244, 4294901760
    %v3881 = vsub.f32 %v2244, %v3880
    %v3882 = vand.u32 %v3881, 4294901760
    %3883 = vmatprep.mubr.f32.mxu0 %v3882
    %v3884 = vand.u32 %v2243, 4294901760
    %v3885 = vsub.f32 %v2243, %v3884
    %v3886 = vand.u32 %v3885, 4294901760
    %3887 = vmatmul.mubr.f32.gmra.mrb[0].mxu0 %v3886
    %v3888 = vpop.f32.mrb[0].mxu0
    %v3889 = vadd.f32 %v3572, %v3888
    %v3890 = vpop.f32.mrb[0].mxu0
    %v3891 = vadd.f32 %v3574, %v3890
    %v3892 = vand.u32 %v2246, 4294901760
    %v3893 = vsub.f32 %v2246, %v3892
    %v3894 = vand.u32 %v3893, 4294901760
    %3895 = vmatprep.mubr.f32.mxu0 %v3894
    %v3896 = vand.u32 %v2245, 4294901760
    %v3897 = vsub.f32 %v2245, %v3896
    %v3898 = vand.u32 %v3897, 4294901760
    %3899 = vmatmul.mubr.f32.gmra.mrb[0].mxu0 %v3898
    %v3900 = vpop.f32.mrb[0].mxu0
    %v3901 = vadd.f32 %v3582, %v3900
    %v3902 = vpop.f32.mrb[0].mxu0
    %v3903 = vadd.f32 %v3584, %v3902
    %v3904 = vand.u32 %v2248, 4294901760
    %v3905 = vsub.f32 %v2248, %v3904
    %v3906 = vand.u32 %v3905, 4294901760
    %3907 = vmatprep.mubr.f32.mxu0 %v3906
    %v3908 = vand.u32 %v2247, 4294901760
    %v3909 = vsub.f32 %v2247, %v3908
    %v3910 = vand.u32 %v3909, 4294901760
    %3911 = vmatmul.mubr.f32.gmra.mrb[0].mxu0 %v3910
    %v3912 = vpop.f32.mrb[0].mxu0
    %v3913 = vadd.f32 %v3592, %v3912
    %v3914 = vpop.f32.mrb[0].mxu0
    %v3915 = vadd.f32 %v3594, %v3914
    %3916 = vdwg.mxu0
    %v3917 = vand.u32 %v2154, 4294901760
    %v3918 = vsub.f32 %v2154, %v3917
    %v3919 = vand.u32 %v3918, 4294901760
    %3920 = vmatprep.subr.mxu0 %v3919
    %v3921 = vand.u32 %v2153, 4294901760
    %v3922 = vsub.f32 %v2153, %v3921
    %v3923 = vand.u32 %v3922, 4294901760
    %3924 = vmatpush1.msra.mxu0 %v3923
    %v3925 = vand.u32 %v2156, 4294901760
    %v3926 = vsub.f32 %v2156, %v3925
    %v3927 = vand.u32 %v3926, 4294901760
    %3928 = vmatprep.subr.mxu0 %v3927
    %v3929 = vand.u32 %v2155, 4294901760
    %v3930 = vsub.f32 %v2155, %v3929
    %v3931 = vand.u32 %v3930, 4294901760
    %3932 = vmatpush1.msra.mxu0 %v3931
    %v3933 = vand.u32 %v2158, 4294901760
    %v3934 = vsub.f32 %v2158, %v3933
    %v3935 = vand.u32 %v3934, 4294901760
    %3936 = vmatprep.subr.mxu0 %v3935
    %v3937 = vand.u32 %v2157, 4294901760
    %v3938 = vsub.f32 %v2157, %v3937
    %v3939 = vand.u32 %v3938, 4294901760
    %3940 = vmatpush1.msra.mxu0 %v3939
    %v3941 = vand.u32 %v2160, 4294901760
    %v3942 = vsub.f32 %v2160, %v3941
    %v3943 = vand.u32 %v3942, 4294901760
    %3944 = vmatprep.subr.mxu0 %v3943
    %v3945 = vand.u32 %v2159, 4294901760
    %v3946 = vsub.f32 %v2159, %v3945
    %v3947 = vand.u32 %v3946, 4294901760
    %3948 = vmatpush1.msra.mxu0 %v3947
    %v3949 = vand.u32 %v2162, 4294901760
    %v3950 = vsub.f32 %v2162, %v3949
    %v3951 = vand.u32 %v3950, 4294901760
    %3952 = vmatprep.subr.mxu0 %v3951
    %v3953 = vand.u32 %v2161, 4294901760
    %v3954 = vsub.f32 %v2161, %v3953
    %v3955 = vand.u32 %v3954, 4294901760
    %3956 = vmatpush1.msra.mxu0 %v3955
    %v3957 = vand.u32 %v2164, 4294901760
    %v3958 = vsub.f32 %v2164, %v3957
    %v3959 = vand.u32 %v3958, 4294901760
    %3960 = vmatprep.subr.mxu0 %v3959
    %v3961 = vand.u32 %v2163, 4294901760
    %v3962 = vsub.f32 %v2163, %v3961
    %v3963 = vand.u32 %v3962, 4294901760
    %3964 = vmatpush1.msra.mxu0 %v3963
    %v3965 = vand.u32 %v2166, 4294901760
    %v3966 = vsub.f32 %v2166, %v3965
    %v3967 = vand.u32 %v3966, 4294901760
    %3968 = vmatprep.subr.mxu0 %v3967
    %v3969 = vand.u32 %v2165, 4294901760
    %v3970 = vsub.f32 %v2165, %v3969
    %v3971 = vand.u32 %v3970, 4294901760
    %3972 = vmatpush1.msra.mxu0 %v3971
    %v3973 = vand.u32 %v2168, 4294901760
    %v3974 = vsub.f32 %v2168, %v3973
    %v3975 = vand.u32 %v3974, 4294901760
    %3976 = vmatprep.subr.mxu0 %v3975
    %v3977 = vand.u32 %v2167, 4294901760
    %v3978 = vsub.f32 %v2167, %v3977
    %v3979 = vand.u32 %v3978, 4294901760
    %3980 = vmatpush1.msra.mxu0 %v3979
    %v3981 = vand.u32 %v2170, 4294901760
    %v3982 = vsub.f32 %v2170, %v3981
    %v3983 = vand.u32 %v3982, 4294901760
    %3984 = vmatprep.subr.mxu0 %v3983
    %v3985 = vand.u32 %v2169, 4294901760
    %v3986 = vsub.f32 %v2169, %v3985
    %v3987 = vand.u32 %v3986, 4294901760
    %3988 = vmatpush1.msra.mxu0 %v3987
    %v3989 = vand.u32 %v2172, 4294901760
    %v3990 = vsub.f32 %v2172, %v3989
    %v3991 = vand.u32 %v3990, 4294901760
    %3992 = vmatprep.subr.mxu0 %v3991
    %v3993 = vand.u32 %v2171, 4294901760
    %v3994 = vsub.f32 %v2171, %v3993
    %v3995 = vand.u32 %v3994, 4294901760
    %3996 = vmatpush1.msra.mxu0 %v3995
    %v3997 = vand.u32 %v2174, 4294901760
    %v3998 = vsub.f32 %v2174, %v3997
    %v3999 = vand.u32 %v3998, 4294901760
    %4000 = vmatprep.subr.mxu0 %v3999
    %v4001 = vand.u32 %v2173, 4294901760
    %v4002 = vsub.f32 %v2173, %v4001
    %v4003 = vand.u32 %v4002, 4294901760
    %4004 = vmatpush1.msra.mxu0 %v4003
    %v4005 = vand.u32 %v2176, 4294901760
    %v4006 = vsub.f32 %v2176, %v4005
    %v4007 = vand.u32 %v4006, 4294901760
    %4008 = vmatprep.subr.mxu0 %v4007
    %v4009 = vand.u32 %v2175, 4294901760
    %v4010 = vsub.f32 %v2175, %v4009
    %v4011 = vand.u32 %v4010, 4294901760
    %4012 = vmatpush1.msra.mxu0 %v4011
    %v4013 = vand.u32 %v2178, 4294901760
    %v4014 = vsub.f32 %v2178, %v4013
    %v4015 = vand.u32 %v4014, 4294901760
    %4016 = vmatprep.subr.mxu0 %v4015
    %v4017 = vand.u32 %v2177, 4294901760
    %v4018 = vsub.f32 %v2177, %v4017
    %v4019 = vand.u32 %v4018, 4294901760
    %4020 = vmatpush1.msra.mxu0 %v4019
    %v4021 = vand.u32 %v2180, 4294901760
    %v4022 = vsub.f32 %v2180, %v4021
    %v4023 = vand.u32 %v4022, 4294901760
    %4024 = vmatprep.subr.mxu0 %v4023
    %v4025 = vand.u32 %v2179, 4294901760
    %v4026 = vsub.f32 %v2179, %v4025
    %v4027 = vand.u32 %v4026, 4294901760
    %4028 = vmatpush1.msra.mxu0 %v4027
    %v4029 = vand.u32 %v2182, 4294901760
    %v4030 = vsub.f32 %v2182, %v4029
    %v4031 = vand.u32 %v4030, 4294901760
    %4032 = vmatprep.subr.mxu0 %v4031
    %v4033 = vand.u32 %v2181, 4294901760
    %v4034 = vsub.f32 %v2181, %v4033
    %v4035 = vand.u32 %v4034, 4294901760
    %4036 = vmatpush1.msra.mxu0 %v4035
    %v4037 = vand.u32 %v2184, 4294901760
    %v4038 = vsub.f32 %v2184, %v4037
    %v4039 = vand.u32 %v4038, 4294901760
    %4040 = vmatprep.subr.mxu0 %v4039
    %v4041 = vand.u32 %v2183, 4294901760
    %v4042 = vsub.f32 %v2183, %v4041
    %v4043 = vand.u32 %v4042, 4294901760
    %4044 = vmatpush1.msra.mxu0 %v4043
    %v4045 = vand.u32 %v2186, 4294901760
    %v4046 = vsub.f32 %v2186, %v4045
    %v4047 = vand.u32 %v4046, 4294901760
    %4048 = vmatprep.subr.mxu0 %v4047
    %v4049 = vand.u32 %v2185, 4294901760
    %v4050 = vsub.f32 %v2185, %v4049
    %v4051 = vand.u32 %v4050, 4294901760
    %4052 = vmatpush1.msra.mxu0 %v4051
    %v4053 = vand.u32 %v2188, 4294901760
    %v4054 = vsub.f32 %v2188, %v4053
    %v4055 = vand.u32 %v4054, 4294901760
    %4056 = vmatprep.subr.mxu0 %v4055
    %v4057 = vand.u32 %v2187, 4294901760
    %v4058 = vsub.f32 %v2187, %v4057
    %v4059 = vand.u32 %v4058, 4294901760
    %4060 = vmatpush1.msra.mxu0 %v4059
    %v4061 = vand.u32 %v2190, 4294901760
    %v4062 = vsub.f32 %v2190, %v4061
    %v4063 = vand.u32 %v4062, 4294901760
    %4064 = vmatprep.subr.mxu0 %v4063
    %v4065 = vand.u32 %v2189, 4294901760
    %v4066 = vsub.f32 %v2189, %v4065
    %v4067 = vand.u32 %v4066, 4294901760
    %4068 = vmatpush1.msra.mxu0 %v4067
    %v4069 = vand.u32 %v2192, 4294901760
    %v4070 = vsub.f32 %v2192, %v4069
    %v4071 = vand.u32 %v4070, 4294901760
    %4072 = vmatprep.subr.mxu0 %v4071
    %v4073 = vand.u32 %v2191, 4294901760
    %v4074 = vsub.f32 %v2191, %v4073
    %v4075 = vand.u32 %v4074, 4294901760
    %4076 = vmatpush1.msra.mxu0 %v4075
    %v4077 = vand.u32 %v2194, 4294901760
    %v4078 = vsub.f32 %v2194, %v4077
    %v4079 = vand.u32 %v4078, 4294901760
    %4080 = vmatprep.subr.mxu0 %v4079
    %v4081 = vand.u32 %v2193, 4294901760
    %v4082 = vsub.f32 %v2193, %v4081
    %v4083 = vand.u32 %v4082, 4294901760
    %4084 = vmatpush1.msra.mxu0 %v4083
    %v4085 = vand.u32 %v2196, 4294901760
    %v4086 = vsub.f32 %v2196, %v4085
    %v4087 = vand.u32 %v4086, 4294901760
    %4088 = vmatprep.subr.mxu0 %v4087
    %v4089 = vand.u32 %v2195, 4294901760
    %v4090 = vsub.f32 %v2195, %v4089
    %v4091 = vand.u32 %v4090, 4294901760
    %4092 = vmatpush1.msra.mxu0 %v4091
    %v4093 = vand.u32 %v2198, 4294901760
    %v4094 = vsub.f32 %v2198, %v4093
    %v4095 = vand.u32 %v4094, 4294901760
    %4096 = vmatprep.subr.mxu0 %v4095
    %v4097 = vand.u32 %v2197, 4294901760
    %v4098 = vsub.f32 %v2197, %v4097
    %v4099 = vand.u32 %v4098, 4294901760
    %4100 = vmatpush1.msra.mxu0 %v4099
    %v4101 = vand.u32 %v2200, 4294901760
    %v4102 = vsub.f32 %v2200, %v4101
    %v4103 = vand.u32 %v4102, 4294901760
    %4104 = vmatprep.subr.mxu0 %v4103
    %v4105 = vand.u32 %v2199, 4294901760
    %v4106 = vsub.f32 %v2199, %v4105
    %v4107 = vand.u32 %v4106, 4294901760
    %4108 = vmatpush1.msra.mxu0 %v4107
    %v4109 = vand.u32 %v2202, 4294901760
    %v4110 = vsub.f32 %v2202, %v4109
    %v4111 = vand.u32 %v4110, 4294901760
    %4112 = vmatprep.subr.mxu0 %v4111
    %v4113 = vand.u32 %v2201, 4294901760
    %v4114 = vsub.f32 %v2201, %v4113
    %v4115 = vand.u32 %v4114, 4294901760
    %4116 = vmatpush1.msra.mxu0 %v4115
    %v4117 = vand.u32 %v2204, 4294901760
    %v4118 = vsub.f32 %v2204, %v4117
    %v4119 = vand.u32 %v4118, 4294901760
    %4120 = vmatprep.subr.mxu0 %v4119
    %v4121 = vand.u32 %v2203, 4294901760
    %v4122 = vsub.f32 %v2203, %v4121
    %v4123 = vand.u32 %v4122, 4294901760
    %4124 = vmatpush1.msra.mxu0 %v4123
    %v4125 = vand.u32 %v2206, 4294901760
    %v4126 = vsub.f32 %v2206, %v4125
    %v4127 = vand.u32 %v4126, 4294901760
    %4128 = vmatprep.subr.mxu0 %v4127
    %v4129 = vand.u32 %v2205, 4294901760
    %v4130 = vsub.f32 %v2205, %v4129
    %v4131 = vand.u32 %v4130, 4294901760
    %4132 = vmatpush1.msra.mxu0 %v4131
    %v4133 = vand.u32 %v2208, 4294901760
    %v4134 = vsub.f32 %v2208, %v4133
    %v4135 = vand.u32 %v4134, 4294901760
    %4136 = vmatprep.subr.mxu0 %v4135
    %v4137 = vand.u32 %v2207, 4294901760
    %v4138 = vsub.f32 %v2207, %v4137
    %v4139 = vand.u32 %v4138, 4294901760
    %4140 = vmatpush1.msra.mxu0 %v4139
    %v4141 = vand.u32 %v2210, 4294901760
    %v4142 = vsub.f32 %v2210, %v4141
    %v4143 = vand.u32 %v4142, 4294901760
    %4144 = vmatprep.subr.mxu0 %v4143
    %v4145 = vand.u32 %v2209, 4294901760
    %v4146 = vsub.f32 %v2209, %v4145
    %v4147 = vand.u32 %v4146, 4294901760
    %4148 = vmatpush1.msra.mxu0 %v4147
    %v4149 = vand.u32 %v2212, 4294901760
    %v4150 = vsub.f32 %v2212, %v4149
    %v4151 = vand.u32 %v4150, 4294901760
    %4152 = vmatprep.subr.mxu0 %v4151
    %v4153 = vand.u32 %v2211, 4294901760
    %v4154 = vsub.f32 %v2211, %v4153
    %v4155 = vand.u32 %v4154, 4294901760
    %4156 = vmatpush1.msra.mxu0 %v4155
    %v4157 = vand.u32 %v2214, 4294901760
    %v4158 = vsub.f32 %v2214, %v4157
    %v4159 = vand.u32 %v4158, 4294901760
    %4160 = vmatprep.subr.mxu0 %v4159
    %v4161 = vand.u32 %v2213, 4294901760
    %v4162 = vsub.f32 %v2213, %v4161
    %v4163 = vand.u32 %v4162, 4294901760
    %4164 = vmatpush1.msra.mxu0 %v4163
    %v4165 = vand.u32 %v2216, 4294901760
    %v4166 = vsub.f32 %v2216, %v4165
    %v4167 = vand.u32 %v4166, 4294901760
    %4168 = vmatprep.subr.mxu0 %v4167
    %v4169 = vand.u32 %v2215, 4294901760
    %v4170 = vsub.f32 %v2215, %v4169
    %v4171 = vand.u32 %v4170, 4294901760
    %4172 = vmatpush1.msra.mxu0 %v4171
    %v4173 = vand.u32 %v2218, 4294901760
    %4174 = vmatprep.mubr.f32.mxu0 %v4173
    %v4175 = vand.u32 %v2217, 4294901760
    %4176 = vmatmul.mubr.f32.gmra.mrb[0].mxu0 %v4175
    %v4177 = vpop.f32.mrb[0].mxu0
    %v4178 = vadd.f32 %v3733, %v4177
    %v4179 = vpop.f32.mrb[0].mxu0
    %v4180 = vadd.f32 %v3735, %v4179
    %v4181 = vand.u32 %v2220, 4294901760
    %4182 = vmatprep.mubr.f32.mxu0 %v4181
    %v4183 = vand.u32 %v2219, 4294901760
    %4184 = vmatmul.mubr.f32.gmra.mrb[0].mxu0 %v4183
    %v4185 = vpop.f32.mrb[0].mxu0
    %v4186 = vadd.f32 %v3745, %v4185
    %v4187 = vpop.f32.mrb[0].mxu0
    %v4188 = vadd.f32 %v3747, %v4187
    %v4189 = vand.u32 %v2222, 4294901760
    %4190 = vmatprep.mubr.f32.mxu0 %v4189
    %v4191 = vand.u32 %v2221, 4294901760
    %4192 = vmatmul.mubr.f32.gmra.mrb[0].mxu0 %v4191
    %v4193 = vpop.f32.mrb[0].mxu0
    %v4194 = vadd.f32 %v3757, %v4193
    %v4195 = vpop.f32.mrb[0].mxu0
    %v4196 = vadd.f32 %v3759, %v4195
    %v4197 = vand.u32 %v2224, 4294901760
    %4198 = vmatprep.mubr.f32.mxu0 %v4197
    %v4199 = vand.u32 %v2223, 4294901760
    %4200 = vmatmul.mubr.f32.gmra.mrb[0].mxu0 %v4199
    %v4201 = vpop.f32.mrb[0].mxu0
    %v4202 = vadd.f32 %v3769, %v4201
    %v4203 = vpop.f32.mrb[0].mxu0
    %v4204 = vadd.f32 %v3771, %v4203
    %v4205 = vand.u32 %v2226, 4294901760
    %4206 = vmatprep.mubr.f32.mxu0 %v4205
    %v4207 = vand.u32 %v2225, 4294901760
    %4208 = vmatmul.mubr.f32.gmra.mrb[0].mxu0 %v4207
    %v4209 = vpop.f32.mrb[0].mxu0
    %v4210 = vadd.f32 %v3781, %v4209
    %v4211 = vpop.f32.mrb[0].mxu0
    %v4212 = vadd.f32 %v3783, %v4211
    %v4213 = vand.u32 %v2228, 4294901760
    %4214 = vmatprep.mubr.f32.mxu0 %v4213
    %v4215 = vand.u32 %v2227, 4294901760
    %4216 = vmatmul.mubr.f32.gmra.mrb[0].mxu0 %v4215
    %v4217 = vpop.f32.mrb[0].mxu0
    %v4218 = vadd.f32 %v3793, %v4217
    %v4219 = vpop.f32.mrb[0].mxu0
    %v4220 = vadd.f32 %v3795, %v4219
    %v4221 = vand.u32 %v2230, 4294901760
    %4222 = vmatprep.mubr.f32.mxu0 %v4221
    %v4223 = vand.u32 %v2229, 4294901760
    %4224 = vmatmul.mubr.f32.gmra.mrb[0].mxu0 %v4223
    %v4225 = vpop.f32.mrb[0].mxu0
    %v4226 = vadd.f32 %v3805, %v4225
    %v4227 = vpop.f32.mrb[0].mxu0
    %v4228 = vadd.f32 %v3807, %v4227
    %v4229 = vand.u32 %v2232, 4294901760
    %4230 = vmatprep.mubr.f32.mxu0 %v4229
    %v4231 = vand.u32 %v2231, 4294901760
    %4232 = vmatmul.mubr.f32.gmra.mrb[0].mxu0 %v4231
    %v4233 = vpop.f32.mrb[0].mxu0
    %v4234 = vadd.f32 %v3817, %v4233
    %v4235 = vpop.f32.mrb[0].mxu0
    %v4236 = vadd.f32 %v3819, %v4235
    %v4237 = vand.u32 %v2234, 4294901760
    %4238 = vmatprep.mubr.f32.mxu0 %v4237
    %v4239 = vand.u32 %v2233, 4294901760
    %4240 = vmatmul.mubr.f32.gmra.mrb[0].mxu0 %v4239
    %v4241 = vpop.f32.mrb[0].mxu0
    %v4242 = vadd.f32 %v3829, %v4241
    %v4243 = vpop.f32.mrb[0].mxu0
    %v4244 = vadd.f32 %v3831, %v4243
    %v4245 = vand.u32 %v2236, 4294901760
    %4246 = vmatprep.mubr.f32.mxu0 %v4245
    %v4247 = vand.u32 %v2235, 4294901760
    %4248 = vmatmul.mubr.f32.gmra.mrb[0].mxu0 %v4247
    %v4249 = vpop.f32.mrb[0].mxu0
    %v4250 = vadd.f32 %v3841, %v4249
    %v4251 = vpop.f32.mrb[0].mxu0
    %v4252 = vadd.f32 %v3843, %v4251
    %v4253 = vand.u32 %v2238, 4294901760
    %4254 = vmatprep.mubr.f32.mxu0 %v4253
    %v4255 = vand.u32 %v2237, 4294901760
    %4256 = vmatmul.mubr.f32.gmra.mrb[0].mxu0 %v4255
    %v4257 = vpop.f32.mrb[0].mxu0
    %v4258 = vadd.f32 %v3853, %v4257
    %v4259 = vpop.f32.mrb[0].mxu0
    %v4260 = vadd.f32 %v3855, %v4259
    %v4261 = vand.u32 %v2240, 4294901760
    %4262 = vmatprep.mubr.f32.mxu0 %v4261
    %v4263 = vand.u32 %v2239, 4294901760
    %4264 = vmatmul.mubr.f32.gmra.mrb[0].mxu0 %v4263
    %v4265 = vpop.f32.mrb[0].mxu0
    %v4266 = vadd.f32 %v3865, %v4265
    %v4267 = vpop.f32.mrb[0].mxu0
    %v4268 = vadd.f32 %v3867, %v4267
    %v4269 = vand.u32 %v2242, 4294901760
    %4270 = vmatprep.mubr.f32.mxu0 %v4269
    %v4271 = vand.u32 %v2241, 4294901760
    %4272 = vmatmul.mubr.f32.gmra.mrb[0].mxu0 %v4271
    %v4273 = vpop.f32.mrb[0].mxu0
    %v4274 = vadd.f32 %v3877, %v4273
    %v4275 = vpop.f32.mrb[0].mxu0
    %v4276 = vadd.f32 %v3879, %v4275
    %v4277 = vand.u32 %v2244, 4294901760
    %4278 = vmatprep.mubr.f32.mxu0 %v4277
    %v4279 = vand.u32 %v2243, 4294901760
    %4280 = vmatmul.mubr.f32.gmra.mrb[0].mxu0 %v4279
    %v4281 = vpop.f32.mrb[0].mxu0
    %v4282 = vadd.f32 %v3889, %v4281
    %v4283 = vpop.f32.mrb[0].mxu0
    %v4284 = vadd.f32 %v3891, %v4283
    %v4285 = vand.u32 %v2246, 4294901760
    %4286 = vmatprep.mubr.f32.mxu0 %v4285
    %v4287 = vand.u32 %v2245, 4294901760
    %4288 = vmatmul.mubr.f32.gmra.mrb[0].mxu0 %v4287
    %v4289 = vpop.f32.mrb[0].mxu0
    %v4290 = vadd.f32 %v3901, %v4289
    %v4291 = vpop.f32.mrb[0].mxu0
    %v4292 = vadd.f32 %v3903, %v4291
    %v4293 = vand.u32 %v2248, 4294901760
    %4294 = vmatprep.mubr.f32.mxu0 %v4293
    %v4295 = vand.u32 %v2247, 4294901760
    %4296 = vmatmul.mubr.f32.gmra.mrb[0].mxu0 %v4295
    %v4297 = vpop.f32.mrb[0].mxu0
    %v4298 = vadd.f32 %v3913, %v4297
    %v4299 = vpop.f32.mrb[0].mxu0
    %v4300 = vadd.f32 %v3915, %v4299
    %4301 = vdwg.mxu0
    %v4302 = vand.u32 %v2154, 4294901760
    %4303 = vmatprep.subr.mxu0 %v4302
    %v4304 = vand.u32 %v2153, 4294901760
    %4305 = vmatpush1.msra.mxu0 %v4304
    %v4306 = vand.u32 %v2156, 4294901760
    %4307 = vmatprep.subr.mxu0 %v4306
    %v4308 = vand.u32 %v2155, 4294901760
    %4309 = vmatpush1.msra.mxu0 %v4308
    %v4310 = vand.u32 %v2158, 4294901760
    %4311 = vmatprep.subr.mxu0 %v4310
    %v4312 = vand.u32 %v2157, 4294901760
    %4313 = vmatpush1.msra.mxu0 %v4312
    %v4314 = vand.u32 %v2160, 4294901760
    %4315 = vmatprep.subr.mxu0 %v4314
    %v4316 = vand.u32 %v2159, 4294901760
    %4317 = vmatpush1.msra.mxu0 %v4316
    %v4318 = vand.u32 %v2162, 4294901760
    %4319 = vmatprep.subr.mxu0 %v4318
    %v4320 = vand.u32 %v2161, 4294901760
    %4321 = vmatpush1.msra.mxu0 %v4320
    %v4322 = vand.u32 %v2164, 4294901760
    %4323 = vmatprep.subr.mxu0 %v4322
    %v4324 = vand.u32 %v2163, 4294901760
    %4325 = vmatpush1.msra.mxu0 %v4324
    %v4326 = vand.u32 %v2166, 4294901760
    %4327 = vmatprep.subr.mxu0 %v4326
    %v4328 = vand.u32 %v2165, 4294901760
    %4329 = vmatpush1.msra.mxu0 %v4328
    %v4330 = vand.u32 %v2168, 4294901760
    %4331 = vmatprep.subr.mxu0 %v4330
    %v4332 = vand.u32 %v2167, 4294901760
    %4333 = vmatpush1.msra.mxu0 %v4332
    %v4334 = vand.u32 %v2170, 4294901760
    %4335 = vmatprep.subr.mxu0 %v4334
    %v4336 = vand.u32 %v2169, 4294901760
    %4337 = vmatpush1.msra.mxu0 %v4336
    %v4338 = vand.u32 %v2172, 4294901760
    %4339 = vmatprep.subr.mxu0 %v4338
    %v4340 = vand.u32 %v2171, 4294901760
    %4341 = vmatpush1.msra.mxu0 %v4340
    %v4342 = vand.u32 %v2174, 4294901760
    %4343 = vmatprep.subr.mxu0 %v4342
    %v4344 = vand.u32 %v2173, 4294901760
    %4345 = vmatpush1.msra.mxu0 %v4344
    %v4346 = vand.u32 %v2176, 4294901760
    %4347 = vmatprep.subr.mxu0 %v4346
    %v4348 = vand.u32 %v2175, 4294901760
    %4349 = vmatpush1.msra.mxu0 %v4348
    %v4350 = vand.u32 %v2178, 4294901760
    %4351 = vmatprep.subr.mxu0 %v4350
    %v4352 = vand.u32 %v2177, 4294901760
    %4353 = vmatpush1.msra.mxu0 %v4352
    %v4354 = vand.u32 %v2180, 4294901760
    %4355 = vmatprep.subr.mxu0 %v4354
    %v4356 = vand.u32 %v2179, 4294901760
    %4357 = vmatpush1.msra.mxu0 %v4356
    %v4358 = vand.u32 %v2182, 4294901760
    %4359 = vmatprep.subr.mxu0 %v4358
    %v4360 = vand.u32 %v2181, 4294901760
    %4361 = vmatpush1.msra.mxu0 %v4360
    %v4362 = vand.u32 %v2184, 4294901760
    %4363 = vmatprep.subr.mxu0 %v4362
    %v4364 = vand.u32 %v2183, 4294901760
    %4365 = vmatpush1.msra.mxu0 %v4364
    %v4366 = vand.u32 %v2186, 4294901760
    %4367 = vmatprep.subr.mxu0 %v4366
    %v4368 = vand.u32 %v2185, 4294901760
    %4369 = vmatpush1.msra.mxu0 %v4368
    %v4370 = vand.u32 %v2188, 4294901760
    %4371 = vmatprep.subr.mxu0 %v4370
    %v4372 = vand.u32 %v2187, 4294901760
    %4373 = vmatpush1.msra.mxu0 %v4372
    %v4374 = vand.u32 %v2190, 4294901760
    %4375 = vmatprep.subr.mxu0 %v4374
    %v4376 = vand.u32 %v2189, 4294901760
    %4377 = vmatpush1.msra.mxu0 %v4376
    %v4378 = vand.u32 %v2192, 4294901760
    %4379 = vmatprep.subr.mxu0 %v4378
    %v4380 = vand.u32 %v2191, 4294901760
    %4381 = vmatpush1.msra.mxu0 %v4380
    %v4382 = vand.u32 %v2194, 4294901760
    %4383 = vmatprep.subr.mxu0 %v4382
    %v4384 = vand.u32 %v2193, 4294901760
    %4385 = vmatpush1.msra.mxu0 %v4384
    %v4386 = vand.u32 %v2196, 4294901760
    %4387 = vmatprep.subr.mxu0 %v4386
    %v4388 = vand.u32 %v2195, 4294901760
    %4389 = vmatpush1.msra.mxu0 %v4388
    %v4390 = vand.u32 %v2198, 4294901760
    %4391 = vmatprep.subr.mxu0 %v4390
    %v4392 = vand.u32 %v2197, 4294901760
    %4393 = vmatpush1.msra.mxu0 %v4392
    %v4394 = vand.u32 %v2200, 4294901760
    %4395 = vmatprep.subr.mxu0 %v4394
    %v4396 = vand.u32 %v2199, 4294901760
    %4397 = vmatpush1.msra.mxu0 %v4396
    %v4398 = vand.u32 %v2202, 4294901760
    %4399 = vmatprep.subr.mxu0 %v4398
    %v4400 = vand.u32 %v2201, 4294901760
    %4401 = vmatpush1.msra.mxu0 %v4400
    %v4402 = vand.u32 %v2204, 4294901760
    %4403 = vmatprep.subr.mxu0 %v4402
    %v4404 = vand.u32 %v2203, 4294901760
    %4405 = vmatpush1.msra.mxu0 %v4404
    %v4406 = vand.u32 %v2206, 4294901760
    %4407 = vmatprep.subr.mxu0 %v4406
    %v4408 = vand.u32 %v2205, 4294901760
    %4409 = vmatpush1.msra.mxu0 %v4408
    %v4410 = vand.u32 %v2208, 4294901760
    %4411 = vmatprep.subr.mxu0 %v4410
    %v4412 = vand.u32 %v2207, 4294901760
    %4413 = vmatpush1.msra.mxu0 %v4412
    %v4414 = vand.u32 %v2210, 4294901760
    %4415 = vmatprep.subr.mxu0 %v4414
    %v4416 = vand.u32 %v2209, 4294901760
    %4417 = vmatpush1.msra.mxu0 %v4416
    %v4418 = vand.u32 %v2212, 4294901760
    %4419 = vmatprep.subr.mxu0 %v4418
    %v4420 = vand.u32 %v2211, 4294901760
    %4421 = vmatpush1.msra.mxu0 %v4420
    %v4422 = vand.u32 %v2214, 4294901760
    %4423 = vmatprep.subr.mxu0 %v4422
    %v4424 = vand.u32 %v2213, 4294901760
    %4425 = vmatpush1.msra.mxu0 %v4424
    %v4426 = vand.u32 %v2216, 4294901760
    %4427 = vmatprep.subr.mxu0 %v4426
    %v4428 = vand.u32 %v2215, 4294901760
    %4429 = vmatpush1.msra.mxu0 %v4428
    %v4430 = vand.u32 %v2218, 4294901760
    %4431 = vmatprep.mubr.f32.mxu0 %v4430
    %v4432 = vand.u32 %v2217, 4294901760
    %4433 = vmatmul.mubr.f32.gmra.mrb[0].mxu0 %v4432
    %v4434 = vpop.f32.mrb[0].mxu0
    %v4435 = vadd.f32 %v4178, %v4434
    %v4436 = vpop.f32.mrb[0].mxu0
    %v4437 = vadd.f32 %v4180, %v4436
    %v4438 = vand.u32 %v2220, 4294901760
    %4439 = vmatprep.mubr.f32.mxu0 %v4438
    %v4440 = vand.u32 %v2219, 4294901760
    %4441 = vmatmul.mubr.f32.gmra.mrb[0].mxu0 %v4440
    %v4442 = vpop.f32.mrb[0].mxu0
    %v4443 = vadd.f32 %v4186, %v4442
    %v4444 = vpop.f32.mrb[0].mxu0
    %v4445 = vadd.f32 %v4188, %v4444
    %v4446 = vand.u32 %v2222, 4294901760
    %4447 = vmatprep.mubr.f32.mxu0 %v4446
    %v4448 = vand.u32 %v2221, 4294901760
    %4449 = vmatmul.mubr.f32.gmra.mrb[0].mxu0 %v4448
    %v4450 = vpop.f32.mrb[0].mxu0
    %v4451 = vadd.f32 %v4194, %v4450
    %v4452 = vpop.f32.mrb[0].mxu0
    %v4453 = vadd.f32 %v4196, %v4452
    %v4454 = vand.u32 %v2224, 4294901760
    %4455 = vmatprep.mubr.f32.mxu0 %v4454
    %v4456 = vand.u32 %v2223, 4294901760
    %4457 = vmatmul.mubr.f32.gmra.mrb[0].mxu0 %v4456
    %v4458 = vpop.f32.mrb[0].mxu0
    %v4459 = vadd.f32 %v4202, %v4458
    %v4460 = vpop.f32.mrb[0].mxu0
    %v4461 = vadd.f32 %v4204, %v4460
    %v4462 = vand.u32 %v2226, 4294901760
    %4463 = vmatprep.mubr.f32.mxu0 %v4462
    %v4464 = vand.u32 %v2225, 4294901760
    %4465 = vmatmul.mubr.f32.gmra.mrb[0].mxu0 %v4464
    %v4466 = vpop.f32.mrb[0].mxu0
    %v4467 = vadd.f32 %v4210, %v4466
    %v4468 = vpop.f32.mrb[0].mxu0
    %v4469 = vadd.f32 %v4212, %v4468
    %v4470 = vand.u32 %v2228, 4294901760
    %4471 = vmatprep.mubr.f32.mxu0 %v4470
    %v4472 = vand.u32 %v2227, 4294901760
    %4473 = vmatmul.mubr.f32.gmra.mrb[0].mxu0 %v4472
    %v4474 = vpop.f32.mrb[0].mxu0
    %v4475 = vadd.f32 %v4218, %v4474
    %v4476 = vpop.f32.mrb[0].mxu0
    %v4477 = vadd.f32 %v4220, %v4476
    %v4478 = vand.u32 %v2230, 4294901760
    %4479 = vmatprep.mubr.f32.mxu0 %v4478
    %v4480 = vand.u32 %v2229, 4294901760
    %4481 = vmatmul.mubr.f32.gmra.mrb[0].mxu0 %v4480
    %v4482 = vpop.f32.mrb[0].mxu0
    %v4483 = vadd.f32 %v4226, %v4482
    %v4484 = vpop.f32.mrb[0].mxu0
    %v4485 = vadd.f32 %v4228, %v4484
    %v4486 = vand.u32 %v2232, 4294901760
    %4487 = vmatprep.mubr.f32.mxu0 %v4486
    %v4488 = vand.u32 %v2231, 4294901760
    %4489 = vmatmul.mubr.f32.gmra.mrb[0].mxu0 %v4488
    %v4490 = vpop.f32.mrb[0].mxu0
    %v4491 = vadd.f32 %v4234, %v4490
    %v4492 = vpop.f32.mrb[0].mxu0
    %v4493 = vadd.f32 %v4236, %v4492
    %v4494 = vand.u32 %v2234, 4294901760
    %4495 = vmatprep.mubr.f32.mxu0 %v4494
    %v4496 = vand.u32 %v2233, 4294901760
    %4497 = vmatmul.mubr.f32.gmra.mrb[0].mxu0 %v4496
    %v4498 = vpop.f32.mrb[0].mxu0
    %v4499 = vadd.f32 %v4242, %v4498
    %v4500 = vpop.f32.mrb[0].mxu0
    %v4501 = vadd.f32 %v4244, %v4500
    %v4502 = vand.u32 %v2236, 4294901760
    %4503 = vmatprep.mubr.f32.mxu0 %v4502
    %v4504 = vand.u32 %v2235, 4294901760
    %4505 = vmatmul.mubr.f32.gmra.mrb[0].mxu0 %v4504
    %v4506 = vpop.f32.mrb[0].mxu0
    %v4507 = vadd.f32 %v4250, %v4506
    %v4508 = vpop.f32.mrb[0].mxu0
    %v4509 = vadd.f32 %v4252, %v4508
    %v4510 = vand.u32 %v2238, 4294901760
    %4511 = vmatprep.mubr.f32.mxu0 %v4510
    %v4512 = vand.u32 %v2237, 4294901760
    %4513 = vmatmul.mubr.f32.gmra.mrb[0].mxu0 %v4512
    %v4514 = vpop.f32.mrb[0].mxu0
    %v4515 = vadd.f32 %v4258, %v4514
    %v4516 = vpop.f32.mrb[0].mxu0
    %v4517 = vadd.f32 %v4260, %v4516
    %v4518 = vand.u32 %v2240, 4294901760
    %4519 = vmatprep.mubr.f32.mxu0 %v4518
    %v4520 = vand.u32 %v2239, 4294901760
    %4521 = vmatmul.mubr.f32.gmra.mrb[0].mxu0 %v4520
    %v4522 = vpop.f32.mrb[0].mxu0
    %v4523 = vadd.f32 %v4266, %v4522
    %v4524 = vpop.f32.mrb[0].mxu0
    %v4525 = vadd.f32 %v4268, %v4524
    %v4526 = vand.u32 %v2242, 4294901760
    %4527 = vmatprep.mubr.f32.mxu0 %v4526
    %v4528 = vand.u32 %v2241, 4294901760
    %4529 = vmatmul.mubr.f32.gmra.mrb[0].mxu0 %v4528
    %v4530 = vpop.f32.mrb[0].mxu0
    %v4531 = vadd.f32 %v4274, %v4530
    %v4532 = vpop.f32.mrb[0].mxu0
    %v4533 = vadd.f32 %v4276, %v4532
    %v4534 = vand.u32 %v2244, 4294901760
    %4535 = vmatprep.mubr.f32.mxu0 %v4534
    %v4536 = vand.u32 %v2243, 4294901760
    %4537 = vmatmul.mubr.f32.gmra.mrb[0].mxu0 %v4536
    %v4538 = vpop.f32.mrb[0].mxu0
    %v4539 = vadd.f32 %v4282, %v4538
    %v4540 = vpop.f32.mrb[0].mxu0
    %v4541 = vadd.f32 %v4284, %v4540
    %v4542 = vand.u32 %v2246, 4294901760
    %4543 = vmatprep.mubr.f32.mxu0 %v4542
    %v4544 = vand.u32 %v2245, 4294901760
    %4545 = vmatmul.mubr.f32.gmra.mrb[0].mxu0 %v4544
    %v4546 = vpop.f32.mrb[0].mxu0
    %v4547 = vadd.f32 %v4290, %v4546
    %v4548 = vpop.f32.mrb[0].mxu0
    %v4549 = vadd.f32 %v4292, %v4548
    %v4550 = vand.u32 %v2248, 4294901760
    %4551 = vmatprep.mubr.f32.mxu0 %v4550
    %v4552 = vand.u32 %v2247, 4294901760
    %4553 = vmatmul.mubr.f32.gmra.mrb[0].mxu0 %v4552
    %v4554 = vpop.f32.mrb[0].mxu0
    %v4555 = vadd.f32 %v4298, %v4554
    %v4556 = vpop.f32.mrb[0].mxu0
    %v4557 = vadd.f32 %v4300, %v4556
    %4558 = vdwg.mxu0
    %v4559 = vmax.f32 %v4435, 0.0
    %v4560 = vmax.f32 %v4437, 0.0
    %v4561 = vmax.f32 %v4443, 0.0
    %v4562 = vmax.f32 %v4445, 0.0
    %v4563 = vmax.f32 %v4451, 0.0
    %v4564 = vmax.f32 %v4453, 0.0
    %v4565 = vmax.f32 %v4459, 0.0
    %v4566 = vmax.f32 %v4461, 0.0
    %v4567 = vmax.f32 %v4467, 0.0
    %v4568 = vmax.f32 %v4469, 0.0
    %v4569 = vmax.f32 %v4475, 0.0
    %v4570 = vmax.f32 %v4477, 0.0
    %v4571 = vmax.f32 %v4483, 0.0
    %v4572 = vmax.f32 %v4485, 0.0
    %v4573 = vmax.f32 %v4491, 0.0
    %v4574 = vmax.f32 %v4493, 0.0
    %v4575 = vmax.f32 %v4499, 0.0
    %v4576 = vmax.f32 %v4501, 0.0
    %v4577 = vmax.f32 %v4507, 0.0
    %v4578 = vmax.f32 %v4509, 0.0
    %v4579 = vmax.f32 %v4515, 0.0
    %v4580 = vmax.f32 %v4517, 0.0
    %v4581 = vmax.f32 %v4523, 0.0
    %v4582 = vmax.f32 %v4525, 0.0
    %v4583 = vmax.f32 %v4531, 0.0
    %v4584 = vmax.f32 %v4533, 0.0
    %v4585 = vmax.f32 %v4539, 0.0
    %v4586 = vmax.f32 %v4541, 0.0
    %v4587 = vmax.f32 %v4547, 0.0
    %v4588 = vmax.f32 %v4549, 0.0
    %v4589 = vmax.f32 %v4555, 0.0
    %v4590 = vmax.f32 %v4557, 0.0
    %v4591 = vld [vmem:[%s4] sm:$0xff]
    %v4592 = vld [vmem:[%s4 + $0x8] sm:$0xff]
    %v4593 = vld [vmem:[%s4 + $0x10] sm:$0xff]
    %v4594 = vld [vmem:[%s4 + $0x18] sm:$0xff]
    %v4595 = vld [vmem:[%s4 + $0x20] sm:$0xff]
    %v4596 = vld [vmem:[%s4 + $0x28] sm:$0xff]
    %v4597 = vld [vmem:[%s4 + $0x30] sm:$0xff]
    %v4598 = vld [vmem:[%s4 + $0x38] sm:$0xff]
    %v4599 = vld [vmem:[%s5] sm:$0xff]
    %v4600 = vld [vmem:[%s5 + $0x8] sm:$0xff]
    %v4601 = vld [vmem:[%s5 + $0x10] sm:$0xff]
    %v4602 = vld [vmem:[%s5 + $0x18] sm:$0xff]
    %v4603 = vld [vmem:[%s5 + $0x20] sm:$0xff]
    %v4604 = vld [vmem:[%s5 + $0x28] sm:$0xff]
    %v4605 = vld [vmem:[%s5 + $0x30] sm:$0xff]
    %v4606 = vld [vmem:[%s5 + $0x38] sm:$0xff]
    %4608 = vset.pattern.permute.xlu0 0
    %4609 = vperm.xlu0 %4608, %v4599
    %v4610 = vpop.permute.xlu0 %4609
    %4613 = vset.pattern.permute.xlu0 0
    %4614 = vperm.xlu0 %4613, %v4600
    %v4615 = vpop.permute.xlu0 %4614
    %4618 = vset.pattern.permute.xlu0 0
    %4619 = vperm.xlu0 %4618, %v4601
    %v4620 = vpop.permute.xlu0 %4619
    %4623 = vset.pattern.permute.xlu0 0
    %4624 = vperm.xlu0 %4623, %v4602
    %v4625 = vpop.permute.xlu0 %4624
    %4628 = vset.pattern.permute.xlu0 0
    %4629 = vperm.xlu0 %4628, %v4603
    %v4630 = vpop.permute.xlu0 %4629
    %4633 = vset.pattern.permute.xlu0 0
    %4634 = vperm.xlu0 %4633, %v4604
    %v4635 = vpop.permute.xlu0 %4634
    %4638 = vset.pattern.permute.xlu0 0
    %4639 = vperm.xlu0 %4638, %v4605
    %v4640 = vpop.permute.xlu0 %4639
    %4643 = vset.pattern.permute.xlu0 0
    %4644 = vperm.xlu0 %4643, %v4606
    %v4645 = vpop.permute.xlu0 %4644
    %v4647 = vand.u32 %v4560, 4294901760
    %4648 = vmatprep.subr.mxu0 %v4647
    %v4649 = vand.u32 %v4559, 4294901760
    %4650 = vmatpush1.msra.mxu0 %v4649
    %v4651 = vand.u32 %v4562, 4294901760
    %4652 = vmatprep.subr.mxu0 %v4651
    %v4653 = vand.u32 %v4561, 4294901760
    %4654 = vmatpush1.msra.mxu0 %v4653
    %v4655 = vand.u32 %v4564, 4294901760
    %4656 = vmatprep.subr.mxu0 %v4655
    %v4657 = vand.u32 %v4563, 4294901760
    %4658 = vmatpush1.msra.mxu0 %v4657
    %v4659 = vand.u32 %v4566, 4294901760
    %4660 = vmatprep.subr.mxu0 %v4659
    %v4661 = vand.u32 %v4565, 4294901760
    %4662 = vmatpush1.msra.mxu0 %v4661
    %v4663 = vand.u32 %v4568, 4294901760
    %4664 = vmatprep.subr.mxu0 %v4663
    %v4665 = vand.u32 %v4567, 4294901760
    %4666 = vmatpush1.msra.mxu0 %v4665
    %v4667 = vand.u32 %v4570, 4294901760
    %4668 = vmatprep.subr.mxu0 %v4667
    %v4669 = vand.u32 %v4569, 4294901760
    %4670 = vmatpush1.msra.mxu0 %v4669
    %v4671 = vand.u32 %v4572, 4294901760
    %4672 = vmatprep.subr.mxu0 %v4671
    %v4673 = vand.u32 %v4571, 4294901760
    %4674 = vmatpush1.msra.mxu0 %v4673
    %v4675 = vand.u32 %v4574, 4294901760
    %4676 = vmatprep.subr.mxu0 %v4675
    %v4677 = vand.u32 %v4573, 4294901760
    %4678 = vmatpush1.msra.mxu0 %v4677
    %v4679 = vand.u32 %v4576, 4294901760
    %4680 = vmatprep.subr.mxu0 %v4679
    %v4681 = vand.u32 %v4575, 4294901760
    %4682 = vmatpush1.msra.mxu0 %v4681
    %v4683 = vand.u32 %v4578, 4294901760
    %4684 = vmatprep.subr.mxu0 %v4683
    %v4685 = vand.u32 %v4577, 4294901760
    %4686 = vmatpush1.msra.mxu0 %v4685
    %v4687 = vand.u32 %v4580, 4294901760
    %4688 = vmatprep.subr.mxu0 %v4687
    %v4689 = vand.u32 %v4579, 4294901760
    %4690 = vmatpush1.msra.mxu0 %v4689
    %v4691 = vand.u32 %v4582, 4294901760
    %4692 = vmatprep.subr.mxu0 %v4691
    %v4693 = vand.u32 %v4581, 4294901760
    %4694 = vmatpush1.msra.mxu0 %v4693
    %v4695 = vand.u32 %v4584, 4294901760
    %4696 = vmatprep.subr.mxu0 %v4695
    %v4697 = vand.u32 %v4583, 4294901760
    %4698 = vmatpush1.msra.mxu0 %v4697
    %v4699 = vand.u32 %v4586, 4294901760
    %4700 = vmatprep.subr.mxu0 %v4699
    %v4701 = vand.u32 %v4585, 4294901760
    %4702 = vmatpush1.msra.mxu0 %v4701
    %v4703 = vand.u32 %v4588, 4294901760
    %4704 = vmatprep.subr.mxu0 %v4703
    %v4705 = vand.u32 %v4587, 4294901760
    %4706 = vmatpush1.msra.mxu0 %v4705
    %v4707 = vand.u32 %v4590, 4294901760
    %4708 = vmatprep.subr.mxu0 %v4707
    %v4709 = vand.u32 %v4589, 4294901760
    %4710 = vmatpush1.msra.mxu0 %v4709
    %4711 = vmatprep.subr.mxu0 0.0
    %4712 = vmatpush1.msra.mxu0 0.0
    %4713 = vmatprep.subr.mxu0 0.0
    %4714 = vmatpush1.msra.mxu0 0.0
    %4715 = vmatprep.subr.mxu0 0.0
    %4716 = vmatpush1.msra.mxu0 0.0
    %4717 = vmatprep.subr.mxu0 0.0
    %4718 = vmatpush1.msra.mxu0 0.0
    %4719 = vmatprep.subr.mxu0 0.0
    %4720 = vmatpush1.msra.mxu0 0.0
    %4721 = vmatprep.subr.mxu0 0.0
    %4722 = vmatpush1.msra.mxu0 0.0
    %4723 = vmatprep.subr.mxu0 0.0
    %4724 = vmatpush1.msra.mxu0 0.0
    %4725 = vmatprep.subr.mxu0 0.0
    %4726 = vmatpush1.msra.mxu0 0.0
    %4727 = vmatprep.subr.mxu0 0.0
    %4728 = vmatpush1.msra.mxu0 0.0
    %4729 = vmatprep.subr.mxu0 0.0
    %4730 = vmatpush1.msra.mxu0 0.0
    %4731 = vmatprep.subr.mxu0 0.0
    %4732 = vmatpush1.msra.mxu0 0.0
    %4733 = vmatprep.subr.mxu0 0.0
    %4734 = vmatpush1.msra.mxu0 0.0
    %4735 = vmatprep.subr.mxu0 0.0
    %4736 = vmatpush1.msra.mxu0 0.0
    %4737 = vmatprep.subr.mxu0 0.0
    %4738 = vmatpush1.msra.mxu0 0.0
    %4739 = vmatprep.subr.mxu0 0.0
    %4740 = vmatpush1.msra.mxu0 0.0
    %4741 = vmatprep.subr.mxu0 0.0
    %4742 = vmatpush1.msra.mxu0 0.0
    %4743 = vmatprep.mubr.f32.mxu0 0.0
    %v4744 = vand.u32 %v4591, 4294901760
    %v4745 = vsub.f32 %v4591, %v4744
    %v4746 = vand.u32 %v4745, 4294901760
    %v4747 = vsub.f32 %v4745, %v4746
    %v4748 = vand.u32 %v4747, 4294901760
    %4749 = vmatmul.mubr.f32.gmra.mrb[0].mxu0 %v4748
    %v4750 = vpop.f32.mrb[0].mxu0
    %v4751 = vadd.f32 %v4610, %v4750
    %v4752 = vpop.f32.mrb[0].mxu0
    %v4753 = vadd.f32 %v4610, %v4752
    %4754 = vmatprep.mubr.f32.mxu0 0.0
    %v4755 = vand.u32 %v4592, 4294901760
    %v4756 = vsub.f32 %v4592, %v4755
    %v4757 = vand.u32 %v4756, 4294901760
    %v4758 = vsub.f32 %v4756, %v4757
    %v4759 = vand.u32 %v4758, 4294901760
    %4760 = vmatmul.mubr.f32.gmra.mrb[0].mxu0 %v4759
    %v4761 = vpop.f32.mrb[0].mxu0
    %v4762 = vadd.f32 %v4615, %v4761
    %v4763 = vpop.f32.mrb[0].mxu0
    %v4764 = vadd.f32 %v4615, %v4763
    %4765 = vmatprep.mubr.f32.mxu0 0.0
    %v4766 = vand.u32 %v4593, 4294901760
    %v4767 = vsub.f32 %v4593, %v4766
    %v4768 = vand.u32 %v4767, 4294901760
    %v4769 = vsub.f32 %v4767, %v4768
    %v4770 = vand.u32 %v4769, 4294901760
    %4771 = vmatmul.mubr.f32.gmra.mrb[0].mxu0 %v4770
    %v4772 = vpop.f32.mrb[0].mxu0
    %v4773 = vadd.f32 %v4620, %v4772
    %v4774 = vpop.f32.mrb[0].mxu0
    %v4775 = vadd.f32 %v4620, %v4774
    %4776 = vmatprep.mubr.f32.mxu0 0.0
    %v4777 = vand.u32 %v4594, 4294901760
    %v4778 = vsub.f32 %v4594, %v4777
    %v4779 = vand.u32 %v4778, 4294901760
    %v4780 = vsub.f32 %v4778, %v4779
    %v4781 = vand.u32 %v4780, 4294901760
    %4782 = vmatmul.mubr.f32.gmra.mrb[0].mxu0 %v4781
    %v4783 = vpop.f32.mrb[0].mxu0
    %v4784 = vadd.f32 %v4625, %v4783
    %v4785 = vpop.f32.mrb[0].mxu0
    %v4786 = vadd.f32 %v4625, %v4785
    %4787 = vmatprep.mubr.f32.mxu0 0.0
    %v4788 = vand.u32 %v4595, 4294901760
    %v4789 = vsub.f32 %v4595, %v4788
    %v4790 = vand.u32 %v4789, 4294901760
    %v4791 = vsub.f32 %v4789, %v4790
    %v4792 = vand.u32 %v4791, 4294901760
    %4793 = vmatmul.mubr.f32.gmra.mrb[0].mxu0 %v4792
    %v4794 = vpop.f32.mrb[0].mxu0
    %v4795 = vadd.f32 %v4630, %v4794
    %v4796 = vpop.f32.mrb[0].mxu0
    %v4797 = vadd.f32 %v4630, %v4796
    %4798 = vmatprep.mubr.f32.mxu0 0.0
    %v4799 = vand.u32 %v4596, 4294901760
    %v4800 = vsub.f32 %v4596, %v4799
    %v4801 = vand.u32 %v4800, 4294901760
    %v4802 = vsub.f32 %v4800, %v4801
    %v4803 = vand.u32 %v4802, 4294901760
    %4804 = vmatmul.mubr.f32.gmra.mrb[0].mxu0 %v4803
    %v4805 = vpop.f32.mrb[0].mxu0
    %v4806 = vadd.f32 %v4635, %v4805
    %v4807 = vpop.f32.mrb[0].mxu0
    %v4808 = vadd.f32 %v4635, %v4807
    %4809 = vmatprep.mubr.f32.mxu0 0.0
    %v4810 = vand.u32 %v4597, 4294901760
    %v4811 = vsub.f32 %v4597, %v4810
    %v4812 = vand.u32 %v4811, 4294901760
    %v4813 = vsub.f32 %v4811, %v4812
    %v4814 = vand.u32 %v4813, 4294901760
    %4815 = vmatmul.mubr.f32.gmra.mrb[0].mxu0 %v4814
    %v4816 = vpop.f32.mrb[0].mxu0
    %v4817 = vadd.f32 %v4640, %v4816
    %v4818 = vpop.f32.mrb[0].mxu0
    %v4819 = vadd.f32 %v4640, %v4818
    %4820 = vmatprep.mubr.f32.mxu0 0.0
    %v4821 = vand.u32 %v4598, 4294901760
    %v4822 = vsub.f32 %v4598, %v4821
    %v4823 = vand.u32 %v4822, 4294901760
    %v4824 = vsub.f32 %v4822, %v4823
    %v4825 = vand.u32 %v4824, 4294901760
    %4826 = vmatmul.mubr.f32.gmra.mrb[0].mxu0 %v4825
    %v4827 = vpop.f32.mrb[0].mxu0
    %v4828 = vadd.f32 %v4645, %v4827
    %v4829 = vpop.f32.mrb[0].mxu0
    %v4830 = vadd.f32 %v4645, %v4829
    %4831 = vdwg.mxu0
    %v4832 = vand.u32 %v4560, 4294901760
    %v4833 = vsub.f32 %v4560, %v4832
    %v4834 = vand.u32 %v4833, 4294901760
    %v4835 = vsub.f32 %v4833, %v4834
    %v4836 = vand.u32 %v4835, 4294901760
    %4837 = vmatprep.subr.mxu0 %v4836
    %v4838 = vand.u32 %v4559, 4294901760
    %v4839 = vsub.f32 %v4559, %v4838
    %v4840 = vand.u32 %v4839, 4294901760
    %v4841 = vsub.f32 %v4839, %v4840
    %v4842 = vand.u32 %v4841, 4294901760
    %4843 = vmatpush1.msra.mxu0 %v4842
    %v4844 = vand.u32 %v4562, 4294901760
    %v4845 = vsub.f32 %v4562, %v4844
    %v4846 = vand.u32 %v4845, 4294901760
    %v4847 = vsub.f32 %v4845, %v4846
    %v4848 = vand.u32 %v4847, 4294901760
    %4849 = vmatprep.subr.mxu0 %v4848
    %v4850 = vand.u32 %v4561, 4294901760
    %v4851 = vsub.f32 %v4561, %v4850
    %v4852 = vand.u32 %v4851, 4294901760
    %v4853 = vsub.f32 %v4851, %v4852
    %v4854 = vand.u32 %v4853, 4294901760
    %4855 = vmatpush1.msra.mxu0 %v4854
    %v4856 = vand.u32 %v4564, 4294901760
    %v4857 = vsub.f32 %v4564, %v4856
    %v4858 = vand.u32 %v4857, 4294901760
    %v4859 = vsub.f32 %v4857, %v4858
    %v4860 = vand.u32 %v4859, 4294901760
    %4861 = vmatprep.subr.mxu0 %v4860
    %v4862 = vand.u32 %v4563, 4294901760
    %v4863 = vsub.f32 %v4563, %v4862
    %v4864 = vand.u32 %v4863, 4294901760
    %v4865 = vsub.f32 %v4863, %v4864
    %v4866 = vand.u32 %v4865, 4294901760
    %4867 = vmatpush1.msra.mxu0 %v4866
    %v4868 = vand.u32 %v4566, 4294901760
    %v4869 = vsub.f32 %v4566, %v4868
    %v4870 = vand.u32 %v4869, 4294901760
    %v4871 = vsub.f32 %v4869, %v4870
    %v4872 = vand.u32 %v4871, 4294901760
    %4873 = vmatprep.subr.mxu0 %v4872
    %v4874 = vand.u32 %v4565, 4294901760
    %v4875 = vsub.f32 %v4565, %v4874
    %v4876 = vand.u32 %v4875, 4294901760
    %v4877 = vsub.f32 %v4875, %v4876
    %v4878 = vand.u32 %v4877, 4294901760
    %4879 = vmatpush1.msra.mxu0 %v4878
    %v4880 = vand.u32 %v4568, 4294901760
    %v4881 = vsub.f32 %v4568, %v4880
    %v4882 = vand.u32 %v4881, 4294901760
    %v4883 = vsub.f32 %v4881, %v4882
    %v4884 = vand.u32 %v4883, 4294901760
    %4885 = vmatprep.subr.mxu0 %v4884
    %v4886 = vand.u32 %v4567, 4294901760
    %v4887 = vsub.f32 %v4567, %v4886
    %v4888 = vand.u32 %v4887, 4294901760
    %v4889 = vsub.f32 %v4887, %v4888
    %v4890 = vand.u32 %v4889, 4294901760
    %4891 = vmatpush1.msra.mxu0 %v4890
    %v4892 = vand.u32 %v4570, 4294901760
    %v4893 = vsub.f32 %v4570, %v4892
    %v4894 = vand.u32 %v4893, 4294901760
    %v4895 = vsub.f32 %v4893, %v4894
    %v4896 = vand.u32 %v4895, 4294901760
    %4897 = vmatprep.subr.mxu0 %v4896
    %v4898 = vand.u32 %v4569, 4294901760
    %v4899 = vsub.f32 %v4569, %v4898
    %v4900 = vand.u32 %v4899, 4294901760
    %v4901 = vsub.f32 %v4899, %v4900
    %v4902 = vand.u32 %v4901, 4294901760
    %4903 = vmatpush1.msra.mxu0 %v4902
    %v4904 = vand.u32 %v4572, 4294901760
    %v4905 = vsub.f32 %v4572, %v4904
    %v4906 = vand.u32 %v4905, 4294901760
    %v4907 = vsub.f32 %v4905, %v4906
    %v4908 = vand.u32 %v4907, 4294901760
    %4909 = vmatprep.subr.mxu0 %v4908
    %v4910 = vand.u32 %v4571, 4294901760
    %v4911 = vsub.f32 %v4571, %v4910
    %v4912 = vand.u32 %v4911, 4294901760
    %v4913 = vsub.f32 %v4911, %v4912
    %v4914 = vand.u32 %v4913, 4294901760
    %4915 = vmatpush1.msra.mxu0 %v4914
    %v4916 = vand.u32 %v4574, 4294901760
    %v4917 = vsub.f32 %v4574, %v4916
    %v4918 = vand.u32 %v4917, 4294901760
    %v4919 = vsub.f32 %v4917, %v4918
    %v4920 = vand.u32 %v4919, 4294901760
    %4921 = vmatprep.subr.mxu0 %v4920
    %v4922 = vand.u32 %v4573, 4294901760
    %v4923 = vsub.f32 %v4573, %v4922
    %v4924 = vand.u32 %v4923, 4294901760
    %v4925 = vsub.f32 %v4923, %v4924
    %v4926 = vand.u32 %v4925, 4294901760
    %4927 = vmatpush1.msra.mxu0 %v4926
    %v4928 = vand.u32 %v4576, 4294901760
    %v4929 = vsub.f32 %v4576, %v4928
    %v4930 = vand.u32 %v4929, 4294901760
    %v4931 = vsub.f32 %v4929, %v4930
    %v4932 = vand.u32 %v4931, 4294901760
    %4933 = vmatprep.subr.mxu0 %v4932
    %v4934 = vand.u32 %v4575, 4294901760
    %v4935 = vsub.f32 %v4575, %v4934
    %v4936 = vand.u32 %v4935, 4294901760
    %v4937 = vsub.f32 %v4935, %v4936
    %v4938 = vand.u32 %v4937, 4294901760
    %4939 = vmatpush1.msra.mxu0 %v4938
    %v4940 = vand.u32 %v4578, 4294901760
    %v4941 = vsub.f32 %v4578, %v4940
    %v4942 = vand.u32 %v4941, 4294901760
    %v4943 = vsub.f32 %v4941, %v4942
    %v4944 = vand.u32 %v4943, 4294901760
    %4945 = vmatprep.subr.mxu0 %v4944
    %v4946 = vand.u32 %v4577, 4294901760
    %v4947 = vsub.f32 %v4577, %v4946
    %v4948 = vand.u32 %v4947, 4294901760
    %v4949 = vsub.f32 %v4947, %v4948
    %v4950 = vand.u32 %v4949, 4294901760
    %4951 = vmatpush1.msra.mxu0 %v4950
    %v4952 = vand.u32 %v4580, 4294901760
    %v4953 = vsub.f32 %v4580, %v4952
    %v4954 = vand.u32 %v4953, 4294901760
    %v4955 = vsub.f32 %v4953, %v4954
    %v4956 = vand.u32 %v4955, 4294901760
    %4957 = vmatprep.subr.mxu0 %v4956
    %v4958 = vand.u32 %v4579, 4294901760
    %v4959 = vsub.f32 %v4579, %v4958
    %v4960 = vand.u32 %v4959, 4294901760
    %v4961 = vsub.f32 %v4959, %v4960
    %v4962 = vand.u32 %v4961, 4294901760
    %4963 = vmatpush1.msra.mxu0 %v4962
    %v4964 = vand.u32 %v4582, 4294901760
    %v4965 = vsub.f32 %v4582, %v4964
    %v4966 = vand.u32 %v4965, 4294901760
    %v4967 = vsub.f32 %v4965, %v4966
    %v4968 = vand.u32 %v4967, 4294901760
    %4969 = vmatprep.subr.mxu0 %v4968
    %v4970 = vand.u32 %v4581, 4294901760
    %v4971 = vsub.f32 %v4581, %v4970
    %v4972 = vand.u32 %v4971, 4294901760
    %v4973 = vsub.f32 %v4971, %v4972
    %v4974 = vand.u32 %v4973, 4294901760
    %4975 = vmatpush1.msra.mxu0 %v4974
    %v4976 = vand.u32 %v4584, 4294901760
    %v4977 = vsub.f32 %v4584, %v4976
    %v4978 = vand.u32 %v4977, 4294901760
    %v4979 = vsub.f32 %v4977, %v4978
    %v4980 = vand.u32 %v4979, 4294901760
    %4981 = vmatprep.subr.mxu0 %v4980
    %v4982 = vand.u32 %v4583, 4294901760
    %v4983 = vsub.f32 %v4583, %v4982
    %v4984 = vand.u32 %v4983, 4294901760
    %v4985 = vsub.f32 %v4983, %v4984
    %v4986 = vand.u32 %v4985, 4294901760
    %4987 = vmatpush1.msra.mxu0 %v4986
    %v4988 = vand.u32 %v4586, 4294901760
    %v4989 = vsub.f32 %v4586, %v4988
    %v4990 = vand.u32 %v4989, 4294901760
    %v4991 = vsub.f32 %v4989, %v4990
    %v4992 = vand.u32 %v4991, 4294901760
    %4993 = vmatprep.subr.mxu0 %v4992
    %v4994 = vand.u32 %v4585, 4294901760
    %v4995 = vsub.f32 %v4585, %v4994
    %v4996 = vand.u32 %v4995, 4294901760
    %v4997 = vsub.f32 %v4995, %v4996
    %v4998 = vand.u32 %v4997, 4294901760
    %4999 = vmatpush1.msra.mxu0 %v4998
    %v5000 = vand.u32 %v4588, 4294901760
    %v5001 = vsub.f32 %v4588, %v5000
    %v5002 = vand.u32 %v5001, 4294901760
    %v5003 = vsub.f32 %v5001, %v5002
    %v5004 = vand.u32 %v5003, 4294901760
    %5005 = vmatprep.subr.mxu0 %v5004
    %v5006 = vand.u32 %v4587, 4294901760
    %v5007 = vsub.f32 %v4587, %v5006
    %v5008 = vand.u32 %v5007, 4294901760
    %v5009 = vsub.f32 %v5007, %v5008
    %v5010 = vand.u32 %v5009, 4294901760
    %5011 = vmatpush1.msra.mxu0 %v5010
    %v5012 = vand.u32 %v4590, 4294901760
    %v5013 = vsub.f32 %v4590, %v5012
    %v5014 = vand.u32 %v5013, 4294901760
    %v5015 = vsub.f32 %v5013, %v5014
    %v5016 = vand.u32 %v5015, 4294901760
    %5017 = vmatprep.subr.mxu0 %v5016
    %v5018 = vand.u32 %v4589, 4294901760
    %v5019 = vsub.f32 %v4589, %v5018
    %v5020 = vand.u32 %v5019, 4294901760
    %v5021 = vsub.f32 %v5019, %v5020
    %v5022 = vand.u32 %v5021, 4294901760
    %5023 = vmatpush1.msra.mxu0 %v5022
    %5024 = vmatprep.subr.mxu0 0.0
    %5025 = vmatpush1.msra.mxu0 0.0
    %5026 = vmatprep.subr.mxu0 0.0
    %5027 = vmatpush1.msra.mxu0 0.0
    %5028 = vmatprep.subr.mxu0 0.0
    %5029 = vmatpush1.msra.mxu0 0.0
    %5030 = vmatprep.subr.mxu0 0.0
    %5031 = vmatpush1.msra.mxu0 0.0
    %5032 = vmatprep.subr.mxu0 0.0
    %5033 = vmatpush1.msra.mxu0 0.0
    %5034 = vmatprep.subr.mxu0 0.0
    %5035 = vmatpush1.msra.mxu0 0.0
    %5036 = vmatprep.subr.mxu0 0.0
    %5037 = vmatpush1.msra.mxu0 0.0
    %5038 = vmatprep.subr.mxu0 0.0
    %5039 = vmatpush1.msra.mxu0 0.0
    %5040 = vmatprep.subr.mxu0 0.0
    %5041 = vmatpush1.msra.mxu0 0.0
    %5042 = vmatprep.subr.mxu0 0.0
    %5043 = vmatpush1.msra.mxu0 0.0
    %5044 = vmatprep.subr.mxu0 0.0
    %5045 = vmatpush1.msra.mxu0 0.0
    %5046 = vmatprep.subr.mxu0 0.0
    %5047 = vmatpush1.msra.mxu0 0.0
    %5048 = vmatprep.subr.mxu0 0.0
    %5049 = vmatpush1.msra.mxu0 0.0
    %5050 = vmatprep.subr.mxu0 0.0
    %5051 = vmatpush1.msra.mxu0 0.0
    %5052 = vmatprep.subr.mxu0 0.0
    %5053 = vmatpush1.msra.mxu0 0.0
    %5054 = vmatprep.subr.mxu0 0.0
    %5055 = vmatpush1.msra.mxu0 0.0
    %5056 = vmatprep.mubr.f32.mxu0 0.0
    %v5057 = vand.u32 %v4591, 4294901760
    %5058 = vmatmul.mubr.f32.gmra.mrb[0].mxu0 %v5057
    %v5059 = vpop.f32.mrb[0].mxu0
    %v5060 = vadd.f32 %v4751, %v5059
    %v5061 = vpop.f32.mrb[0].mxu0
    %v5062 = vadd.f32 %v4753, %v5061
    %5063 = vmatprep.mubr.f32.mxu0 0.0
    %v5064 = vand.u32 %v4592, 4294901760
    %5065 = vmatmul.mubr.f32.gmra.mrb[0].mxu0 %v5064
    %v5066 = vpop.f32.mrb[0].mxu0
    %v5067 = vadd.f32 %v4762, %v5066
    %v5068 = vpop.f32.mrb[0].mxu0
    %v5069 = vadd.f32 %v4764, %v5068
    %5070 = vmatprep.mubr.f32.mxu0 0.0
    %v5071 = vand.u32 %v4593, 4294901760
    %5072 = vmatmul.mubr.f32.gmra.mrb[0].mxu0 %v5071
    %v5073 = vpop.f32.mrb[0].mxu0
    %v5074 = vadd.f32 %v4773, %v5073
    %v5075 = vpop.f32.mrb[0].mxu0
    %v5076 = vadd.f32 %v4775, %v5075
    %5077 = vmatprep.mubr.f32.mxu0 0.0
    %v5078 = vand.u32 %v4594, 4294901760
    %5079 = vmatmul.mubr.f32.gmra.mrb[0].mxu0 %v5078
    %v5080 = vpop.f32.mrb[0].mxu0
    %v5081 = vadd.f32 %v4784, %v5080
    %v5082 = vpop.f32.mrb[0].mxu0
    %v5083 = vadd.f32 %v4786, %v5082
    %5084 = vmatprep.mubr.f32.mxu0 0.0
    %v5085 = vand.u32 %v4595, 4294901760
    %5086 = vmatmul.mubr.f32.gmra.mrb[0].mxu0 %v5085
    %v5087 = vpop.f32.mrb[0].mxu0
    %v5088 = vadd.f32 %v4795, %v5087
    %v5089 = vpop.f32.mrb[0].mxu0
    %v5090 = vadd.f32 %v4797, %v5089
    %5091 = vmatprep.mubr.f32.mxu0 0.0
    %v5092 = vand.u32 %v4596, 4294901760
    %5093 = vmatmul.mubr.f32.gmra.mrb[0].mxu0 %v5092
    %v5094 = vpop.f32.mrb[0].mxu0
    %v5095 = vadd.f32 %v4806, %v5094
    %v5096 = vpop.f32.mrb[0].mxu0
    %v5097 = vadd.f32 %v4808, %v5096
    %5098 = vmatprep.mubr.f32.mxu0 0.0
    %v5099 = vand.u32 %v4597, 4294901760
    %5100 = vmatmul.mubr.f32.gmra.mrb[0].mxu0 %v5099
    %v5101 = vpop.f32.mrb[0].mxu0
    %v5102 = vadd.f32 %v4817, %v5101
    %v5103 = vpop.f32.mrb[0].mxu0
    %v5104 = vadd.f32 %v4819, %v5103
    %5105 = vmatprep.mubr.f32.mxu0 0.0
    %v5106 = vand.u32 %v4598, 4294901760
    %5107 = vmatmul.mubr.f32.gmra.mrb[0].mxu0 %v5106
    %v5108 = vpop.f32.mrb[0].mxu0
    %v5109 = vadd.f32 %v4828, %v5108
    %v5110 = vpop.f32.mrb[0].mxu0
    %v5111 = vadd.f32 %v4830, %v5110
    %5112 = vdwg.mxu0
    %v5113 = vand.u32 %v4560, 4294901760
    %v5114 = vsub.f32 %v4560, %v5113
    %5115 = vmatprep.subr.mxu0 %v5114
    %v5116 = vand.u32 %v4559, 4294901760
    %v5117 = vsub.f32 %v4559, %v5116
    %5118 = vmatpush1.msra.mxu0 %v5117
    %v5119 = vand.u32 %v4562, 4294901760
    %v5120 = vsub.f32 %v4562, %v5119
    %5121 = vmatprep.subr.mxu0 %v5120
    %v5122 = vand.u32 %v4561, 4294901760
    %v5123 = vsub.f32 %v4561, %v5122
    %5124 = vmatpush1.msra.mxu0 %v5123
    %v5125 = vand.u32 %v4564, 4294901760
    %v5126 = vsub.f32 %v4564, %v5125
    %5127 = vmatprep.subr.mxu0 %v5126
    %v5128 = vand.u32 %v4563, 4294901760
    %v5129 = vsub.f32 %v4563, %v5128
    %5130 = vmatpush1.msra.mxu0 %v5129
    %v5131 = vand.u32 %v4566, 4294901760
    %v5132 = vsub.f32 %v4566, %v5131
    %5133 = vmatprep.subr.mxu0 %v5132
    %v5134 = vand.u32 %v4565, 4294901760
    %v5135 = vsub.f32 %v4565, %v5134
    %5136 = vmatpush1.msra.mxu0 %v5135
    %v5137 = vand.u32 %v4568, 4294901760
    %v5138 = vsub.f32 %v4568, %v5137
    %5139 = vmatprep.subr.mxu0 %v5138
    %v5140 = vand.u32 %v4567, 4294901760
    %v5141 = vsub.f32 %v4567, %v5140
    %5142 = vmatpush1.msra.mxu0 %v5141
    %v5143 = vand.u32 %v4570, 4294901760
    %v5144 = vsub.f32 %v4570, %v5143
    %5145 = vmatprep.subr.mxu0 %v5144
    %v5146 = vand.u32 %v4569, 4294901760
    %v5147 = vsub.f32 %v4569, %v5146
    %5148 = vmatpush1.msra.mxu0 %v5147
    %v5149 = vand.u32 %v4572, 4294901760
    %v5150 = vsub.f32 %v4572, %v5149
    %5151 = vmatprep.subr.mxu0 %v5150
    %v5152 = vand.u32 %v4571, 4294901760
    %v5153 = vsub.f32 %v4571, %v5152
    %5154 = vmatpush1.msra.mxu0 %v5153
    %v5155 = vand.u32 %v4574, 4294901760
    %v5156 = vsub.f32 %v4574, %v5155
    %5157 = vmatprep.subr.mxu0 %v5156
    %v5158 = vand.u32 %v4573, 4294901760
    %v5159 = vsub.f32 %v4573, %v5158
    %5160 = vmatpush1.msra.mxu0 %v5159
    %v5161 = vand.u32 %v4576, 4294901760
    %v5162 = vsub.f32 %v4576, %v5161
    %5163 = vmatprep.subr.mxu0 %v5162
    %v5164 = vand.u32 %v4575, 4294901760
    %v5165 = vsub.f32 %v4575, %v5164
    %5166 = vmatpush1.msra.mxu0 %v5165
    %v5167 = vand.u32 %v4578, 4294901760
    %v5168 = vsub.f32 %v4578, %v5167
    %5169 = vmatprep.subr.mxu0 %v5168
    %v5170 = vand.u32 %v4577, 4294901760
    %v5171 = vsub.f32 %v4577, %v5170
    %5172 = vmatpush1.msra.mxu0 %v5171
    %v5173 = vand.u32 %v4580, 4294901760
    %v5174 = vsub.f32 %v4580, %v5173
    %5175 = vmatprep.subr.mxu0 %v5174
    %v5176 = vand.u32 %v4579, 4294901760
    %v5177 = vsub.f32 %v4579, %v5176
    %5178 = vmatpush1.msra.mxu0 %v5177
    %v5179 = vand.u32 %v4582, 4294901760
    %v5180 = vsub.f32 %v4582, %v5179
    %5181 = vmatprep.subr.mxu0 %v5180
    %v5182 = vand.u32 %v4581, 4294901760
    %v5183 = vsub.f32 %v4581, %v5182
    %5184 = vmatpush1.msra.mxu0 %v5183
    %v5185 = vand.u32 %v4584, 4294901760
    %v5186 = vsub.f32 %v4584, %v5185
    %5187 = vmatprep.subr.mxu0 %v5186
    %v5188 = vand.u32 %v4583, 4294901760
    %v5189 = vsub.f32 %v4583, %v5188
    %5190 = vmatpush1.msra.mxu0 %v5189
    %v5191 = vand.u32 %v4586, 4294901760
    %v5192 = vsub.f32 %v4586, %v5191
    %5193 = vmatprep.subr.mxu0 %v5192
    %v5194 = vand.u32 %v4585, 4294901760
    %v5195 = vsub.f32 %v4585, %v5194
    %5196 = vmatpush1.msra.mxu0 %v5195
    %v5197 = vand.u32 %v4588, 4294901760
    %v5198 = vsub.f32 %v4588, %v5197
    %5199 = vmatprep.subr.mxu0 %v5198
    %v5200 = vand.u32 %v4587, 4294901760
    %v5201 = vsub.f32 %v4587, %v5200
    %5202 = vmatpush1.msra.mxu0 %v5201
    %v5203 = vand.u32 %v4590, 4294901760
    %v5204 = vsub.f32 %v4590, %v5203
    %5205 = vmatprep.subr.mxu0 %v5204
    %v5206 = vand.u32 %v4589, 4294901760
    %v5207 = vsub.f32 %v4589, %v5206
    %5208 = vmatpush1.msra.mxu0 %v5207
    %5209 = vmatprep.subr.mxu0 0.0
    %5210 = vmatpush1.msra.mxu0 0.0
    %5211 = vmatprep.subr.mxu0 0.0
    %5212 = vmatpush1.msra.mxu0 0.0
    %5213 = vmatprep.subr.mxu0 0.0
    %5214 = vmatpush1.msra.mxu0 0.0
    %5215 = vmatprep.subr.mxu0 0.0
    %5216 = vmatpush1.msra.mxu0 0.0
    %5217 = vmatprep.subr.mxu0 0.0
    %5218 = vmatpush1.msra.mxu0 0.0
    %5219 = vmatprep.subr.mxu0 0.0
    %5220 = vmatpush1.msra.mxu0 0.0
    %5221 = vmatprep.subr.mxu0 0.0
    %5222 = vmatpush1.msra.mxu0 0.0
    %5223 = vmatprep.subr.mxu0 0.0
    %5224 = vmatpush1.msra.mxu0 0.0
    %5225 = vmatprep.subr.mxu0 0.0
    %5226 = vmatpush1.msra.mxu0 0.0
    %5227 = vmatprep.subr.mxu0 0.0
    %5228 = vmatpush1.msra.mxu0 0.0
    %5229 = vmatprep.subr.mxu0 0.0
    %5230 = vmatpush1.msra.mxu0 0.0
    %5231 = vmatprep.subr.mxu0 0.0
    %5232 = vmatpush1.msra.mxu0 0.0
    %5233 = vmatprep.subr.mxu0 0.0
    %5234 = vmatpush1.msra.mxu0 0.0
    %5235 = vmatprep.subr.mxu0 0.0
    %5236 = vmatpush1.msra.mxu0 0.0
    %5237 = vmatprep.subr.mxu0 0.0
    %5238 = vmatpush1.msra.mxu0 0.0
    %5239 = vmatprep.subr.mxu0 0.0
    %5240 = vmatpush1.msra.mxu0 0.0
    %5241 = vmatprep.mubr.f32.mxu0 0.0
    %v5242 = vand.u32 %v4591, 4294901760
    %v5243 = vsub.f32 %v4591, %v5242
    %5244 = vmatmul.mubr.f32.gmra.mrb[0].mxu0 %v5243
    %v5245 = vpop.f32.mrb[0].mxu0
    %v5246 = vadd.f32 %v5060, %v5245
    %v5247 = vpop.f32.mrb[0].mxu0
    %v5248 = vadd.f32 %v5062, %v5247
    %5249 = vmatprep.mubr.f32.mxu0 0.0
    %v5250 = vand.u32 %v4592, 4294901760
    %v5251 = vsub.f32 %v4592, %v5250
    %5252 = vmatmul.mubr.f32.gmra.mrb[0].mxu0 %v5251
    %v5253 = vpop.f32.mrb[0].mxu0
    %v5254 = vadd.f32 %v5067, %v5253
    %v5255 = vpop.f32.mrb[0].mxu0
    %v5256 = vadd.f32 %v5069, %v5255
    %5257 = vmatprep.mubr.f32.mxu0 0.0
    %v5258 = vand.u32 %v4593, 4294901760
    %v5259 = vsub.f32 %v4593, %v5258
    %5260 = vmatmul.mubr.f32.gmra.mrb[0].mxu0 %v5259
    %v5261 = vpop.f32.mrb[0].mxu0
    %v5262 = vadd.f32 %v5074, %v5261
    %v5263 = vpop.f32.mrb[0].mxu0
    %v5264 = vadd.f32 %v5076, %v5263
    %5265 = vmatprep.mubr.f32.mxu0 0.0
    %v5266 = vand.u32 %v4594, 4294901760
    %v5267 = vsub.f32 %v4594, %v5266
    %5268 = vmatmul.mubr.f32.gmra.mrb[0].mxu0 %v5267
    %v5269 = vpop.f32.mrb[0].mxu0
    %v5270 = vadd.f32 %v5081, %v5269
    %v5271 = vpop.f32.mrb[0].mxu0
    %v5272 = vadd.f32 %v5083, %v5271
    %5273 = vmatprep.mubr.f32.mxu0 0.0
    %v5274 = vand.u32 %v4595, 4294901760
    %v5275 = vsub.f32 %v4595, %v5274
    %5276 = vmatmul.mubr.f32.gmra.mrb[0].mxu0 %v5275
    %v5277 = vpop.f32.mrb[0].mxu0
    %v5278 = vadd.f32 %v5088, %v5277
    %v5279 = vpop.f32.mrb[0].mxu0
    %v5280 = vadd.f32 %v5090, %v5279
    %5281 = vmatprep.mubr.f32.mxu0 0.0
    %v5282 = vand.u32 %v4596, 4294901760
    %v5283 = vsub.f32 %v4596, %v5282
    %5284 = vmatmul.mubr.f32.gmra.mrb[0].mxu0 %v5283
    %v5285 = vpop.f32.mrb[0].mxu0
    %v5286 = vadd.f32 %v5095, %v5285
    %v5287 = vpop.f32.mrb[0].mxu0
    %v5288 = vadd.f32 %v5097, %v5287
    %5289 = vmatprep.mubr.f32.mxu0 0.0
    %v5290 = vand.u32 %v4597, 4294901760
    %v5291 = vsub.f32 %v4597, %v5290
    %5292 = vmatmul.mubr.f32.gmra.mrb[0].mxu0 %v5291
    %v5293 = vpop.f32.mrb[0].mxu0
    %v5294 = vadd.f32 %v5102, %v5293
    %v5295 = vpop.f32.mrb[0].mxu0
    %v5296 = vadd.f32 %v5104, %v5295
    %5297 = vmatprep.mubr.f32.mxu0 0.0
    %v5298 = vand.u32 %v4598, 4294901760
    %v5299 = vsub.f32 %v4598, %v5298
    %5300 = vmatmul.mubr.f32.gmra.mrb[0].mxu0 %v5299
    %v5301 = vpop.f32.mrb[0].mxu0
    %v5302 = vadd.f32 %v5109, %v5301
    %v5303 = vpop.f32.mrb[0].mxu0
    %v5304 = vadd.f32 %v5111, %v5303
    %5305 = vdwg.mxu0
    %v5306 = vand.u32 %v4560, 4294901760
    %5307 = vmatprep.subr.mxu0 %v5306
    %v5308 = vand.u32 %v4559, 4294901760
    %5309 = vmatpush1.msra.mxu0 %v5308
    %v5310 = vand.u32 %v4562, 4294901760
    %5311 = vmatprep.subr.mxu0 %v5310
    %v5312 = vand.u32 %v4561, 4294901760
    %5313 = vmatpush1.msra.mxu0 %v5312
    %v5314 = vand.u32 %v4564, 4294901760
    %5315 = vmatprep.subr.mxu0 %v5314
    %v5316 = vand.u32 %v4563, 4294901760
    %5317 = vmatpush1.msra.mxu0 %v5316
    %v5318 = vand.u32 %v4566, 4294901760
    %5319 = vmatprep.subr.mxu0 %v5318
    %v5320 = vand.u32 %v4565, 4294901760
    %5321 = vmatpush1.msra.mxu0 %v5320
    %v5322 = vand.u32 %v4568, 4294901760
    %5323 = vmatprep.subr.mxu0 %v5322
    %v5324 = vand.u32 %v4567, 4294901760
    %5325 = vmatpush1.msra.mxu0 %v5324
    %v5326 = vand.u32 %v4570, 4294901760
    %5327 = vmatprep.subr.mxu0 %v5326
    %v5328 = vand.u32 %v4569, 4294901760
    %5329 = vmatpush1.msra.mxu0 %v5328
    %v5330 = vand.u32 %v4572, 4294901760
    %5331 = vmatprep.subr.mxu0 %v5330
    %v5332 = vand.u32 %v4571, 4294901760
    %5333 = vmatpush1.msra.mxu0 %v5332
    %v5334 = vand.u32 %v4574, 4294901760
    %5335 = vmatprep.subr.mxu0 %v5334
    %v5336 = vand.u32 %v4573, 4294901760
    %5337 = vmatpush1.msra.mxu0 %v5336
    %v5338 = vand.u32 %v4576, 4294901760
    %5339 = vmatprep.subr.mxu0 %v5338
    %v5340 = vand.u32 %v4575, 4294901760
    %5341 = vmatpush1.msra.mxu0 %v5340
    %v5342 = vand.u32 %v4578, 4294901760
    %5343 = vmatprep.subr.mxu0 %v5342
    %v5344 = vand.u32 %v4577, 4294901760
    %5345 = vmatpush1.msra.mxu0 %v5344
    %v5346 = vand.u32 %v4580, 4294901760
    %5347 = vmatprep.subr.mxu0 %v5346
    %v5348 = vand.u32 %v4579, 4294901760
    %5349 = vmatpush1.msra.mxu0 %v5348
    %v5350 = vand.u32 %v4582, 4294901760
    %5351 = vmatprep.subr.mxu0 %v5350
    %v5352 = vand.u32 %v4581, 4294901760
    %5353 = vmatpush1.msra.mxu0 %v5352
    %v5354 = vand.u32 %v4584, 4294901760
    %5355 = vmatprep.subr.mxu0 %v5354
    %v5356 = vand.u32 %v4583, 4294901760
    %5357 = vmatpush1.msra.mxu0 %v5356
    %v5358 = vand.u32 %v4586, 4294901760
    %5359 = vmatprep.subr.mxu0 %v5358
    %v5360 = vand.u32 %v4585, 4294901760
    %5361 = vmatpush1.msra.mxu0 %v5360
    %v5362 = vand.u32 %v4588, 4294901760
    %5363 = vmatprep.subr.mxu0 %v5362
    %v5364 = vand.u32 %v4587, 4294901760
    %5365 = vmatpush1.msra.mxu0 %v5364
    %v5366 = vand.u32 %v4590, 4294901760
    %5367 = vmatprep.subr.mxu0 %v5366
    %v5368 = vand.u32 %v4589, 4294901760
    %5369 = vmatpush1.msra.mxu0 %v5368
    %5370 = vmatprep.subr.mxu0 0.0
    %5371 = vmatpush1.msra.mxu0 0.0
    %5372 = vmatprep.subr.mxu0 0.0
    %5373 = vmatpush1.msra.mxu0 0.0
    %5374 = vmatprep.subr.mxu0 0.0
    %5375 = vmatpush1.msra.mxu0 0.0
    %5376 = vmatprep.subr.mxu0 0.0
    %5377 = vmatpush1.msra.mxu0 0.0
    %5378 = vmatprep.subr.mxu0 0.0
    %5379 = vmatpush1.msra.mxu0 0.0
    %5380 = vmatprep.subr.mxu0 0.0
    %5381 = vmatpush1.msra.mxu0 0.0
    %5382 = vmatprep.subr.mxu0 0.0
    %5383 = vmatpush1.msra.mxu0 0.0
    %5384 = vmatprep.subr.mxu0 0.0
    %5385 = vmatpush1.msra.mxu0 0.0
    %5386 = vmatprep.subr.mxu0 0.0
    %5387 = vmatpush1.msra.mxu0 0.0
    %5388 = vmatprep.subr.mxu0 0.0
    %5389 = vmatpush1.msra.mxu0 0.0
    %5390 = vmatprep.subr.mxu0 0.0
    %5391 = vmatpush1.msra.mxu0 0.0
    %5392 = vmatprep.subr.mxu0 0.0
    %5393 = vmatpush1.msra.mxu0 0.0
    %5394 = vmatprep.subr.mxu0 0.0
    %5395 = vmatpush1.msra.mxu0 0.0
    %5396 = vmatprep.subr.mxu0 0.0
    %5397 = vmatpush1.msra.mxu0 0.0
    %5398 = vmatprep.subr.mxu0 0.0
    %5399 = vmatpush1.msra.mxu0 0.0
    %5400 = vmatprep.subr.mxu0 0.0
    %5401 = vmatpush1.msra.mxu0 0.0
    %5402 = vmatprep.mubr.f32.mxu0 0.0
    %v5403 = vand.u32 %v4591, 4294901760
    %v5404 = vsub.f32 %v4591, %v5403
    %v5405 = vand.u32 %v5404, 4294901760
    %5406 = vmatmul.mubr.f32.gmra.mrb[0].mxu0 %v5405
    %v5407 = vpop.f32.mrb[0].mxu0
    %v5408 = vadd.f32 %v5246, %v5407
    %v5409 = vpop.f32.mrb[0].mxu0
    %v5410 = vadd.f32 %v5248, %v5409
    %5411 = vmatprep.mubr.f32.mxu0 0.0
    %v5412 = vand.u32 %v4592, 4294901760
    %v5413 = vsub.f32 %v4592, %v5412
    %v5414 = vand.u32 %v5413, 4294901760
    %5415 = vmatmul.mubr.f32.gmra.mrb[0].mxu0 %v5414
    %v5416 = vpop.f32.mrb[0].mxu0
    %v5417 = vadd.f32 %v5254, %v5416
    %v5418 = vpop.f32.mrb[0].mxu0
    %v5419 = vadd.f32 %v5256, %v5418
    %5420 = vmatprep.mubr.f32.mxu0 0.0
    %v5421 = vand.u32 %v4593, 4294901760
    %v5422 = vsub.f32 %v4593, %v5421
    %v5423 = vand.u32 %v5422, 4294901760
    %5424 = vmatmul.mubr.f32.gmra.mrb[0].mxu0 %v5423
    %v5425 = vpop.f32.mrb[0].mxu0
    %v5426 = vadd.f32 %v5262, %v5425
    %v5427 = vpop.f32.mrb[0].mxu0
    %v5428 = vadd.f32 %v5264, %v5427
    %5429 = vmatprep.mubr.f32.mxu0 0.0
    %v5430 = vand.u32 %v4594, 4294901760
    %v5431 = vsub.f32 %v4594, %v5430
    %v5432 = vand.u32 %v5431, 4294901760
    %5433 = vmatmul.mubr.f32.gmra.mrb[0].mxu0 %v5432
    %v5434 = vpop.f32.mrb[0].mxu0
    %v5435 = vadd.f32 %v5270, %v5434
    %v5436 = vpop.f32.mrb[0].mxu0
    %v5437 = vadd.f32 %v5272, %v5436
    %5438 = vmatprep.mubr.f32.mxu0 0.0
    %v5439 = vand.u32 %v4595, 4294901760
    %v5440 = vsub.f32 %v4595, %v5439
    %v5441 = vand.u32 %v5440, 4294901760
    %5442 = vmatmul.mubr.f32.gmra.mrb[0].mxu0 %v5441
    %v5443 = vpop.f32.mrb[0].mxu0
    %v5444 = vadd.f32 %v5278, %v5443
    %v5445 = vpop.f32.mrb[0].mxu0
    %v5446 = vadd.f32 %v5280, %v5445
    %5447 = vmatprep.mubr.f32.mxu0 0.0
    %v5448 = vand.u32 %v4596, 4294901760
    %v5449 = vsub.f32 %v4596, %v5448
    %v5450 = vand.u32 %v5449, 4294901760
    %5451 = vmatmul.mubr.f32.gmra.mrb[0].mxu0 %v5450
    %v5452 = vpop.f32.mrb[0].mxu0
    %v5453 = vadd.f32 %v5286, %v5452
    %v5454 = vpop.f32.mrb[0].mxu0
    %v5455 = vadd.f32 %v5288, %v5454
    %5456 = vmatprep.mubr.f32.mxu0 0.0
    %v5457 = vand.u32 %v4597, 4294901760
    %v5458 = vsub.f32 %v4597, %v5457
    %v5459 = vand.u32 %v5458, 4294901760
    %5460 = vmatmul.mubr.f32.gmra.mrb[0].mxu0 %v5459
    %v5461 = vpop.f32.mrb[0].mxu0
    %v5462 = vadd.f32 %v5294, %v5461
    %v5463 = vpop.f32.mrb[0].mxu0
    %v5464 = vadd.f32 %v5296, %v5463
    %5465 = vmatprep.mubr.f32.mxu0 0.0
    %v5466 = vand.u32 %v4598, 4294901760
    %v5467 = vsub.f32 %v4598, %v5466
    %v5468 = vand.u32 %v5467, 4294901760
    %5469 = vmatmul.mubr.f32.gmra.mrb[0].mxu0 %v5468
    %v5470 = vpop.f32.mrb[0].mxu0
    %v5471 = vadd.f32 %v5302, %v5470
    %v5472 = vpop.f32.mrb[0].mxu0
    %v5473 = vadd.f32 %v5304, %v5472
    %5474 = vdwg.mxu0
    %v5475 = vand.u32 %v4560, 4294901760
    %v5476 = vsub.f32 %v4560, %v5475
    %v5477 = vand.u32 %v5476, 4294901760
    %5478 = vmatprep.subr.mxu0 %v5477
    %v5479 = vand.u32 %v4559, 4294901760
    %v5480 = vsub.f32 %v4559, %v5479
    %v5481 = vand.u32 %v5480, 4294901760
    %5482 = vmatpush1.msra.mxu0 %v5481
    %v5483 = vand.u32 %v4562, 4294901760
    %v5484 = vsub.f32 %v4562, %v5483
    %v5485 = vand.u32 %v5484, 4294901760
    %5486 = vmatprep.subr.mxu0 %v5485
    %v5487 = vand.u32 %v4561, 4294901760
    %v5488 = vsub.f32 %v4561, %v5487
    %v5489 = vand.u32 %v5488, 4294901760
    %5490 = vmatpush1.msra.mxu0 %v5489
    %v5491 = vand.u32 %v4564, 4294901760
    %v5492 = vsub.f32 %v4564, %v5491
    %v5493 = vand.u32 %v5492, 4294901760
    %5494 = vmatprep.subr.mxu0 %v5493
    %v5495 = vand.u32 %v4563, 4294901760
    %v5496 = vsub.f32 %v4563, %v5495
    %v5497 = vand.u32 %v5496, 4294901760
    %5498 = vmatpush1.msra.mxu0 %v5497
    %v5499 = vand.u32 %v4566, 4294901760
    %v5500 = vsub.f32 %v4566, %v5499
    %v5501 = vand.u32 %v5500, 4294901760
    %5502 = vmatprep.subr.mxu0 %v5501
    %v5503 = vand.u32 %v4565, 4294901760
    %v5504 = vsub.f32 %v4565, %v5503
    %v5505 = vand.u32 %v5504, 4294901760
    %5506 = vmatpush1.msra.mxu0 %v5505
    %v5507 = vand.u32 %v4568, 4294901760
    %v5508 = vsub.f32 %v4568, %v5507
    %v5509 = vand.u32 %v5508, 4294901760
    %5510 = vmatprep.subr.mxu0 %v5509
    %v5511 = vand.u32 %v4567, 4294901760
    %v5512 = vsub.f32 %v4567, %v5511
    %v5513 = vand.u32 %v5512, 4294901760
    %5514 = vmatpush1.msra.mxu0 %v5513
    %v5515 = vand.u32 %v4570, 4294901760
    %v5516 = vsub.f32 %v4570, %v5515
    %v5517 = vand.u32 %v5516, 4294901760
    %5518 = vmatprep.subr.mxu0 %v5517
    %v5519 = vand.u32 %v4569, 4294901760
    %v5520 = vsub.f32 %v4569, %v5519
    %v5521 = vand.u32 %v5520, 4294901760
    %5522 = vmatpush1.msra.mxu0 %v5521
    %v5523 = vand.u32 %v4572, 4294901760
    %v5524 = vsub.f32 %v4572, %v5523
    %v5525 = vand.u32 %v5524, 4294901760
    %5526 = vmatprep.subr.mxu0 %v5525
    %v5527 = vand.u32 %v4571, 4294901760
    %v5528 = vsub.f32 %v4571, %v5527
    %v5529 = vand.u32 %v5528, 4294901760
    %5530 = vmatpush1.msra.mxu0 %v5529
    %v5531 = vand.u32 %v4574, 4294901760
    %v5532 = vsub.f32 %v4574, %v5531
    %v5533 = vand.u32 %v5532, 4294901760
    %5534 = vmatprep.subr.mxu0 %v5533
    %v5535 = vand.u32 %v4573, 4294901760
    %v5536 = vsub.f32 %v4573, %v5535
    %v5537 = vand.u32 %v5536, 4294901760
    %5538 = vmatpush1.msra.mxu0 %v5537
    %v5539 = vand.u32 %v4576, 4294901760
    %v5540 = vsub.f32 %v4576, %v5539
    %v5541 = vand.u32 %v5540, 4294901760
    %5542 = vmatprep.subr.mxu0 %v5541
    %v5543 = vand.u32 %v4575, 4294901760
    %v5544 = vsub.f32 %v4575, %v5543
    %v5545 = vand.u32 %v5544, 4294901760
    %5546 = vmatpush1.msra.mxu0 %v5545
    %v5547 = vand.u32 %v4578, 4294901760
    %v5548 = vsub.f32 %v4578, %v5547
    %v5549 = vand.u32 %v5548, 4294901760
    %5550 = vmatprep.subr.mxu0 %v5549
    %v5551 = vand.u32 %v4577, 4294901760
    %v5552 = vsub.f32 %v4577, %v5551
    %v5553 = vand.u32 %v5552, 4294901760
    %5554 = vmatpush1.msra.mxu0 %v5553
    %v5555 = vand.u32 %v4580, 4294901760
    %v5556 = vsub.f32 %v4580, %v5555
    %v5557 = vand.u32 %v5556, 4294901760
    %5558 = vmatprep.subr.mxu0 %v5557
    %v5559 = vand.u32 %v4579, 4294901760
    %v5560 = vsub.f32 %v4579, %v5559
    %v5561 = vand.u32 %v5560, 4294901760
    %5562 = vmatpush1.msra.mxu0 %v5561
    %v5563 = vand.u32 %v4582, 4294901760
    %v5564 = vsub.f32 %v4582, %v5563
    %v5565 = vand.u32 %v5564, 4294901760
    %5566 = vmatprep.subr.mxu0 %v5565
    %v5567 = vand.u32 %v4581, 4294901760
    %v5568 = vsub.f32 %v4581, %v5567
    %v5569 = vand.u32 %v5568, 4294901760
    %5570 = vmatpush1.msra.mxu0 %v5569
    %v5571 = vand.u32 %v4584, 4294901760
    %v5572 = vsub.f32 %v4584, %v5571
    %v5573 = vand.u32 %v5572, 4294901760
    %5574 = vmatprep.subr.mxu0 %v5573
    %v5575 = vand.u32 %v4583, 4294901760
    %v5576 = vsub.f32 %v4583, %v5575
    %v5577 = vand.u32 %v5576, 4294901760
    %5578 = vmatpush1.msra.mxu0 %v5577
    %v5579 = vand.u32 %v4586, 4294901760
    %v5580 = vsub.f32 %v4586, %v5579
    %v5581 = vand.u32 %v5580, 4294901760
    %5582 = vmatprep.subr.mxu0 %v5581
    %v5583 = vand.u32 %v4585, 4294901760
    %v5584 = vsub.f32 %v4585, %v5583
    %v5585 = vand.u32 %v5584, 4294901760
    %5586 = vmatpush1.msra.mxu0 %v5585
    %v5587 = vand.u32 %v4588, 4294901760
    %v5588 = vsub.f32 %v4588, %v5587
    %v5589 = vand.u32 %v5588, 4294901760
    %5590 = vmatprep.subr.mxu0 %v5589
    %v5591 = vand.u32 %v4587, 4294901760
    %v5592 = vsub.f32 %v4587, %v5591
    %v5593 = vand.u32 %v5592, 4294901760
    %5594 = vmatpush1.msra.mxu0 %v5593
    %v5595 = vand.u32 %v4590, 4294901760
    %v5596 = vsub.f32 %v4590, %v5595
    %v5597 = vand.u32 %v5596, 4294901760
    %5598 = vmatprep.subr.mxu0 %v5597
    %v5599 = vand.u32 %v4589, 4294901760
    %v5600 = vsub.f32 %v4589, %v5599
    %v5601 = vand.u32 %v5600, 4294901760
    %5602 = vmatpush1.msra.mxu0 %v5601
    %5603 = vmatprep.subr.mxu0 0.0
    %5604 = vmatpush1.msra.mxu0 0.0
    %5605 = vmatprep.subr.mxu0 0.0
    %5606 = vmatpush1.msra.mxu0 0.0
    %5607 = vmatprep.subr.mxu0 0.0
    %5608 = vmatpush1.msra.mxu0 0.0
    %5609 = vmatprep.subr.mxu0 0.0
    %5610 = vmatpush1.msra.mxu0 0.0
    %5611 = vmatprep.subr.mxu0 0.0
    %5612 = vmatpush1.msra.mxu0 0.0
    %5613 = vmatprep.subr.mxu0 0.0
    %5614 = vmatpush1.msra.mxu0 0.0
    %5615 = vmatprep.subr.mxu0 0.0
    %5616 = vmatpush1.msra.mxu0 0.0
    %5617 = vmatprep.subr.mxu0 0.0
    %5618 = vmatpush1.msra.mxu0 0.0
    %5619 = vmatprep.subr.mxu0 0.0
    %5620 = vmatpush1.msra.mxu0 0.0
    %5621 = vmatprep.subr.mxu0 0.0
    %5622 = vmatpush1.msra.mxu0 0.0
    %5623 = vmatprep.subr.mxu0 0.0
    %5624 = vmatpush1.msra.mxu0 0.0
    %5625 = vmatprep.subr.mxu0 0.0
    %5626 = vmatpush1.msra.mxu0 0.0
    %5627 = vmatprep.subr.mxu0 0.0
    %5628 = vmatpush1.msra.mxu0 0.0
    %5629 = vmatprep.subr.mxu0 0.0
    %5630 = vmatpush1.msra.mxu0 0.0
    %5631 = vmatprep.subr.mxu0 0.0
    %5632 = vmatpush1.msra.mxu0 0.0
    %5633 = vmatprep.subr.mxu0 0.0
    %5634 = vmatpush1.msra.mxu0 0.0
    %5635 = vmatprep.mubr.f32.mxu0 0.0
    %v5636 = vand.u32 %v4591, 4294901760
    %5637 = vmatmul.mubr.f32.gmra.mrb[0].mxu0 %v5636
    %v5638 = vpop.f32.mrb[0].mxu0
    %v5639 = vadd.f32 %v5408, %v5638
    %v5640 = vpop.f32.mrb[0].mxu0
    %v5641 = vadd.f32 %v5410, %v5640
    %5642 = vmatprep.mubr.f32.mxu0 0.0
    %v5643 = vand.u32 %v4592, 4294901760
    %5644 = vmatmul.mubr.f32.gmra.mrb[0].mxu0 %v5643
    %v5645 = vpop.f32.mrb[0].mxu0
    %v5646 = vadd.f32 %v5417, %v5645
    %v5647 = vpop.f32.mrb[0].mxu0
    %v5648 = vadd.f32 %v5419, %v5647
    %5649 = vmatprep.mubr.f32.mxu0 0.0
    %v5650 = vand.u32 %v4593, 4294901760
    %5651 = vmatmul.mubr.f32.gmra.mrb[0].mxu0 %v5650
    %v5652 = vpop.f32.mrb[0].mxu0
    %v5653 = vadd.f32 %v5426, %v5652
    %v5654 = vpop.f32.mrb[0].mxu0
    %v5655 = vadd.f32 %v5428, %v5654
    %5656 = vmatprep.mubr.f32.mxu0 0.0
    %v5657 = vand.u32 %v4594, 4294901760
    %5658 = vmatmul.mubr.f32.gmra.mrb[0].mxu0 %v5657
    %v5659 = vpop.f32.mrb[0].mxu0
    %v5660 = vadd.f32 %v5435, %v5659
    %v5661 = vpop.f32.mrb[0].mxu0
    %v5662 = vadd.f32 %v5437, %v5661
    %5663 = vmatprep.mubr.f32.mxu0 0.0
    %v5664 = vand.u32 %v4595, 4294901760
    %5665 = vmatmul.mubr.f32.gmra.mrb[0].mxu0 %v5664
    %v5666 = vpop.f32.mrb[0].mxu0
    %v5667 = vadd.f32 %v5444, %v5666
    %v5668 = vpop.f32.mrb[0].mxu0
    %v5669 = vadd.f32 %v5446, %v5668
    %5670 = vmatprep.mubr.f32.mxu0 0.0
    %v5671 = vand.u32 %v4596, 4294901760
    %5672 = vmatmul.mubr.f32.gmra.mrb[0].mxu0 %v5671
    %v5673 = vpop.f32.mrb[0].mxu0
    %v5674 = vadd.f32 %v5453, %v5673
    %v5675 = vpop.f32.mrb[0].mxu0
    %v5676 = vadd.f32 %v5455, %v5675
    %5677 = vmatprep.mubr.f32.mxu0 0.0
    %v5678 = vand.u32 %v4597, 4294901760
    %5679 = vmatmul.mubr.f32.gmra.mrb[0].mxu0 %v5678
    %v5680 = vpop.f32.mrb[0].mxu0
    %v5681 = vadd.f32 %v5462, %v5680
    %v5682 = vpop.f32.mrb[0].mxu0
    %v5683 = vadd.f32 %v5464, %v5682
    %5684 = vmatprep.mubr.f32.mxu0 0.0
    %v5685 = vand.u32 %v4598, 4294901760
    %5686 = vmatmul.mubr.f32.gmra.mrb[0].mxu0 %v5685
    %v5687 = vpop.f32.mrb[0].mxu0
    %v5688 = vadd.f32 %v5471, %v5687
    %v5689 = vpop.f32.mrb[0].mxu0
    %v5690 = vadd.f32 %v5473, %v5689
    %5691 = vdwg.mxu0
    %v5692 = vand.u32 %v4560, 4294901760
    %5693 = vmatprep.subr.mxu0 %v5692
    %v5694 = vand.u32 %v4559, 4294901760
    %5695 = vmatpush1.msra.mxu0 %v5694
    %v5696 = vand.u32 %v4562, 4294901760
    %5697 = vmatprep.subr.mxu0 %v5696
    %v5698 = vand.u32 %v4561, 4294901760
    %5699 = vmatpush1.msra.mxu0 %v5698
    %v5700 = vand.u32 %v4564, 4294901760
    %5701 = vmatprep.subr.mxu0 %v5700
    %v5702 = vand.u32 %v4563, 4294901760
    %5703 = vmatpush1.msra.mxu0 %v5702
    %v5704 = vand.u32 %v4566, 4294901760
    %5705 = vmatprep.subr.mxu0 %v5704
    %v5706 = vand.u32 %v4565, 4294901760
    %5707 = vmatpush1.msra.mxu0 %v5706
    %v5708 = vand.u32 %v4568, 4294901760
    %5709 = vmatprep.subr.mxu0 %v5708
    %v5710 = vand.u32 %v4567, 4294901760
    %5711 = vmatpush1.msra.mxu0 %v5710
    %v5712 = vand.u32 %v4570, 4294901760
    %5713 = vmatprep.subr.mxu0 %v5712
    %v5714 = vand.u32 %v4569, 4294901760
    %5715 = vmatpush1.msra.mxu0 %v5714
    %v5716 = vand.u32 %v4572, 4294901760
    %5717 = vmatprep.subr.mxu0 %v5716
    %v5718 = vand.u32 %v4571, 4294901760
    %5719 = vmatpush1.msra.mxu0 %v5718
    %v5720 = vand.u32 %v4574, 4294901760
    %5721 = vmatprep.subr.mxu0 %v5720
    %v5722 = vand.u32 %v4573, 4294901760
    %5723 = vmatpush1.msra.mxu0 %v5722
    %v5724 = vand.u32 %v4576, 4294901760
    %5725 = vmatprep.subr.mxu0 %v5724
    %v5726 = vand.u32 %v4575, 4294901760
    %5727 = vmatpush1.msra.mxu0 %v5726
    %v5728 = vand.u32 %v4578, 4294901760
    %5729 = vmatprep.subr.mxu0 %v5728
    %v5730 = vand.u32 %v4577, 4294901760
    %5731 = vmatpush1.msra.mxu0 %v5730
    %v5732 = vand.u32 %v4580, 4294901760
    %5733 = vmatprep.subr.mxu0 %v5732
    %v5734 = vand.u32 %v4579, 4294901760
    %5735 = vmatpush1.msra.mxu0 %v5734
    %v5736 = vand.u32 %v4582, 4294901760
    %5737 = vmatprep.subr.mxu0 %v5736
    %v5738 = vand.u32 %v4581, 4294901760
    %5739 = vmatpush1.msra.mxu0 %v5738
    %v5740 = vand.u32 %v4584, 4294901760
    %5741 = vmatprep.subr.mxu0 %v5740
    %v5742 = vand.u32 %v4583, 4294901760
    %5743 = vmatpush1.msra.mxu0 %v5742
    %v5744 = vand.u32 %v4586, 4294901760
    %5745 = vmatprep.subr.mxu0 %v5744
    %v5746 = vand.u32 %v4585, 4294901760
    %5747 = vmatpush1.msra.mxu0 %v5746
    %v5748 = vand.u32 %v4588, 4294901760
    %5749 = vmatprep.subr.mxu0 %v5748
    %v5750 = vand.u32 %v4587, 4294901760
    %5751 = vmatpush1.msra.mxu0 %v5750
    %v5752 = vand.u32 %v4590, 4294901760
    %5753 = vmatprep.subr.mxu0 %v5752
    %v5754 = vand.u32 %v4589, 4294901760
    %5755 = vmatpush1.msra.mxu0 %v5754
    %5756 = vmatprep.subr.mxu0 0.0
    %5757 = vmatpush1.msra.mxu0 0.0
    %5758 = vmatprep.subr.mxu0 0.0
    %5759 = vmatpush1.msra.mxu0 0.0
    %5760 = vmatprep.subr.mxu0 0.0
    %5761 = vmatpush1.msra.mxu0 0.0
    %5762 = vmatprep.subr.mxu0 0.0
    %5763 = vmatpush1.msra.mxu0 0.0
    %5764 = vmatprep.subr.mxu0 0.0
    %5765 = vmatpush1.msra.mxu0 0.0
    %5766 = vmatprep.subr.mxu0 0.0
    %5767 = vmatpush1.msra.mxu0 0.0
    %5768 = vmatprep.subr.mxu0 0.0
    %5769 = vmatpush1.msra.mxu0 0.0
    %5770 = vmatprep.subr.mxu0 0.0
    %5771 = vmatpush1.msra.mxu0 0.0
    %5772 = vmatprep.subr.mxu0 0.0
    %5773 = vmatpush1.msra.mxu0 0.0
    %5774 = vmatprep.subr.mxu0 0.0
    %5775 = vmatpush1.msra.mxu0 0.0
    %5776 = vmatprep.subr.mxu0 0.0
    %5777 = vmatpush1.msra.mxu0 0.0
    %5778 = vmatprep.subr.mxu0 0.0
    %5779 = vmatpush1.msra.mxu0 0.0
    %5780 = vmatprep.subr.mxu0 0.0
    %5781 = vmatpush1.msra.mxu0 0.0
    %5782 = vmatprep.subr.mxu0 0.0
    %5783 = vmatpush1.msra.mxu0 0.0
    %5784 = vmatprep.subr.mxu0 0.0
    %5785 = vmatpush1.msra.mxu0 0.0
    %5786 = vmatprep.subr.mxu0 0.0
    %5787 = vmatpush1.msra.mxu0 0.0
    %5788 = vmatprep.mubr.f32.mxu0 0.0
    %v5789 = vand.u32 %v4591, 4294901760
    %5790 = vmatmul.mubr.f32.gmra.mrb[0].mxu0 %v5789
    %v5791 = vpop.f32.mrb[0].mxu0
    %v5792 = vadd.f32 %v5639, %v5791
    %v5793 = vpop.f32.mrb[0].mxu0
    %v5794 = vadd.f32 %v5641, %v5793
    %5795 = vmatprep.mubr.f32.mxu0 0.0
    %v5796 = vand.u32 %v4592, 4294901760
    %5797 = vmatmul.mubr.f32.gmra.mrb[0].mxu0 %v5796
    %v5798 = vpop.f32.mrb[0].mxu0
    %v5799 = vadd.f32 %v5646, %v5798
    %v5800 = vpop.f32.mrb[0].mxu0
    %v5801 = vadd.f32 %v5648, %v5800
    %5802 = vmatprep.mubr.f32.mxu0 0.0
    %v5803 = vand.u32 %v4593, 4294901760
    %5804 = vmatmul.mubr.f32.gmra.mrb[0].mxu0 %v5803
    %v5805 = vpop.f32.mrb[0].mxu0
    %v5806 = vadd.f32 %v5653, %v5805
    %v5807 = vpop.f32.mrb[0].mxu0
    %v5808 = vadd.f32 %v5655, %v5807
    %5809 = vmatprep.mubr.f32.mxu0 0.0
    %v5810 = vand.u32 %v4594, 4294901760
    %5811 = vmatmul.mubr.f32.gmra.mrb[0].mxu0 %v5810
    %v5812 = vpop.f32.mrb[0].mxu0
    %v5813 = vadd.f32 %v5660, %v5812
    %v5814 = vpop.f32.mrb[0].mxu0
    %v5815 = vadd.f32 %v5662, %v5814
    %5816 = vmatprep.mubr.f32.mxu0 0.0
    %v5817 = vand.u32 %v4595, 4294901760
    %5818 = vmatmul.mubr.f32.gmra.mrb[0].mxu0 %v5817
    %v5819 = vpop.f32.mrb[0].mxu0
    %v5820 = vadd.f32 %v5667, %v5819
    %v5821 = vpop.f32.mrb[0].mxu0
    %v5822 = vadd.f32 %v5669, %v5821
    %5823 = vmatprep.mubr.f32.mxu0 0.0
    %v5824 = vand.u32 %v4596, 4294901760
    %5825 = vmatmul.mubr.f32.gmra.mrb[0].mxu0 %v5824
    %v5826 = vpop.f32.mrb[0].mxu0
    %v5827 = vadd.f32 %v5674, %v5826
    %v5828 = vpop.f32.mrb[0].mxu0
    %v5829 = vadd.f32 %v5676, %v5828
    %5830 = vmatprep.mubr.f32.mxu0 0.0
    %v5831 = vand.u32 %v4597, 4294901760
    %5832 = vmatmul.mubr.f32.gmra.mrb[0].mxu0 %v5831
    %v5833 = vpop.f32.mrb[0].mxu0
    %v5834 = vadd.f32 %v5681, %v5833
    %v5835 = vpop.f32.mrb[0].mxu0
    %v5836 = vadd.f32 %v5683, %v5835
    %5837 = vmatprep.mubr.f32.mxu0 0.0
    %v5838 = vand.u32 %v4598, 4294901760
    %5839 = vmatmul.mubr.f32.gmra.mrb[0].mxu0 %v5838
    %v5840 = vpop.f32.mrb[0].mxu0
    %v5841 = vadd.f32 %v5688, %v5840
    %v5842 = vpop.f32.mrb[0].mxu0
    %v5843 = vadd.f32 %v5690, %v5842
    %5844 = vdwg.mxu0
    %v5845 = vmax.f32 %v5792, 0.0
    %v5846 = vmax.f32 %v5794, 0.0
    %v5847 = vmax.f32 %v5799, 0.0
    %v5848 = vmax.f32 %v5801, 0.0
    %v5849 = vmax.f32 %v5806, 0.0
    %v5850 = vmax.f32 %v5808, 0.0
    %v5851 = vmax.f32 %v5813, 0.0
    %v5852 = vmax.f32 %v5815, 0.0
    %v5853 = vmax.f32 %v5820, 0.0
    %v5854 = vmax.f32 %v5822, 0.0
    %v5855 = vmax.f32 %v5827, 0.0
    %v5856 = vmax.f32 %v5829, 0.0
    %v5857 = vmax.f32 %v5834, 0.0
    %v5858 = vmax.f32 %v5836, 0.0
    %v5859 = vmax.f32 %v5841, 0.0
    %v5860 = vmax.f32 %v5843, 0.0
    %v5861 = vld [vmem:[%s6] sm:$0xff]
    %v5862 = vld [vmem:[%s6 + $0x8] sm:$0xff]
    %v5863 = vld [vmem:[%s6 + $0x10] sm:$0xff]
    %v5864 = vld [vmem:[%s6 + $0x18] sm:$0xff]
    %v5865 = vld [vmem:[%s6 + $0x20] sm:$0xff]
    %v5866 = vld [vmem:[%s6 + $0x28] sm:$0xff]
    %v5867 = vld [vmem:[%s6 + $0x30] sm:$0xff]
    %v5868 = vld [vmem:[%s6 + $0x38] sm:$0xff]
    %5870 = vset.pattern.permute.xlu0 0
    %5871 = vperm.xlu0 %5870, %v5861
    %v5872 = vpop.permute.xlu0 %5871
    %5875 = vset.pattern.permute.xlu0 0
    %5876 = vperm.xlu0 %5875, %v5862
    %v5877 = vpop.permute.xlu0 %5876
    %5880 = vset.pattern.permute.xlu0 0
    %5881 = vperm.xlu0 %5880, %v5863
    %v5882 = vpop.permute.xlu0 %5881
    %5885 = vset.pattern.permute.xlu0 0
    %5886 = vperm.xlu0 %5885, %v5864
    %v5887 = vpop.permute.xlu0 %5886
    %5890 = vset.pattern.permute.xlu0 0
    %5891 = vperm.xlu0 %5890, %v5865
    %v5892 = vpop.permute.xlu0 %5891
    %5895 = vset.pattern.permute.xlu0 0
    %5896 = vperm.xlu0 %5895, %v5866
    %v5897 = vpop.permute.xlu0 %5896
    %5900 = vset.pattern.permute.xlu0 0
    %5901 = vperm.xlu0 %5900, %v5867
    %v5902 = vpop.permute.xlu0 %5901
    %5905 = vset.pattern.permute.xlu0 0
    %5906 = vperm.xlu0 %5905, %v5868
    %v5907 = vpop.permute.xlu0 %5906
    %v5909 = vmul.f32 %v5845, %v5872
    %v5910 = vmul.f32 %v5846, %v5872
    %v5911 = vmul.f32 %v5847, %v5877
    %v5912 = vmul.f32 %v5848, %v5877
    %v5913 = vmul.f32 %v5849, %v5882
    %v5914 = vmul.f32 %v5850, %v5882
    %v5915 = vmul.f32 %v5851, %v5887
    %v5916 = vmul.f32 %v5852, %v5887
    %v5917 = vmul.f32 %v5853, %v5892
    %v5918 = vmul.f32 %v5854, %v5892
    %v5919 = vmul.f32 %v5855, %v5897
    %v5920 = vmul.f32 %v5856, %v5897
    %v5921 = vmul.f32 %v5857, %v5902
    %v5922 = vmul.f32 %v5858, %v5902
    %v5923 = vmul.f32 %v5859, %v5907
    %v5924 = vmul.f32 %v5860, %v5907
    %v5925 = vadd.f32 %v5909, %v5911
    %v5926 = vadd.f32 %v5925, %v5913
    %v5927 = vadd.f32 %v5926, %v5915
    %v5928 = vadd.f32 %v5927, %v5917
    %v5929 = vadd.f32 %v5928, %v5919
    %v5930 = vadd.f32 %v5929, %v5921
    %v5931 = vadd.f32 %v5930, %v5923
    %v5932 = vrot.slane %v5931, 4
    %v5933 = vadd.f32 %v5931, %v5932
    %v5934 = vrot.slane %v5933, 2
    %v5935 = vadd.f32 %v5933, %v5934
    %v5936 = vrot.slane %v5935, 1
    %v5937 = vadd.f32 %v5935, %v5936
    %v5938 = vadd.f32 %v5910, %v5912
    %v5939 = vadd.f32 %v5938, %v5914
    %v5940 = vadd.f32 %v5939, %v5916
    %v5941 = vadd.f32 %v5940, %v5918
    %v5942 = vadd.f32 %v5941, %v5920
    %v5943 = vadd.f32 %v5942, %v5922
    %v5944 = vadd.f32 %v5943, %v5924
    %v5945 = vrot.slane %v5944, 4
    %v5946 = vadd.f32 %v5944, %v5945
    %v5947 = vrot.slane %v5946, 2
    %v5948 = vadd.f32 %v5946, %v5947
    %v5949 = vrot.slane %v5948, 1
    %v5950 = vadd.f32 %v5948, %v5949
    %v5951 = vld [vmem:[#allocation2] sm:$0x1]
    %5953 = vset.pattern.permute.xlu0 0
    %5954 = vperm.xlu0 %5953, %v5951
    %v5955 = vpop.permute.xlu0 %5954
    %v5957 = vlaneseq
    %v5958 = vshrl.u32 %v5957, 7
    %v5959 = vsub.s32 0, %v5958
    %v5960 = vrot.slane %v5955, %v5959
    %v5961 = vadd.f32 %v5937, %v5960
    %v5962 = vadd.f32 %v5950, %v5960
    %v5963 = vtanh.pop %v5961
    %v5964 = vtanh.pop %v5962
    %v5967 = vcombine.low %v5963, %v5964
    %v5969 = vunpack.c.l.s4 1966171168
    %v5970 = vunpack.c.0.s8 %v5969
    %v5971 = vlaneseq
    %v5972 = vshrl.u32 %v5971, 7
    %v5973 = vsub.s32 %v5970, %v5972
    %v5974 = vrot.slane %v5967, %v5973
    %v5976 = vunpack.c.l.s4 1966171168
    %v5977 = vunpack.c.0.s8 %v5976
    %v5978 = vlaneseq
    %v5979 = vshrl.u32 %v5978, 7
    %v5980 = vsub.s32 %v5977, %v5979
    %v5981 = vrot.slane %v5974, %v5980
    %v5983 = vlaneseq
    %vm5984 = vcmp.ge.s32.totalorder %v5983, 0
    %vm5985 = vcmp.lt.s32.totalorder %v5983, 256
    %vm5986 = vmand %vm5984, %vm5985
    %5987 = vst.msk [vmem:[#allocation3] sm:$0x3] %vm5986, %v5981
    // Predicated region
    $region34: #{tpu_custom_call.1} parent=1 // pred_check
      _
    $region35: #{tpu_custom_call.1} parent=1 // pred_check_branch
      %5989 = sbr.rel (0) target = $region37
    $region36: #{tpu_custom_call.1} parent=1 // pred_region
      %s5991 = ssub.s32 32, 32
      %5992 = vsyncadd [#allocation4], %s5991
      %s5994 = sshll.u32 [#allocation3], 4
      %s5995 = int_to_ptr.vmem [resolvable:$true] %s5994
      %5997 = dma.vmem_to_hbm [thread:$0]  %s5995, 32, %s8, [#allocation4]
    $region37: #{tpu_custom_call.1} parent=1 // pred_fallthru
      _
    // Predicated region
    $region38: #{tpu_custom_call.1} parent=1 // pred_check
      _
    $region39: #{tpu_custom_call.1} parent=1 // pred_check_branch
      %5999 = sbr.rel (0) target = $region41
    $region40: #{tpu_custom_call.1} parent=1 // pred_region
      %6000 = dma.done [#allocation4], 32
    $region41: #{tpu_custom_call.1} parent=1 // pred_fallthru
      _
    %6001 = vsyncpa [#allocation4], 1

</llo_original>
